<compile_context>
chip_gen: v7x
topology: tpu7x:2x2x1
jax: 0.10.0
libtpu: 0.0.40
codegen_flags: <defaults>
</compile_context>

<pallas_src>
import math
from functools import partial

import jax
import jax.numpy as jnp
from jax.experimental import pallas as pl
from jax.experimental.pallas import tpu as pltpu


# -----------------------------------------------------------------------------
# helpers
# -----------------------------------------------------------------------------

def _round_up(x, m):
    return ((x + m - 1) // m) * m


def _pick_tile(dim, target, mult):
    """Largest tile <= target that divides `dim` and is a multiple of `mult`.
    If dim <= target the full dim is used (always a legal block).  If no divisor
    exists, return `target` and let the caller pad (rare fallback)."""
    if dim <= target:
        return dim
    t = (target // mult) * mult
    while t >= mult:
        if dim % t == 0:
            return t
        t -= mult
    return (target // mult) * mult


def _pick_divisor(n, target):
    """Largest divisor of n that is <= target (>= 1)."""
    t = max(1, min(n, target))
    while t > 1 and n % t != 0:
        t -= 1
    return t


def _gelu_exact(x):
    # PyTorch F.gelu default (erf-based, exact), computed in f32.
    return 0.5 * x * (1.0 + jax.lax.erf(x * (1.0 / math.sqrt(2.0))))


# -----------------------------------------------------------------------------
# Tiled matmul + bias (+ exact GELU) (+ fused residual add) kernel
# -----------------------------------------------------------------------------

def _matmul_bias_kernel(x_ref, w_ref, b_ref, *rest, activation, has_residual):
    if has_residual:
        r_ref, o_ref, acc_ref = rest
    else:
        r_ref = None
        o_ref, acc_ref = rest

    @pl.when(pl.program_id(2) == 0)
    def _():
        acc_ref[...] = jnp.zeros_like(acc_ref)

    # operands are already bf16 (weights stored bf16, activations bf16 end-to-end);
    # accumulate in f32 on the MXU output path.
    acc_ref[...] += jnp.dot(x_ref[...], w_ref[...],
                            preferred_element_type=jnp.float32)

    @pl.when(pl.program_id(2) == pl.num_programs(2) - 1)
    def _():
        acc = acc_ref[...] + b_ref[...].astype(jnp.float32)   # (1, tn) broadcasts
        if activation == "gelu":
            acc = _gelu_exact(acc)
        if has_residual:
            acc = acc + r_ref[...].astype(jnp.float32)        # residual AFTER activation
        o_ref[...] = acc.astype(o_ref.dtype)


def matmul_bias(x, w, b, activation="none", residual=None, out_dtype=jnp.bfloat16,
                tm_target=256, tn_target=256, tk_target=2048):
    """out = [activation(x @ w + b)] + residual   (residual added AFTER activation).

    x: [M, K] bf16 activations, w: [K, N] bf16 weights, b: [N] f32.
    residual: optional [M, N], or a row-periodic [Mr, N] with Mr | M (e.g. a positional
    embedding table shared across the batch) — the periodic case is fused via an
    index_map that wraps the row-block index, so the table is never duplicated in HBM.
    Tiles are chosen as divisors of the real dims (tk up to full K) so the common path
    needs no padding; VMEM stays well under the v7x 32 MiB scoped default.
    """
    M, K = x.shape
    K2, N = w.shape
    assert K == K2 and b.shape == (N,)
    if x.dtype != jnp.bfloat16:
        x = x.astype(jnp.bfloat16)

    has_res = residual is not None
    periodic = has_res and residual.shape[0] != M

    if periodic:
        Mr = residual.shape[0]
        assert M % Mr == 0
        tm = _pick_tile(Mr, tm_target, 8)     # row blocks must not straddle the period
        if Mr % tm != 0:                      # no clean tile: materialize (rare fallback)
            residual = jnp.tile(residual, (M // Mr, 1))
            periodic = False
            tm = _pick_tile(M, tm_target, 8)
    else:
        tm = _pick_tile(M, tm_target, 8)
    tn = _pick_tile(N, tn_target, 128)
    tk = _pick_tile(K, tk_target, 128)

    Mp, Kp, Np = _round_up(M, tm), _round_up(K, tk), _round_up(N, tn)
    xp = x if (Mp, Kp) == (M, K) else jnp.pad(x, ((0, Mp - M), (0, Kp - K)))
    wp = w if (Kp, Np) == (K, N) else jnp.pad(w, ((0, Kp - K), (0, Np - N)))
    bp = b if Np == N else jnp.pad(b, (0, Np - N))

    args = [xp, wp, bp.reshape(1, Np)]
    in_specs = [
        pl.BlockSpec((tm, tk), lambda i, j, kk: (i, kk)),
        pl.BlockSpec((tk, tn), lambda i, j, kk: (kk, j)),
        pl.BlockSpec((1, tn), lambda i, j, kk: (0, j)),
    ]
    if has_res:
        if Np != N:
            residual = jnp.pad(residual, ((0, 0), (0, Np - N)))
        if periodic:
            nb = residual.shape[0] // tm      # row-blocks per period
            args.append(residual)
            in_specs.append(pl.BlockSpec((tm, tn), lambda i, j, kk: (i % nb, j)))
        else:
            rp = residual if Mp == M else jnp.pad(residual, ((0, Mp - M), (0, 0)))
            args.append(rp)
            in_specs.append(pl.BlockSpec((tm, tn), lambda i, j, kk: (i, j)))

    out = pl.pallas_call(
        partial(_matmul_bias_kernel, activation=activation, has_residual=has_res),
        out_shape=jax.ShapeDtypeStruct((Mp, Np), out_dtype),
        grid=(Mp // tm, Np // tn, Kp // tk),
        in_specs=in_specs,
        out_specs=pl.BlockSpec((tm, tn), lambda i, j, kk: (i, j)),
        scratch_shapes=[pltpu.VMEM((tm, tn), jnp.float32)],
        compiler_params=pltpu.CompilerParams(
            dimension_semantics=("parallel", "parallel", "arbitrary")),
    )(*args)

    if (Mp, Np) != (M, N):
        out = out[:M, :N]
    return out


# -----------------------------------------------------------------------------
# Row-tiled LayerNorm kernel (bf16 in/out, f32 statistics)
# -----------------------------------------------------------------------------

def _layernorm_kernel(x_ref, g_ref, b_ref, o_ref, *, eps):
    x = x_ref[...].astype(jnp.float32)
    mean = jnp.mean(x, axis=-1, keepdims=True)
    xc = x - mean
    var = jnp.mean(xc * xc, axis=-1, keepdims=True)
    inv = jax.lax.rsqrt(var + eps)                      # EUP
    y = xc * inv * g_ref[...] + b_ref[...]              # (1, C) blocks broadcast
    o_ref[...] = y.astype(o_ref.dtype)


def layernorm(x, gamma, beta, eps=1e-5, block_rows=512, out_dtype=None):
    """x: [M, C] -> [M, C] normalized over the last dim (nn.LayerNorm(C))."""
    M, C = x.shape
    out_dtype = x.dtype if out_dtype is None else out_dtype
    tr = _pick_tile(M, block_rows, 8)
    Mp = _round_up(M, tr)
    xp = x if Mp == M else jnp.pad(x, ((0, Mp - M), (0, 0)))
    out = pl.pallas_call(
        partial(_layernorm_kernel, eps=eps),
        out_shape=jax.ShapeDtypeStruct((Mp, C), out_dtype),
        grid=(Mp // tr,),
        in_specs=[
            pl.BlockSpec((tr, C), lambda i: (i, 0)),
            pl.BlockSpec((1, C), lambda i: (0, 0)),
            pl.BlockSpec((1, C), lambda i: (0, 0)),
        ],
        out_specs=pl.BlockSpec((tr, C), lambda i: (i, 0)),
        compiler_params=pltpu.CompilerParams(dimension_semantics=("parallel",)),
    )(xp, gamma.reshape(1, C), beta.reshape(1, C))
    return out if Mp == M else out[:M]


# -----------------------------------------------------------------------------
# Flash-style attention (online softmax, several heads per grid step, kv masking)
# -----------------------------------------------------------------------------

def _flash_attn_kernel(q_ref, k_ref, v_ref, o_ref, m_sc, l_sc, acc_sc, *, kv_len, tk):
    ki = pl.program_id(2)

    @pl.when(ki == 0)
    def _():
        m_sc[...] = jnp.full_like(m_sc, -jnp.inf)
        l_sc[...] = jnp.zeros_like(l_sc)
        acc_sc[...] = jnp.zeros_like(acc_sc)

    # q already carries the 1/sqrt(d) scale (folded into the Q projection weights).
    s = jnp.einsum("hqd,hkd->hqk", q_ref[...], k_ref[...],
                   preferred_element_type=jnp.float32)
    if kv_len is not None:       # static: only emitted when the sequence was padded
        col = ki * tk + jax.lax.broadcasted_iota(jnp.int32, (1, 1, tk), 2)
        s = jnp.where(col < kv_len, s, -1e30)

    m_prev = m_sc[...]
    m_new = jnp.maximum(m_prev, jnp.max(s, axis=-1, keepdims=True))
    alpha = jnp.exp(m_prev - m_new)
    p = jnp.exp(s - m_new)
    l_sc[...] = alpha * l_sc[...] + jnp.sum(p, axis=-1, keepdims=True)
    acc_sc[...] = alpha * acc_sc[...] + jnp.einsum(
        "hqk,hkd->hqd", p.astype(jnp.bfloat16), v_ref[...],
        preferred_element_type=jnp.float32)
    m_sc[...] = m_new

    @pl.when(ki == pl.num_programs(2) - 1)
    def _():
        inv_l = pl.reciprocal(l_sc[...], approx=True)   # EUP slot, ~free
        o_ref[...] = (acc_sc[...] * inv_l).astype(o_ref.dtype)


def flash_attention(q, k, v, kv_len=None, ts_target=256, head_group_lanes=256):
    """q, k, v: [B*H, T, d] bf16 -> [B*H, T, d] bf16.

    The sequence is padded once to a tile multiple; kv columns >= kv_len are masked
    additively inside the kernel so the online softmax stays correct.  h_sub heads are
    processed per grid step (block (h_sub, ts, d)) to amortize per-step overhead.
    """
    BH, T, d = q.shape
    if kv_len is None:
        kv_len = T
    ts = min(ts_target, _round_up(T, 8))
    Tp = _round_up(T, ts)
    if Tp != T:
        pad = ((0, 0), (0, Tp - T), (0, 0))
        q, k, v = jnp.pad(q, pad), jnp.pad(k, pad), jnp.pad(v, pad)
    h_sub = _pick_divisor(BH, max(1, head_group_lanes // d))
    mask_len = kv_len if kv_len < Tp else None

    out = pl.pallas_call(
        partial(_flash_attn_kernel, kv_len=mask_len, tk=ts),
        out_shape=jax.ShapeDtypeStruct((BH, Tp, d), q.dtype),
        grid=(BH // h_sub, Tp // ts, Tp // ts),
        in_specs=[
            pl.BlockSpec((h_sub, ts, d), lambda b, qi, ki: (b, qi, 0)),
            pl.BlockSpec((h_sub, ts, d), lambda b, qi, ki: (b, ki, 0)),
            pl.BlockSpec((h_sub, ts, d), lambda b, qi, ki: (b, ki, 0)),
        ],
        out_specs=pl.BlockSpec((h_sub, ts, d), lambda b, qi, ki: (b, qi, 0)),
        scratch_shapes=[
            pltpu.VMEM((h_sub, ts, 1), jnp.float32),   # running max
            pltpu.VMEM((h_sub, ts, 1), jnp.float32),   # running sum
            pltpu.VMEM((h_sub, ts, d), jnp.float32),   # running numerator
        ],
        compiler_params=pltpu.CompilerParams(
            dimension_semantics=("parallel", "parallel", "arbitrary")),
    )(q, k, v)
    return out if Tp == T else out[:, :T, :]


# -----------------------------------------------------------------------------
# Conv1d (padding=1) in NWC as tap-stacked matmul + fused GELU (+ fused pos-emb)
# -----------------------------------------------------------------------------

def conv1d_gelu_nwc(x_nwc, wm, b, *, stride, pos=None):
    """x_nwc: [B, T, C_in] bf16; wm: [K*C_in, C_out] bf16 (tap-major); b: [C_out] f32.
    pos: optional [T_out, C_out] table added AFTER the GELU (fused, batch-periodic).
    Returns GELU(conv1d(x)) (+ pos) in NWC layout [B, T_out, C_out] bf16."""
    B, T, C_in = x_nwc.shape
    KC, C_out = wm.shape
    K = KC // C_in
    pad = 1
    xp = jnp.pad(x_nwc, ((0, 0), (pad, pad), (0, 0)))
    T_out = (T + 2 * pad - K) // stride + 1
    # K cheap strided slices (no gather-based im2col, no layout transposes); bf16.
    taps = [xp[:, kk:kk + stride * T_out:stride, :] for kk in range(K)]
    cols = jnp.concatenate(taps, axis=-1).reshape(B * T_out, K * C_in)
    y = matmul_bias(cols, wm, b, activation="gelu", residual=pos)
    return y.reshape(B, T_out, C_out)


# -----------------------------------------------------------------------------
# Parameters (deterministic init, kernel-friendly layouts) and forward pass
# -----------------------------------------------------------------------------

def init_params(key, n_mels, n_ctx, n_state, n_head, n_layer):
    ks = iter(jax.random.split(key, 3 + 6 * n_layer))
    wdt = jnp.bfloat16   # bf16 weight storage: MXU-friendly, half the HBM/VMEM traffic
    s = 0.02
    d_head = n_state // n_head
    qscale = 1.0 / math.sqrt(d_head)   # folded into the Q projection (exactly equivalent)

    def nrm32(shape):
        return s * jax.random.normal(next(ks), shape, dtype=jnp.float32)

    def conv_wm(c_out, c_in, K=3):
        # PyTorch conv weight [C_out, C_in, K] -> tap-major matmul weight [K*C_in, C_out]
        w = nrm32((c_out, c_in, K))
        return jnp.transpose(w, (2, 1, 0)).reshape(K * c_in, c_out).astype(wdt)

    params = {
        "conv1_wm": conv_wm(n_state, n_mels),
        "conv1_b": jnp.zeros((n_state,), jnp.float32),
        "conv2_wm": conv_wm(n_state, n_state),
        "conv2_b": jnp.zeros((n_state,), jnp.float32),
        # matches nn.Parameter(torch.randn(n_ctx, n_state))
        "pos_emb": jax.random.normal(next(ks), (n_ctx, n_state), dtype=jnp.float32),
        "ln_post_g": jnp.ones((n_state,), jnp.float32),
        "ln_post_b": jnp.zeros((n_state,), jnp.float32),
        "blocks": [],
    }
    for _ in range(n_layer):
        wq = (nrm32((n_state, n_state)) * qscale).astype(wdt)   # 1/sqrt(d) folded in
        wk = nrm32((n_state, n_state)).astype(wdt)
        wv = nrm32((n_state, n_state)).astype(wdt)
        blk = {
            "attn_ln_g": jnp.ones((n_state,), jnp.float32),
            "attn_ln_b": jnp.zeros((n_state,), jnp.float32),
            # fused QKV projection weight [C, 3C]; biases zero (key bias is zero in Whisper)
            "wqkv": jnp.concatenate([wq, wk, wv], axis=1),
            "bqkv": jnp.zeros((3 * n_state,), jnp.float32),
            "wo": nrm32((n_state, n_state)).astype(wdt),
            "bo": jnp.zeros((n_state,), jnp.float32),
            "mlp_ln_g": jnp.ones((n_state,), jnp.float32),
            "mlp_ln_b": jnp.zeros((n_state,), jnp.float32),
            "w1": nrm32((n_state, 4 * n_state)).astype(wdt),
            "b1": jnp.zeros((4 * n_state,), jnp.float32),
            "w2": nrm32((4 * n_state, n_state)).astype(wdt),
            "b2": jnp.zeros((n_state,), jnp.float32),
        }
        params["blocks"].append(blk)
    return params


def multi_head_attention(x2d, blk, B, T, n_state, n_head, residual, kv_len):
    """x2d: [B*T, C] bf16 (already layer-normed). Returns residual + proj(attn(x))."""
    d = n_state // n_head
    qkv = matmul_bias(x2d, blk["wqkv"], blk["bqkv"])        # fused QKV: one MXU call
    qkv = qkv.reshape(B, T, 3, n_head, d)
    # bf16 head split (half the transpose traffic of the old f32 path)
    q, k, v = (qkv[:, :, i].transpose(0, 2, 1, 3).reshape(B * n_head, T, d)
               for i in range(3))
    o = flash_attention(q, k, v, kv_len=kv_len)
    o = (o.reshape(B, n_head, T, d)
          .transpose(0, 2, 1, 3)
          .reshape(B * T, n_state))
    # output projection with the residual add fused into the epilogue
    return matmul_bias(o, blk["wo"], blk["bo"], residual=residual)


def residual_attention_block(x2d, blk, B, T, n_state, n_head, kv_len):
    h = layernorm(x2d, blk["attn_ln_g"], blk["attn_ln_b"])
    x2d = multi_head_attention(h, blk, B, T, n_state, n_head,
                               residual=x2d, kv_len=kv_len)
    h = layernorm(x2d, blk["mlp_ln_g"], blk["mlp_ln_b"])
    h = matmul_bias(h, blk["w1"], blk["b1"], activation="gelu")
    x2d = matmul_bias(h, blk["w2"], blk["b2"], residual=x2d)   # fused residual add
    return x2d


def audio_encoder_forward(params, x, n_state, n_head):
    """x: [B, n_mels, T] (NCW, like PyTorch). Returns [B, n_ctx_out, n_state] f32."""
    B, _, T_in = x.shape
    # One-time NCW -> NWC transpose; activations are bf16 end-to-end from here on.
    x = jnp.transpose(x, (0, 2, 1)).astype(jnp.bfloat16)
    x = conv1d_gelu_nwc(x, params["conv1_wm"], params["conv1_b"], stride=1)  # [B, T, C]
    T1 = x.shape[1]
    T2 = (T1 - 1) // 2 + 1
    # pos-emb add fused into conv2's epilogue (after the GELU, matching PyTorch);
    # the [T2, C] table is NOT duplicated per batch — the residual BlockSpec wraps
    # its row-block index periodically.
    pos = params["pos_emb"][:T2, :]
    x = conv1d_gelu_nwc(x, params["conv2_wm"], params["conv2_b"], stride=2, pos=pos)

    # Pad the sequence ONCE (multiple of 8) so the transformer matmuls / layernorms
    # never need per-call pad/slice HBM round trips; padded kv positions are masked
    # inside flash attention via kv_len, padded rows are sliced off at the end.
    T2p = _round_up(T2, 8)
    if T2p != T2:
        x = jnp.pad(x, ((0, 0), (0, T2p - T2), (0, 0)))
    x2d = x.reshape(B * T2p, n_state)
    for blk in params["blocks"]:
        x2d = residual_attention_block(x2d, blk, B, T2p, n_state, n_head, kv_len=T2)

    x2d = layernorm(x2d, params["ln_post_g"], params["ln_post_b"],
                    out_dtype=jnp.float32)
    out = x2d.reshape(B, T2p, n_state)
    return out[:, :T2, :] if T2p != T2 else out


# -----------------------------------------------------------------------------
# Main
# -----------------------------------------------------------------------------

if __name__ == "__main__":
    # Small, conv-consistent shapes: input length 16 -> stride-2 conv -> n_ctx = 8.
    B, n_mels, T_in = 2, 4, 16
    n_ctx, n_state, n_head, n_layer = 8, 32, 4, 2

    key = jax.random.PRNGKey(0)
    pkey, xkey = jax.random.split(key)
    params = init_params(pkey, n_mels, n_ctx, n_state, n_head, n_layer)
    x = jax.random.normal(xkey, (B, n_mels, T_in), dtype=jnp.float32)

    fwd = jax.jit(partial(audio_encoder_forward, n_state=n_state, n_head=n_head))
    out = jax.block_until_ready(fwd(params, x))
    assert out.shape == (B, n_ctx, n_state), out.shape
    assert bool(jnp.all(jnp.isfinite(out)))
    print("KERNEL_OK")
</pallas_src>

<mosaic_0001>
module attributes {stable_mosaic.version = 11 : i64} {
  func.func @_matmul_bias_kernel(%arg0: i32, %arg1: i32, %arg2: i32, %arg3: memref<8x96xbf16, #tpu.memory_space<vmem>>, %arg4: memref<96x32xbf16, #tpu.memory_space<vmem>>, %arg5: memref<1x32xf32, #tpu.memory_space<vmem>>, %arg6: memref<8x32xf32, #tpu.memory_space<vmem>>, %arg7: memref<8x32xbf16, #tpu.memory_space<vmem>>, %arg8: memref<8x32xf32, #tpu.memory_space<vmem>>) attributes {dimension_semantics = [#tpu.dimension_semantics<parallel>, #tpu.dimension_semantics<parallel>, #tpu.dimension_semantics<arbitrary>], iteration_bounds = array<i64: 2, 1, 1>, scalar_prefetch = 0 : i64, scratch_operands = 1 : i64, tpu.core_type = #tpu.core_type<tc>, window_params = [{transform_indices = @transform_0, window_bounds = array<i64: 8, 96>}, {transform_indices = @transform_1, window_bounds = array<i64: 96, 32>}, {transform_indices = @transform_2, window_bounds = array<i64: 1, 32>}, {transform_indices = @transform_3, window_bounds = array<i64: 8, 32>}, {transform_indices = @transform_4, window_bounds = array<i64: 8, 32>}]} {
    %c0_i32 = arith.constant 0 : i32
    %0 = arith.cmpi eq, %arg2, %c0_i32 : i32
    %1 = arith.extui %0 : i1 to i32
    %c0_i32_0 = arith.constant 0 : i32
    %2 = arith.cmpi ne, %1, %c0_i32_0 : i32
    scf.if %2 {
      %cst_10 = arith.constant 0.000000e+00 : f32
      %12 = vector.broadcast %cst_10 : f32 to vector<8x32xf32>
      %c0_11 = arith.constant 0 : index
      %c0_12 = arith.constant 0 : index
      %13 = vector.load %arg8[%c0_11, %c0_12] : memref<8x32xf32, #tpu.memory_space<vmem>>, vector<8x32xf32>
      tpu.vector_store %arg8[%c0_11, %c0_12], %12 {strides = array<i32>} : memref<8x32xf32, #tpu.memory_space<vmem>>, vector<8x32xf32>,
    } else {
    }
    %c0 = arith.constant 0 : index
    %c0_1 = arith.constant 0 : index
    %3 = vector.load %arg8[%c0, %c0_1] : memref<8x32xf32, #tpu.memory_space<vmem>>, vector<8x32xf32>
    %c0_2 = arith.constant 0 : index
    %c0_3 = arith.constant 0 : index
    %4 = vector.load %arg3[%c0_2, %c0_3] : memref<8x96xbf16, #tpu.memory_space<vmem>>, vector<8x96xbf16>
    %c0_4 = arith.constant 0 : index
    %c0_5 = arith.constant 0 : index
    %5 = vector.load %arg4[%c0_4, %c0_5] : memref<96x32xbf16, #tpu.memory_space<vmem>>, vector<96x32xbf16>
    %cst = arith.constant dense<0.000000e+00> : vector<8x32xf32>
    %6 = tpu.matmul %4, %5, %cst {dimension_numbers = #tpu.dot_dimension_numbers<[1], [0], [0], [1], [0, 0, 1, 1], [], []>} : vector<8x96xbf16>, vector<96x32xbf16>, vector<8x32xf32> -> vector<8x32xf32>
    %7 = arith.addf %3, %6 : vector<8x32xf32>
    %c0_6 = arith.constant 0 : index
    %c0_7 = arith.constant 0 : index
    %8 = vector.load %arg8[%c0_6, %c0_7] : memref<8x32xf32, #tpu.memory_space<vmem>>, vector<8x32xf32>
    tpu.vector_store %arg8[%c0_6, %c0_7], %7 {strides = array<i32>} : memref<8x32xf32, #tpu.memory_space<vmem>>, vector<8x32xf32>,
    %c0_i32_8 = arith.constant 0 : i32
    %9 = arith.cmpi eq, %arg2, %c0_i32_8 : i32
    %10 = arith.extui %9 : i1 to i32
    %c0_i32_9 = arith.constant 0 : i32
    %11 = arith.cmpi ne, %10, %c0_i32_9 : i32
    scf.if %11 {
      %c0_10 = arith.constant 0 : index
      %c0_11 = arith.constant 0 : index
      %12 = vector.load %arg8[%c0_10, %c0_11] : memref<8x32xf32, #tpu.memory_space<vmem>>, vector<8x32xf32>
      %c0_12 = arith.constant 0 : index
      %c0_13 = arith.constant 0 : index
      %13 = vector.load %arg5[%c0_12, %c0_13] : memref<1x32xf32, #tpu.memory_space<vmem>>, vector<1x32xf32>
      %14 = vector.broadcast %13 : vector<1x32xf32> to vector<8x32xf32>
      %15 = arith.addf %12, %14 : vector<8x32xf32>
      %cst_14 = arith.constant 5.000000e-01 : f32
      %16 = vector.broadcast %cst_14 : f32 to vector<8x32xf32>
      %17 = arith.mulf %16, %15 : vector<8x32xf32>
      %cst_15 = arith.constant 0.707106769 : f32
      %18 = vector.broadcast %cst_15 : f32 to vector<8x32xf32>
      %19 = arith.mulf %15, %18 : vector<8x32xf32>
      %20 = math.erf %19 : vector<8x32xf32>
      %cst_16 = arith.constant 1.000000e+00 : f32
      %21 = vector.broadcast %cst_16 : f32 to vector<8x32xf32>
      %22 = arith.addf %21, %20 : vector<8x32xf32>
      %23 = arith.mulf %17, %22 : vector<8x32xf32>
      %c0_17 = arith.constant 0 : index
      %c0_18 = arith.constant 0 : index
      %24 = vector.load %arg6[%c0_17, %c0_18] : memref<8x32xf32, #tpu.memory_space<vmem>>, vector<8x32xf32>
      %25 = arith.addf %23, %24 : vector<8x32xf32>
      %26 = arith.truncf %25 : vector<8x32xf32> to vector<8x32xbf16>
      %c0_19 = arith.constant 0 : index
      %c0_20 = arith.constant 0 : index
      %27 = vector.load %arg7[%c0_19, %c0_20] : memref<8x32xbf16, #tpu.memory_space<vmem>>, vector<8x32xbf16>
      tpu.vector_store %arg7[%c0_19, %c0_20], %26 {strides = array<i32>} : memref<8x32xbf16, #tpu.memory_space<vmem>>, vector<8x32xbf16>,
    } else {
    }
    return
  }
  func.func @transform_0(%arg0: i32, %arg1: i32, %arg2: i32) -> (i32, i32) {
    %c0_i32 = arith.constant 0 : i32
    return %arg0, %arg2 : i32, i32
  }
  func.func @transform_1(%arg0: i32, %arg1: i32, %arg2: i32) -> (i32, i32) {
    %c0_i32 = arith.constant 0 : i32
    return %arg2, %arg1 : i32, i32
  }
  func.func @transform_2(%arg0: i32, %arg1: i32, %arg2: i32) -> (i32, i32) {
    %c0_i32 = arith.constant 0 : i32
    %c0_i32_0 = arith.constant 0 : i32
    return %c0_i32, %arg1 : i32, i32
  }
  func.func @transform_3(%arg0: i32, %arg1: i32, %arg2: i32) -> (i32, i32) {
    %c1_i32 = arith.constant 1 : i32
    %c0_i32 = arith.constant 0 : i32
    %0 = arith.cmpi eq, %c1_i32, %c0_i32 : i32
    %c1_i32_0 = arith.constant 1 : i32
    %1 = arith.select %0, %c1_i32_0, %c1_i32 : i32
    %2 = arith.remsi %arg0, %1 : i32
    %c0_i32_1 = arith.constant 0 : i32
    %3 = arith.cmpi ne, %2, %c0_i32_1 : i32
    %c0_i32_2 = arith.constant 0 : i32
    %4 = arith.cmpi slt, %2, %c0_i32_2 : i32
    %c0_i32_3 = arith.constant 0 : i32
    %5 = arith.cmpi slt, %1, %c0_i32_3 : i32
    %6 = arith.xori %4, %5 : i1
    %7 = arith.andi %6, %3 : i1
    %8 = arith.addi %2, %1 : i32
    %9 = arith.select %7, %8, %2 : i32
    %c0_i32_4 = arith.constant 0 : i32
    return %9, %arg1 : i32, i32
  }
  func.func @transform_4(%arg0: i32, %arg1: i32, %arg2: i32) -> (i32, i32) {
    %c0_i32 = arith.constant 0 : i32
    return %arg0, %arg1 : i32, i32
  }
}

module attributes {stable_mosaic.version = 11 : i64} {
  func.func @_matmul_bias_kernel(%arg0: i32, %arg1: i32, %arg2: i32, %arg3: memref<32x12xbf16, #tpu.memory_space<vmem>>, %arg4: memref<12x32xbf16, #tpu.memory_space<vmem>>, %arg5: memref<1x32xf32, #tpu.memory_space<vmem>>, %arg6: memref<32x32xbf16, #tpu.memory_space<vmem>>, %arg7: memref<32x32xf32, #tpu.memory_space<vmem>>) attributes {dimension_semantics = [#tpu.dimension_semantics<parallel>, #tpu.dimension_semantics<parallel>, #tpu.dimension_semantics<arbitrary>], iteration_bounds = array<i64: 1, 1, 1>, scalar_prefetch = 0 : i64, scratch_operands = 1 : i64, tpu.core_type = #tpu.core_type<tc>, window_params = [{transform_indices = @transform_0, window_bounds = array<i64: 32, 12>}, {transform_indices = @transform_1, window_bounds = array<i64: 12, 32>}, {transform_indices = @transform_2, window_bounds = array<i64: 1, 32>}, {transform_indices = @transform_3, window_bounds = array<i64: 32, 32>}]} {
    %c0_i32 = arith.constant 0 : i32
    %0 = arith.cmpi eq, %arg2, %c0_i32 : i32
    %1 = arith.extui %0 : i1 to i32
    %c0_i32_0 = arith.constant 0 : i32
    %2 = arith.cmpi ne, %1, %c0_i32_0 : i32
    scf.if %2 {
      %cst_10 = arith.constant 0.000000e+00 : f32
      %12 = vector.broadcast %cst_10 : f32 to vector<32x32xf32>
      %c0_11 = arith.constant 0 : index
      %c0_12 = arith.constant 0 : index
      %13 = vector.load %arg7[%c0_11, %c0_12] : memref<32x32xf32, #tpu.memory_space<vmem>>, vector<32x32xf32>
      tpu.vector_store %arg7[%c0_11, %c0_12], %12 {strides = array<i32>} : memref<32x32xf32, #tpu.memory_space<vmem>>, vector<32x32xf32>,
    } else {
    }
    %c0 = arith.constant 0 : index
    %c0_1 = arith.constant 0 : index
    %3 = vector.load %arg7[%c0, %c0_1] : memref<32x32xf32, #tpu.memory_space<vmem>>, vector<32x32xf32>
    %c0_2 = arith.constant 0 : index
    %c0_3 = arith.constant 0 : index
    %4 = vector.load %arg3[%c0_2, %c0_3] : memref<32x12xbf16, #tpu.memory_space<vmem>>, vector<32x12xbf16>
    %c0_4 = arith.constant 0 : index
    %c0_5 = arith.constant 0 : index
    %5 = vector.load %arg4[%c0_4, %c0_5] : memref<12x32xbf16, #tpu.memory_space<vmem>>, vector<12x32xbf16>
    %cst = arith.constant dense<0.000000e+00> : vector<32x32xf32>
    %6 = tpu.matmul %4, %5, %cst {dimension_numbers = #tpu.dot_dimension_numbers<[1], [0], [0], [1], [0, 0, 1, 1], [], []>} : vector<32x12xbf16>, vector<12x32xbf16>, vector<32x32xf32> -> vector<32x32xf32>
    %7 = arith.addf %3, %6 : vector<32x32xf32>
    %c0_6 = arith.constant 0 : index
    %c0_7 = arith.constant 0 : index
    %8 = vector.load %arg7[%c0_6, %c0_7] : memref<32x32xf32, #tpu.memory_space<vmem>>, vector<32x32xf32>
    tpu.vector_store %arg7[%c0_6, %c0_7], %7 {strides = array<i32>} : memref<32x32xf32, #tpu.memory_space<vmem>>, vector<32x32xf32>,
    %c0_i32_8 = arith.constant 0 : i32
    %9 = arith.cmpi eq, %arg2, %c0_i32_8 : i32
    %10 = arith.extui %9 : i1 to i32
    %c0_i32_9 = arith.constant 0 : i32
    %11 = arith.cmpi ne, %10, %c0_i32_9 : i32
    scf.if %11 {
      %c0_10 = arith.constant 0 : index
      %c0_11 = arith.constant 0 : index
      %12 = vector.load %arg7[%c0_10, %c0_11] : memref<32x32xf32, #tpu.memory_space<vmem>>, vector<32x32xf32>
      %c0_12 = arith.constant 0 : index
      %c0_13 = arith.constant 0 : index
      %13 = vector.load %arg5[%c0_12, %c0_13] : memref<1x32xf32, #tpu.memory_space<vmem>>, vector<1x32xf32>
      %14 = vector.broadcast %13 : vector<1x32xf32> to vector<32x32xf32>
      %15 = arith.addf %12, %14 : vector<32x32xf32>
      %cst_14 = arith.constant 5.000000e-01 : f32
      %16 = vector.broadcast %cst_14 : f32 to vector<32x32xf32>
      %17 = arith.mulf %16, %15 : vector<32x32xf32>
      %cst_15 = arith.constant 0.707106769 : f32
      %18 = vector.broadcast %cst_15 : f32 to vector<32x32xf32>
      %19 = arith.mulf %15, %18 : vector<32x32xf32>
      %20 = math.erf %19 : vector<32x32xf32>
      %cst_16 = arith.constant 1.000000e+00 : f32
      %21 = vector.broadcast %cst_16 : f32 to vector<32x32xf32>
      %22 = arith.addf %21, %20 : vector<32x32xf32>
      %23 = arith.mulf %17, %22 : vector<32x32xf32>
      %24 = arith.truncf %23 : vector<32x32xf32> to vector<32x32xbf16>
      %c0_17 = arith.constant 0 : index
      %c0_18 = arith.constant 0 : index
      %25 = vector.load %arg6[%c0_17, %c0_18] : memref<32x32xbf16, #tpu.memory_space<vmem>>, vector<32x32xbf16>
      tpu.vector_store %arg6[%c0_17, %c0_18], %24 {strides = array<i32>} : memref<32x32xbf16, #tpu.memory_space<vmem>>, vector<32x32xbf16>,
    } else {
    }
    return
  }
  func.func @transform_0(%arg0: i32, %arg1: i32, %arg2: i32) -> (i32, i32) {
    %c0_i32 = arith.constant 0 : i32
    return %arg0, %arg2 : i32, i32
  }
  func.func @transform_1(%arg0: i32, %arg1: i32, %arg2: i32) -> (i32, i32) {
    %c0_i32 = arith.constant 0 : i32
    return %arg2, %arg1 : i32, i32
  }
  func.func @transform_2(%arg0: i32, %arg1: i32, %arg2: i32) -> (i32, i32) {
    %c0_i32 = arith.constant 0 : i32
    %c0_i32_0 = arith.constant 0 : i32
    return %c0_i32, %arg1 : i32, i32
  }
  func.func @transform_3(%arg0: i32, %arg1: i32, %arg2: i32) -> (i32, i32) {
    %c0_i32 = arith.constant 0 : i32
    return %arg0, %arg1 : i32, i32
  }
}

module attributes {stable_mosaic.version = 11 : i64} {
  func.func @_layernorm_kernel(%arg0: i32, %arg1: memref<16x32xbf16, #tpu.memory_space<vmem>>, %arg2: memref<1x32xf32, #tpu.memory_space<vmem>>, %arg3: memref<1x32xf32, #tpu.memory_space<vmem>>, %arg4: memref<16x32xbf16, #tpu.memory_space<vmem>>) attributes {dimension_semantics = [#tpu.dimension_semantics<parallel>], iteration_bounds = array<i64: 1>, scalar_prefetch = 0 : i64, scratch_operands = 0 : i64, tpu.core_type = #tpu.core_type<tc>, window_params = [{transform_indices = @transform_0, window_bounds = array<i64: 16, 32>}, {pipeline_mode = #tpu.pipeline_mode<synchronous>, transform_indices = @transform_1, window_bounds = array<i64: 1, 32>}, {pipeline_mode = #tpu.pipeline_mode<synchronous>, transform_indices = @transform_2, window_bounds = array<i64: 1, 32>}, {transform_indices = @transform_3, window_bounds = array<i64: 16, 32>}]} {
    %c0 = arith.constant 0 : index
    %c0_0 = arith.constant 0 : index
    %0 = vector.load %arg1[%c0, %c0_0] : memref<16x32xbf16, #tpu.memory_space<vmem>>, vector<16x32xbf16>
    %1 = arith.extf %0 : vector<16x32xbf16> to vector<16x32xf32>
    %cst = arith.constant dense<0.000000e+00> : vector<16xf32>
    %2 = vector.multi_reduction <add>, %1, %cst [1] : vector<16x32xf32> to vector<16xf32>
    %3 = vector.shape_cast %2 : vector<16xf32> to vector<16x1xf32>
    %cst_1 = arith.constant 3.200000e+01 : f32
    %4 = vector.broadcast %cst_1 : f32 to vector<16x1xf32>
    %5 = arith.divf %3, %4 : vector<16x1xf32>
    %6 = vector.broadcast %5 : vector<16x1xf32> to vector<16x32xf32>
    %7 = arith.subf %1, %6 : vector<16x32xf32>
    %8 = arith.mulf %7, %7 : vector<16x32xf32>
    %cst_2 = arith.constant dense<0.000000e+00> : vector<16xf32>
    %9 = vector.multi_reduction <add>, %8, %cst_2 [1] : vector<16x32xf32> to vector<16xf32>
    %10 = vector.shape_cast %9 : vector<16xf32> to vector<16x1xf32>
    %cst_3 = arith.constant 3.200000e+01 : f32
    %11 = vector.broadcast %cst_3 : f32 to vector<16x1xf32>
    %12 = arith.divf %10, %11 : vector<16x1xf32>
    %cst_4 = arith.constant 9.99999974E-6 : f32
    %13 = vector.broadcast %cst_4 : f32 to vector<16x1xf32>
    %14 = arith.addf %12, %13 : vector<16x1xf32>
    %15 = math.rsqrt %14 : vector<16x1xf32>
    %16 = vector.broadcast %15 : vector<16x1xf32> to vector<16x32xf32>
    %17 = arith.mulf %7, %16 : vector<16x32xf32>
    %c0_5 = arith.constant 0 : index
    %c0_6 = arith.constant 0 : index
    %18 = vector.load %arg2[%c0_5, %c0_6] : memref<1x32xf32, #tpu.memory_space<vmem>>, vector<1x32xf32>
    %19 = vector.broadcast %18 : vector<1x32xf32> to vector<16x32xf32>
    %20 = arith.mulf %17, %19 : vector<16x32xf32>
    %c0_7 = arith.constant 0 : index
    %c0_8 = arith.constant 0 : index
    %21 = vector.load %arg3[%c0_7, %c0_8] : memref<1x32xf32, #tpu.memory_space<vmem>>, vector<1x32xf32>
    %22 = vector.broadcast %21 : vector<1x32xf32> to vector<16x32xf32>
    %23 = arith.addf %20, %22 : vector<16x32xf32>
    %24 = arith.truncf %23 : vector<16x32xf32> to vector<16x32xbf16>
    %c0_9 = arith.constant 0 : index
    %c0_10 = arith.constant 0 : index
    %25 = vector.load %arg4[%c0_9, %c0_10] : memref<16x32xbf16, #tpu.memory_space<vmem>>, vector<16x32xbf16>
    tpu.vector_store %arg4[%c0_9, %c0_10], %24 {strides = array<i32>} : memref<16x32xbf16, #tpu.memory_space<vmem>>, vector<16x32xbf16>,
    return
  }
  func.func @transform_0(%arg0: i32) -> (i32, i32) {
    %c0_i32 = arith.constant 0 : i32
    %c0_i32_0 = arith.constant 0 : i32
    return %arg0, %c0_i32 : i32, i32
  }
  func.func @transform_1(%arg0: i32) -> (i32, i32) {
    %c0_i32 = arith.constant 0 : i32
    %c0_i32_0 = arith.constant 0 : i32
    %c0_i32_1 = arith.constant 0 : i32
    return %c0_i32, %c0_i32_0 : i32, i32
  }
  func.func @transform_2(%arg0: i32) -> (i32, i32) {
    %c0_i32 = arith.constant 0 : i32
    %c0_i32_0 = arith.constant 0 : i32
    %c0_i32_1 = arith.constant 0 : i32
    return %c0_i32, %c0_i32_0 : i32, i32
  }
  func.func @transform_3(%arg0: i32) -> (i32, i32) {
    %c0_i32 = arith.constant 0 : i32
    %c0_i32_0 = arith.constant 0 : i32
    return %arg0, %c0_i32 : i32, i32
  }
}

module attributes {stable_mosaic.version = 11 : i64} {
  func.func @_matmul_bias_kernel(%arg0: i32, %arg1: i32, %arg2: i32, %arg3: memref<16x32xbf16, #tpu.memory_space<vmem>>, %arg4: memref<32x96xbf16, #tpu.memory_space<vmem>>, %arg5: memref<1x96xf32, #tpu.memory_space<vmem>>, %arg6: memref<16x96xbf16, #tpu.memory_space<vmem>>, %arg7: memref<16x96xf32, #tpu.memory_space<vmem>>) attributes {dimension_semantics = [#tpu.dimension_semantics<parallel>, #tpu.dimension_semantics<parallel>, #tpu.dimension_semantics<arbitrary>], iteration_bounds = array<i64: 1, 1, 1>, scalar_prefetch = 0 : i64, scratch_operands = 1 : i64, tpu.core_type = #tpu.core_type<tc>, window_params = [{transform_indices = @transform_0, window_bounds = array<i64: 16, 32>}, {transform_indices = @transform_1, window_bounds = array<i64: 32, 96>}, {transform_indices = @transform_2, window_bounds = array<i64: 1, 96>}, {transform_indices = @transform_3, window_bounds = array<i64: 16, 96>}]} {
    %c0_i32 = arith.constant 0 : i32
    %0 = arith.cmpi eq, %arg2, %c0_i32 : i32
    %1 = arith.extui %0 : i1 to i32
    %c0_i32_0 = arith.constant 0 : i32
    %2 = arith.cmpi ne, %1, %c0_i32_0 : i32
    scf.if %2 {
      %cst_10 = arith.constant 0.000000e+00 : f32
      %12 = vector.broadcast %cst_10 : f32 to vector<16x96xf32>
      %c0_11 = arith.constant 0 : index
      %c0_12 = arith.constant 0 : index
      %13 = vector.load %arg7[%c0_11, %c0_12] : memref<16x96xf32, #tpu.memory_space<vmem>>, vector<16x96xf32>
      tpu.vector_store %arg7[%c0_11, %c0_12], %12 {strides = array<i32>} : memref<16x96xf32, #tpu.memory_space<vmem>>, vector<16x96xf32>,
    } else {
    }
    %c0 = arith.constant 0 : index
    %c0_1 = arith.constant 0 : index
    %3 = vector.load %arg7[%c0, %c0_1] : memref<16x96xf32, #tpu.memory_space<vmem>>, vector<16x96xf32>
    %c0_2 = arith.constant 0 : index
    %c0_3 = arith.constant 0 : index
    %4 = vector.load %arg3[%c0_2, %c0_3] : memref<16x32xbf16, #tpu.memory_space<vmem>>, vector<16x32xbf16>
    %c0_4 = arith.constant 0 : index
    %c0_5 = arith.constant 0 : index
    %5 = vector.load %arg4[%c0_4, %c0_5] : memref<32x96xbf16, #tpu.memory_space<vmem>>, vector<32x96xbf16>
    %cst = arith.constant dense<0.000000e+00> : vector<16x96xf32>
    %6 = tpu.matmul %4, %5, %cst {dimension_numbers = #tpu.dot_dimension_numbers<[1], [0], [0], [1], [0, 0, 1, 1], [], []>} : vector<16x32xbf16>, vector<32x96xbf16>, vector<16x96xf32> -> vector<16x96xf32>
    %7 = arith.addf %3, %6 : vector<16x96xf32>
    %c0_6 = arith.constant 0 : index
    %c0_7 = arith.constant 0 : index
    %8 = vector.load %arg7[%c0_6, %c0_7] : memref<16x96xf32, #tpu.memory_space<vmem>>, vector<16x96xf32>
    tpu.vector_store %arg7[%c0_6, %c0_7], %7 {strides = array<i32>} : memref<16x96xf32, #tpu.memory_space<vmem>>, vector<16x96xf32>,
    %c0_i32_8 = arith.constant 0 : i32
    %9 = arith.cmpi eq, %arg2, %c0_i32_8 : i32
    %10 = arith.extui %9 : i1 to i32
    %c0_i32_9 = arith.constant 0 : i32
    %11 = arith.cmpi ne, %10, %c0_i32_9 : i32
    scf.if %11 {
      %c0_10 = arith.constant 0 : index
      %c0_11 = arith.constant 0 : index
      %12 = vector.load %arg7[%c0_10, %c0_11] : memref<16x96xf32, #tpu.memory_space<vmem>>, vector<16x96xf32>
      %c0_12 = arith.constant 0 : index
      %c0_13 = arith.constant 0 : index
      %13 = vector.load %arg5[%c0_12, %c0_13] : memref<1x96xf32, #tpu.memory_space<vmem>>, vector<1x96xf32>
      %14 = vector.broadcast %13 : vector<1x96xf32> to vector<16x96xf32>
      %15 = arith.addf %12, %14 : vector<16x96xf32>
      %16 = arith.truncf %15 : vector<16x96xf32> to vector<16x96xbf16>
      %c0_14 = arith.constant 0 : index
      %c0_15 = arith.constant 0 : index
      %17 = vector.load %arg6[%c0_14, %c0_15] : memref<16x96xbf16, #tpu.memory_space<vmem>>, vector<16x96xbf16>
      tpu.vector_store %arg6[%c0_14, %c0_15], %16 {strides = array<i32>} : memref<16x96xbf16, #tpu.memory_space<vmem>>, vector<16x96xbf16>,
    } else {
    }
    return
  }
  func.func @transform_0(%arg0: i32, %arg1: i32, %arg2: i32) -> (i32, i32) {
    %c0_i32 = arith.constant 0 : i32
    return %arg0, %arg2 : i32, i32
  }
  func.func @transform_1(%arg0: i32, %arg1: i32, %arg2: i32) -> (i32, i32) {
    %c0_i32 = arith.constant 0 : i32
    return %arg2, %arg1 : i32, i32
  }
  func.func @transform_2(%arg0: i32, %arg1: i32, %arg2: i32) -> (i32, i32) {
    %c0_i32 = arith.constant 0 : i32
    %c0_i32_0 = arith.constant 0 : i32
    return %c0_i32, %arg1 : i32, i32
  }
  func.func @transform_3(%arg0: i32, %arg1: i32, %arg2: i32) -> (i32, i32) {
    %c0_i32 = arith.constant 0 : i32
    return %arg0, %arg1 : i32, i32
  }
}

module attributes {stable_mosaic.version = 11 : i64} {
  func.func @_flash_attn_kernel(%arg0: i32, %arg1: i32, %arg2: i32, %arg3: memref<8x8x8xbf16, #tpu.memory_space<vmem>>, %arg4: memref<8x8x8xbf16, #tpu.memory_space<vmem>>, %arg5: memref<8x8x8xbf16, #tpu.memory_space<vmem>>, %arg6: memref<8x8x8xbf16, #tpu.memory_space<vmem>>, %arg7: memref<8x8x1xf32, #tpu.memory_space<vmem>>, %arg8: memref<8x8x1xf32, #tpu.memory_space<vmem>>, %arg9: memref<8x8x8xf32, #tpu.memory_space<vmem>>) attributes {dimension_semantics = [#tpu.dimension_semantics<parallel>, #tpu.dimension_semantics<parallel>, #tpu.dimension_semantics<arbitrary>], iteration_bounds = array<i64: 1, 1, 1>, scalar_prefetch = 0 : i64, scratch_operands = 3 : i64, tpu.core_type = #tpu.core_type<tc>, window_params = [{transform_indices = @transform_0, window_bounds = array<i64: 8, 8, 8>}, {transform_indices = @transform_1, window_bounds = array<i64: 8, 8, 8>}, {transform_indices = @transform_2, window_bounds = array<i64: 8, 8, 8>}, {transform_indices = @transform_3, window_bounds = array<i64: 8, 8, 8>}]} {
    %c0_i32 = arith.constant 0 : i32
    %0 = arith.cmpi eq, %arg2, %c0_i32 : i32
    %1 = arith.extui %0 : i1 to i32
    %c0_i32_0 = arith.constant 0 : i32
    %2 = arith.cmpi ne, %1, %c0_i32_0 : i32
    scf.if %2 {
      %cst_32 = arith.constant 0xFF800000 : f32
      %33 = vector.broadcast %cst_32 : f32 to vector<8x8x1xf32>
      %c0_33 = arith.constant 0 : index
      %c0_34 = arith.constant 0 : index
      %c0_35 = arith.constant 0 : index
      %34 = vector.load %arg7[%c0_33, %c0_34, %c0_35] : memref<8x8x1xf32, #tpu.memory_space<vmem>>, vector<8x8x1xf32>
      tpu.vector_store %arg7[%c0_33, %c0_34, %c0_35], %33 {strides = array<i32>} : memref<8x8x1xf32, #tpu.memory_space<vmem>>, vector<8x8x1xf32>,
      %cst_36 = arith.constant 0.000000e+00 : f32
      %35 = vector.broadcast %cst_36 : f32 to vector<8x8x1xf32>
      %c0_37 = arith.constant 0 : index
      %c0_38 = arith.constant 0 : index
      %c0_39 = arith.constant 0 : index
      %36 = vector.load %arg8[%c0_37, %c0_38, %c0_39] : memref<8x8x1xf32, #tpu.memory_space<vmem>>, vector<8x8x1xf32>
      tpu.vector_store %arg8[%c0_37, %c0_38, %c0_39], %35 {strides = array<i32>} : memref<8x8x1xf32, #tpu.memory_space<vmem>>, vector<8x8x1xf32>,
      %cst_40 = arith.constant 0.000000e+00 : f32
      %37 = vector.broadcast %cst_40 : f32 to vector<8x8x8xf32>
      %c0_41 = arith.constant 0 : index
      %c0_42 = arith.constant 0 : index
      %c0_43 = arith.constant 0 : index
      %38 = vector.load %arg9[%c0_41, %c0_42, %c0_43] : memref<8x8x8xf32, #tpu.memory_space<vmem>>, vector<8x8x8xf32>
      tpu.vector_store %arg9[%c0_41, %c0_42, %c0_43], %37 {strides = array<i32>} : memref<8x8x8xf32, #tpu.memory_space<vmem>>, vector<8x8x8xf32>,
    } else {
    }
    %c0 = arith.constant 0 : index
    %c0_1 = arith.constant 0 : index
    %c0_2 = arith.constant 0 : index
    %3 = vector.load %arg3[%c0, %c0_1, %c0_2] : memref<8x8x8xbf16, #tpu.memory_space<vmem>>, vector<8x8x8xbf16>
    %c0_3 = arith.constant 0 : index
    %c0_4 = arith.constant 0 : index
    %c0_5 = arith.constant 0 : index
    %4 = vector.load %arg4[%c0_3, %c0_4, %c0_5] : memref<8x8x8xbf16, #tpu.memory_space<vmem>>, vector<8x8x8xbf16>
    "tpu.trace_start"() <{level = 10 : i32, message = "hqd,hkd->hqk"}> : () -> ()
    %cst = arith.constant dense<0.000000e+00> : vector<8x8x8xf32>
    %5 = tpu.matmul %3, %4, %cst {dimension_numbers = #tpu.dot_dimension_numbers<[2], [2], [1], [1], [0, 0, 0, 1, 1, 1], [0], [0]>} : vector<8x8x8xbf16>, vector<8x8x8xbf16>, vector<8x8x8xf32> -> vector<8x8x8xf32>
    "tpu.trace_stop"() : () -> ()
    %c0_6 = arith.constant 0 : index
    %c0_7 = arith.constant 0 : index
    %c0_8 = arith.constant 0 : index
    %6 = vector.load %arg7[%c0_6, %c0_7, %c0_8] : memref<8x8x1xf32, #tpu.memory_space<vmem>>, vector<8x8x1xf32>
    %cst_9 = arith.constant dense<0xFF800000> : vector<8x8xf32>
    %7 = vector.multi_reduction <maximumf>, %5, %cst_9 [2] : vector<8x8x8xf32> to vector<8x8xf32>
    %8 = vector.shape_cast %7 : vector<8x8xf32> to vector<8x8x1xf32>
    %9 = arith.maximumf %6, %8 : vector<8x8x1xf32>
    %10 = arith.subf %6, %9 : vector<8x8x1xf32>
    %11 = math.exp %10 : vector<8x8x1xf32>
    %12 = vector.broadcast %9 : vector<8x8x1xf32> to vector<8x8x8xf32>
    %13 = arith.subf %5, %12 : vector<8x8x8xf32>
    %14 = math.exp %13 : vector<8x8x8xf32>
    %c0_10 = arith.constant 0 : index
    %c0_11 = arith.constant 0 : index
    %c0_12 = arith.constant 0 : index
    %15 = vector.load %arg8[%c0_10, %c0_11, %c0_12] : memref<8x8x1xf32, #tpu.memory_space<vmem>>, vector<8x8x1xf32>
    %16 = arith.mulf %11, %15 : vector<8x8x1xf32>
    %cst_13 = arith.constant dense<0.000000e+00> : vector<8x8xf32>
    %17 = vector.multi_reduction <add>, %14, %cst_13 [2] : vector<8x8x8xf32> to vector<8x8xf32>
    %18 = vector.shape_cast %17 : vector<8x8xf32> to vector<8x8x1xf32>
    %19 = arith.addf %16, %18 : vector<8x8x1xf32>
    %c0_14 = arith.constant 0 : index
    %c0_15 = arith.constant 0 : index
    %c0_16 = arith.constant 0 : index
    %20 = vector.load %arg8[%c0_14, %c0_15, %c0_16] : memref<8x8x1xf32, #tpu.memory_space<vmem>>, vector<8x8x1xf32>
    tpu.vector_store %arg8[%c0_14, %c0_15, %c0_16], %19 {strides = array<i32>} : memref<8x8x1xf32, #tpu.memory_space<vmem>>, vector<8x8x1xf32>,
    %c0_17 = arith.constant 0 : index
    %c0_18 = arith.constant 0 : index
    %c0_19 = arith.constant 0 : index
    %21 = vector.load %arg9[%c0_17, %c0_18, %c0_19] : memref<8x8x8xf32, #tpu.memory_space<vmem>>, vector<8x8x8xf32>
    %22 = vector.broadcast %11 : vector<8x8x1xf32> to vector<8x8x8xf32>
    %23 = arith.mulf %22, %21 : vector<8x8x8xf32>
    %24 = arith.truncf %14 : vector<8x8x8xf32> to vector<8x8x8xbf16>
    %c0_20 = arith.constant 0 : index
    %c0_21 = arith.constant 0 : index
    %c0_22 = arith.constant 0 : index
    %25 = vector.load %arg5[%c0_20, %c0_21, %c0_22] : memref<8x8x8xbf16, #tpu.memory_space<vmem>>, vector<8x8x8xbf16>
    "tpu.trace_start"() <{level = 10 : i32, message = "hqk,hkd->hqd"}> : () -> ()
    %cst_23 = arith.constant dense<0.000000e+00> : vector<8x8x8xf32>
    %26 = tpu.matmul %24, %25, %cst_23 {dimension_numbers = #tpu.dot_dimension_numbers<[2], [1], [1], [2], [0, 0, 0, 1, 1, 2], [0], [0]>} : vector<8x8x8xbf16>, vector<8x8x8xbf16>, vector<8x8x8xf32> -> vector<8x8x8xf32>
    "tpu.trace_stop"() : () -> ()
    %27 = arith.addf %23, %26 : vector<8x8x8xf32>
    %c0_24 = arith.constant 0 : index
    %c0_25 = arith.constant 0 : index
    %c0_26 = arith.constant 0 : index
    %28 = vector.load %arg9[%c0_24, %c0_25, %c0_26] : memref<8x8x8xf32, #tpu.memory_space<vmem>>, vector<8x8x8xf32>
    tpu.vector_store %arg9[%c0_24, %c0_25, %c0_26], %27 {strides = array<i32>} : memref<8x8x8xf32, #tpu.memory_space<vmem>>, vector<8x8x8xf32>,
    %c0_27 = arith.constant 0 : index
    %c0_28 = arith.constant 0 : index
    %c0_29 = arith.constant 0 : index
    %29 = vector.load %arg7[%c0_27, %c0_28, %c0_29] : memref<8x8x1xf32, #tpu.memory_space<vmem>>, vector<8x8x1xf32>
    tpu.vector_store %arg7[%c0_27, %c0_28, %c0_29], %9 {strides = array<i32>} : memref<8x8x1xf32, #tpu.memory_space<vmem>>, vector<8x8x1xf32>,
    %c0_i32_30 = arith.constant 0 : i32
    %30 = arith.cmpi eq, %arg2, %c0_i32_30 : i32
    %31 = arith.extui %30 : i1 to i32
    %c0_i32_31 = arith.constant 0 : i32
    %32 = arith.cmpi ne, %31, %c0_i32_31 : i32
    scf.if %32 {
      %c0_32 = arith.constant 0 : index
      %c0_33 = arith.constant 0 : index
      %c0_34 = arith.constant 0 : index
      %33 = vector.load %arg8[%c0_32, %c0_33, %c0_34] : memref<8x8x1xf32, #tpu.memory_space<vmem>>, vector<8x8x1xf32>
      %34 = tpu.reciprocal %33 {approx = true} : vector<8x8x1xf32> -> vector<8x8x1xf32>
      %c0_35 = arith.constant 0 : index
      %c0_36 = arith.constant 0 : index
      %c0_37 = arith.constant 0 : index
      %35 = vector.load %arg9[%c0_35, %c0_36, %c0_37] : memref<8x8x8xf32, #tpu.memory_space<vmem>>, vector<8x8x8xf32>
      %36 = vector.broadcast %34 : vector<8x8x1xf32> to vector<8x8x8xf32>
      %37 = arith.mulf %35, %36 : vector<8x8x8xf32>
      %38 = arith.truncf %37 : vector<8x8x8xf32> to vector<8x8x8xbf16>
      %c0_38 = arith.constant 0 : index
      %c0_39 = arith.constant 0 : index
      %c0_40 = arith.constant 0 : index
      %39 = vector.load %arg6[%c0_38, %c0_39, %c0_40] : memref<8x8x8xbf16, #tpu.memory_space<vmem>>, vector<8x8x8xbf16>
      tpu.vector_store %arg6[%c0_38, %c0_39, %c0_40], %38 {strides = array<i32>} : memref<8x8x8xbf16, #tpu.memory_space<vmem>>, vector<8x8x8xbf16>,
    } else {
    }
    return
  }
  func.func @transform_0(%arg0: i32, %arg1: i32, %arg2: i32) -> (i32, i32, i32) {
    %c0_i32 = arith.constant 0 : i32
    %c0_i32_0 = arith.constant 0 : i32
    return %arg0, %arg1, %c0_i32 : i32, i32, i32
  }
  func.func @transform_1(%arg0: i32, %arg1: i32, %arg2: i32) -> (i32, i32, i32) {
    %c0_i32 = arith.constant 0 : i32
    %c0_i32_0 = arith.constant 0 : i32
    return %arg0, %arg2, %c0_i32 : i32, i32, i32
  }
  func.func @transform_2(%arg0: i32, %arg1: i32, %arg2: i32) -> (i32, i32, i32) {
    %c0_i32 = arith.constant 0 : i32
    %c0_i32_0 = arith.constant 0 : i32
    return %arg0, %arg2, %c0_i32 : i32, i32, i32
  }
  func.func @transform_3(%arg0: i32, %arg1: i32, %arg2: i32) -> (i32, i32, i32) {
    %c0_i32 = arith.constant 0 : i32
    %c0_i32_0 = arith.constant 0 : i32
    return %arg0, %arg1, %c0_i32 : i32, i32, i32
  }
}

module attributes {stable_mosaic.version = 11 : i64} {
  func.func @_matmul_bias_kernel(%arg0: i32, %arg1: i32, %arg2: i32, %arg3: memref<16x32xbf16, #tpu.memory_space<vmem>>, %arg4: memref<32x128xbf16, #tpu.memory_space<vmem>>, %arg5: memref<1x128xf32, #tpu.memory_space<vmem>>, %arg6: memref<16x128xbf16, #tpu.memory_space<vmem>>, %arg7: memref<16x128xf32, #tpu.memory_space<vmem>>) attributes {dimension_semantics = [#tpu.dimension_semantics<parallel>, #tpu.dimension_semantics<parallel>, #tpu.dimension_semantics<arbitrary>], iteration_bounds = array<i64: 1, 1, 1>, scalar_prefetch = 0 : i64, scratch_operands = 1 : i64, tpu.core_type = #tpu.core_type<tc>, window_params = [{transform_indices = @transform_0, window_bounds = array<i64: 16, 32>}, {transform_indices = @transform_1, window_bounds = array<i64: 32, 128>}, {transform_indices = @transform_2, window_bounds = array<i64: 1, 128>}, {transform_indices = @transform_3, window_bounds = array<i64: 16, 128>}]} {
    %c0_i32 = arith.constant 0 : i32
    %0 = arith.cmpi eq, %arg2, %c0_i32 : i32
    %1 = arith.extui %0 : i1 to i32
    %c0_i32_0 = arith.constant 0 : i32
    %2 = arith.cmpi ne, %1, %c0_i32_0 : i32
    scf.if %2 {
      %cst_10 = arith.constant 0.000000e+00 : f32
      %12 = vector.broadcast %cst_10 : f32 to vector<16x128xf32>
      %c0_11 = arith.constant 0 : index
      %c0_12 = arith.constant 0 : index
      %13 = vector.load %arg7[%c0_11, %c0_12] : memref<16x128xf32, #tpu.memory_space<vmem>>, vector<16x128xf32>
      tpu.vector_store %arg7[%c0_11, %c0_12], %12 {strides = array<i32>} : memref<16x128xf32, #tpu.memory_space<vmem>>, vector<16x128xf32>,
    } else {
    }
    %c0 = arith.constant 0 : index
    %c0_1 = arith.constant 0 : index
    %3 = vector.load %arg7[%c0, %c0_1] : memref<16x128xf32, #tpu.memory_space<vmem>>, vector<16x128xf32>
    %c0_2 = arith.constant 0 : index
    %c0_3 = arith.constant 0 : index
    %4 = vector.load %arg3[%c0_2, %c0_3] : memref<16x32xbf16, #tpu.memory_space<vmem>>, vector<16x32xbf16>
    %c0_4 = arith.constant 0 : index
    %c0_5 = arith.constant 0 : index
    %5 = vector.load %arg4[%c0_4, %c0_5] : memref<32x128xbf16, #tpu.memory_space<vmem>>, vector<32x128xbf16>
    %cst = arith.constant dense<0.000000e+00> : vector<16x128xf32>
    %6 = tpu.matmul %4, %5, %cst {dimension_numbers = #tpu.dot_dimension_numbers<[1], [0], [0], [1], [0, 0, 1, 1], [], []>} : vector<16x32xbf16>, vector<32x128xbf16>, vector<16x128xf32> -> vector<16x128xf32>
    %7 = arith.addf %3, %6 : vector<16x128xf32>
    %c0_6 = arith.constant 0 : index
    %c0_7 = arith.constant 0 : index
    %8 = vector.load %arg7[%c0_6, %c0_7] : memref<16x128xf32, #tpu.memory_space<vmem>>, vector<16x128xf32>
    tpu.vector_store %arg7[%c0_6, %c0_7], %7 {strides = array<i32>} : memref<16x128xf32, #tpu.memory_space<vmem>>, vector<16x128xf32>,
    %c0_i32_8 = arith.constant 0 : i32
    %9 = arith.cmpi eq, %arg2, %c0_i32_8 : i32
    %10 = arith.extui %9 : i1 to i32
    %c0_i32_9 = arith.constant 0 : i32
    %11 = arith.cmpi ne, %10, %c0_i32_9 : i32
    scf.if %11 {
      %c0_10 = arith.constant 0 : index
      %c0_11 = arith.constant 0 : index
      %12 = vector.load %arg7[%c0_10, %c0_11] : memref<16x128xf32, #tpu.memory_space<vmem>>, vector<16x128xf32>
      %c0_12 = arith.constant 0 : index
      %c0_13 = arith.constant 0 : index
      %13 = vector.load %arg5[%c0_12, %c0_13] : memref<1x128xf32, #tpu.memory_space<vmem>>, vector<1x128xf32>
      %14 = vector.broadcast %13 : vector<1x128xf32> to vector<16x128xf32>
      %15 = arith.addf %12, %14 : vector<16x128xf32>
      %cst_14 = arith.constant 5.000000e-01 : f32
      %16 = vector.broadcast %cst_14 : f32 to vector<16x128xf32>
      %17 = arith.mulf %16, %15 : vector<16x128xf32>
      %cst_15 = arith.constant 0.707106769 : f32
      %18 = vector.broadcast %cst_15 : f32 to vector<16x128xf32>
      %19 = arith.mulf %15, %18 : vector<16x128xf32>
      %20 = math.erf %19 : vector<16x128xf32>
      %cst_16 = arith.constant 1.000000e+00 : f32
      %21 = vector.broadcast %cst_16 : f32 to vector<16x128xf32>
      %22 = arith.addf %21, %20 : vector<16x128xf32>
      %23 = arith.mulf %17, %22 : vector<16x128xf32>
      %24 = arith.truncf %23 : vector<16x128xf32> to vector<16x128xbf16>
      %c0_17 = arith.constant 0 : index
      %c0_18 = arith.constant 0 : index
      %25 = vector.load %arg6[%c0_17, %c0_18] : memref<16x128xbf16, #tpu.memory_space<vmem>>, vector<16x128xbf16>
      tpu.vector_store %arg6[%c0_17, %c0_18], %24 {strides = array<i32>} : memref<16x128xbf16, #tpu.memory_space<vmem>>, vector<16x128xbf16>,
    } else {
    }
    return
  }
  func.func @transform_0(%arg0: i32, %arg1: i32, %arg2: i32) -> (i32, i32) {
    %c0_i32 = arith.constant 0 : i32
    return %arg0, %arg2 : i32, i32
  }
  func.func @transform_1(%arg0: i32, %arg1: i32, %arg2: i32) -> (i32, i32) {
    %c0_i32 = arith.constant 0 : i32
    return %arg2, %arg1 : i32, i32
  }
  func.func @transform_2(%arg0: i32, %arg1: i32, %arg2: i32) -> (i32, i32) {
    %c0_i32 = arith.constant 0 : i32
    %c0_i32_0 = arith.constant 0 : i32
    return %c0_i32, %arg1 : i32, i32
  }
  func.func @transform_3(%arg0: i32, %arg1: i32, %arg2: i32) -> (i32, i32) {
    %c0_i32 = arith.constant 0 : i32
    return %arg0, %arg1 : i32, i32
  }
}

module attributes {stable_mosaic.version = 11 : i64} {
  func.func @_matmul_bias_kernel(%arg0: i32, %arg1: i32, %arg2: i32, %arg3: memref<16x32xbf16, #tpu.memory_space<vmem>>, %arg4: memref<32x32xbf16, #tpu.memory_space<vmem>>, %arg5: memref<1x32xf32, #tpu.memory_space<vmem>>, %arg6: memref<16x32xbf16, #tpu.memory_space<vmem>>, %arg7: memref<16x32xbf16, #tpu.memory_space<vmem>>, %arg8: memref<16x32xf32, #tpu.memory_space<vmem>>) attributes {dimension_semantics = [#tpu.dimension_semantics<parallel>, #tpu.dimension_semantics<parallel>, #tpu.dimension_semantics<arbitrary>], iteration_bounds = array<i64: 1, 1, 1>, scalar_prefetch = 0 : i64, scratch_operands = 1 : i64, tpu.core_type = #tpu.core_type<tc>, window_params = [{transform_indices = @transform_0, window_bounds = array<i64: 16, 32>}, {transform_indices = @transform_1, window_bounds = array<i64: 32, 32>}, {transform_indices = @transform_2, window_bounds = array<i64: 1, 32>}, {transform_indices = @transform_3, window_bounds = array<i64: 16, 32>}, {transform_indices = @transform_4, window_bounds = array<i64: 16, 32>}]} {
    %c0_i32 = arith.constant 0 : i32
    %0 = arith.cmpi eq, %arg2, %c0_i32 : i32
    %1 = arith.extui %0 : i1 to i32
    %c0_i32_0 = arith.constant 0 : i32
    %2 = arith.cmpi ne, %1, %c0_i32_0 : i32
    scf.if %2 {
      %cst_10 = arith.constant 0.000000e+00 : f32
      %12 = vector.broadcast %cst_10 : f32 to vector<16x32xf32>
      %c0_11 = arith.constant 0 : index
      %c0_12 = arith.constant 0 : index
      %13 = vector.load %arg8[%c0_11, %c0_12] : memref<16x32xf32, #tpu.memory_space<vmem>>, vector<16x32xf32>
      tpu.vector_store %arg8[%c0_11, %c0_12], %12 {strides = array<i32>} : memref<16x32xf32, #tpu.memory_space<vmem>>, vector<16x32xf32>,
    } else {
    }
    %c0 = arith.constant 0 : index
    %c0_1 = arith.constant 0 : index
    %3 = vector.load %arg8[%c0, %c0_1] : memref<16x32xf32, #tpu.memory_space<vmem>>, vector<16x32xf32>
    %c0_2 = arith.constant 0 : index
    %c0_3 = arith.constant 0 : index
    %4 = vector.load %arg3[%c0_2, %c0_3] : memref<16x32xbf16, #tpu.memory_space<vmem>>, vector<16x32xbf16>
    %c0_4 = arith.constant 0 : index
    %c0_5 = arith.constant 0 : index
    %5 = vector.load %arg4[%c0_4, %c0_5] : memref<32x32xbf16, #tpu.memory_space<vmem>>, vector<32x32xbf16>
    %cst = arith.constant dense<0.000000e+00> : vector<16x32xf32>
    %6 = tpu.matmul %4, %5, %cst {dimension_numbers = #tpu.dot_dimension_numbers<[1], [0], [0], [1], [0, 0, 1, 1], [], []>} : vector<16x32xbf16>, vector<32x32xbf16>, vector<16x32xf32> -> vector<16x32xf32>
    %7 = arith.addf %3, %6 : vector<16x32xf32>
    %c0_6 = arith.constant 0 : index
    %c0_7 = arith.constant 0 : index
    %8 = vector.load %arg8[%c0_6, %c0_7] : memref<16x32xf32, #tpu.memory_space<vmem>>, vector<16x32xf32>
    tpu.vector_store %arg8[%c0_6, %c0_7], %7 {strides = array<i32>} : memref<16x32xf32, #tpu.memory_space<vmem>>, vector<16x32xf32>,
    %c0_i32_8 = arith.constant 0 : i32
    %9 = arith.cmpi eq, %arg2, %c0_i32_8 : i32
    %10 = arith.extui %9 : i1 to i32
    %c0_i32_9 = arith.constant 0 : i32
    %11 = arith.cmpi ne, %10, %c0_i32_9 : i32
    scf.if %11 {
      %c0_10 = arith.constant 0 : index
      %c0_11 = arith.constant 0 : index
      %12 = vector.load %arg8[%c0_10, %c0_11] : memref<16x32xf32, #tpu.memory_space<vmem>>, vector<16x32xf32>
      %c0_12 = arith.constant 0 : index
      %c0_13 = arith.constant 0 : index
      %13 = vector.load %arg5[%c0_12, %c0_13] : memref<1x32xf32, #tpu.memory_space<vmem>>, vector<1x32xf32>
      %14 = vector.broadcast %13 : vector<1x32xf32> to vector<16x32xf32>
      %15 = arith.addf %12, %14 : vector<16x32xf32>
      %c0_14 = arith.constant 0 : index
      %c0_15 = arith.constant 0 : index
      %16 = vector.load %arg6[%c0_14, %c0_15] : memref<16x32xbf16, #tpu.memory_space<vmem>>, vector<16x32xbf16>
      %17 = arith.extf %16 : vector<16x32xbf16> to vector<16x32xf32>
      %18 = arith.addf %15, %17 : vector<16x32xf32>
      %19 = arith.truncf %18 : vector<16x32xf32> to vector<16x32xbf16>
      %c0_16 = arith.constant 0 : index
      %c0_17 = arith.constant 0 : index
      %20 = vector.load %arg7[%c0_16, %c0_17] : memref<16x32xbf16, #tpu.memory_space<vmem>>, vector<16x32xbf16>
      tpu.vector_store %arg7[%c0_16, %c0_17], %19 {strides = array<i32>} : memref<16x32xbf16, #tpu.memory_space<vmem>>, vector<16x32xbf16>,
    } else {
    }
    return
  }
  func.func @transform_0(%arg0: i32, %arg1: i32, %arg2: i32) -> (i32, i32) {
    %c0_i32 = arith.constant 0 : i32
    return %arg0, %arg2 : i32, i32
  }
  func.func @transform_1(%arg0: i32, %arg1: i32, %arg2: i32) -> (i32, i32) {
    %c0_i32 = arith.constant 0 : i32
    return %arg2, %arg1 : i32, i32
  }
  func.func @transform_2(%arg0: i32, %arg1: i32, %arg2: i32) -> (i32, i32) {
    %c0_i32 = arith.constant 0 : i32
    %c0_i32_0 = arith.constant 0 : i32
    return %c0_i32, %arg1 : i32, i32
  }
  func.func @transform_3(%arg0: i32, %arg1: i32, %arg2: i32) -> (i32, i32) {
    %c0_i32 = arith.constant 0 : i32
    return %arg0, %arg1 : i32, i32
  }
  func.func @transform_4(%arg0: i32, %arg1: i32, %arg2: i32) -> (i32, i32) {
    %c0_i32 = arith.constant 0 : i32
    return %arg0, %arg1 : i32, i32
  }
}

module attributes {stable_mosaic.version = 11 : i64} {
  func.func @_matmul_bias_kernel(%arg0: i32, %arg1: i32, %arg2: i32, %arg3: memref<16x128xbf16, #tpu.memory_space<vmem>>, %arg4: memref<128x32xbf16, #tpu.memory_space<vmem>>, %arg5: memref<1x32xf32, #tpu.memory_space<vmem>>, %arg6: memref<16x32xbf16, #tpu.memory_space<vmem>>, %arg7: memref<16x32xbf16, #tpu.memory_space<vmem>>, %arg8: memref<16x32xf32, #tpu.memory_space<vmem>>) attributes {dimension_semantics = [#tpu.dimension_semantics<parallel>, #tpu.dimension_semantics<parallel>, #tpu.dimension_semantics<arbitrary>], iteration_bounds = array<i64: 1, 1, 1>, scalar_prefetch = 0 : i64, scratch_operands = 1 : i64, tpu.core_type = #tpu.core_type<tc>, window_params = [{transform_indices = @transform_0, window_bounds = array<i64: 16, 128>}, {transform_indices = @transform_1, window_bounds = array<i64: 128, 32>}, {transform_indices = @transform_2, window_bounds = array<i64: 1, 32>}, {transform_indices = @transform_3, window_bounds = array<i64: 16, 32>}, {transform_indices = @transform_4, window_bounds = array<i64: 16, 32>}]} {
    %c0_i32 = arith.constant 0 : i32
    %0 = arith.cmpi eq, %arg2, %c0_i32 : i32
    %1 = arith.extui %0 : i1 to i32
    %c0_i32_0 = arith.constant 0 : i32
    %2 = arith.cmpi ne, %1, %c0_i32_0 : i32
    scf.if %2 {
      %cst_10 = arith.constant 0.000000e+00 : f32
      %12 = vector.broadcast %cst_10 : f32 to vector<16x32xf32>
      %c0_11 = arith.constant 0 : index
      %c0_12 = arith.constant 0 : index
      %13 = vector.load %arg8[%c0_11, %c0_12] : memref<16x32xf32, #tpu.memory_space<vmem>>, vector<16x32xf32>
      tpu.vector_store %arg8[%c0_11, %c0_12], %12 {strides = array<i32>} : memref<16x32xf32, #tpu.memory_space<vmem>>, vector<16x32xf32>,
    } else {
    }
    %c0 = arith.constant 0 : index
    %c0_1 = arith.constant 0 : index
    %3 = vector.load %arg8[%c0, %c0_1] : memref<16x32xf32, #tpu.memory_space<vmem>>, vector<16x32xf32>
    %c0_2 = arith.constant 0 : index
    %c0_3 = arith.constant 0 : index
    %4 = vector.load %arg3[%c0_2, %c0_3] : memref<16x128xbf16, #tpu.memory_space<vmem>>, vector<16x128xbf16>
    %c0_4 = arith.constant 0 : index
    %c0_5 = arith.constant 0 : index
    %5 = vector.load %arg4[%c0_4, %c0_5] : memref<128x32xbf16, #tpu.memory_space<vmem>>, vector<128x32xbf16>
    %cst = arith.constant dense<0.000000e+00> : vector<16x32xf32>
    %6 = tpu.matmul %4, %5, %cst {dimension_numbers = #tpu.dot_dimension_numbers<[1], [0], [0], [1], [0, 0, 1, 1], [], []>} : vector<16x128xbf16>, vector<128x32xbf16>, vector<16x32xf32> -> vector<16x32xf32>
    %7 = arith.addf %3, %6 : vector<16x32xf32>
    %c0_6 = arith.constant 0 : index
    %c0_7 = arith.constant 0 : index
    %8 = vector.load %arg8[%c0_6, %c0_7] : memref<16x32xf32, #tpu.memory_space<vmem>>, vector<16x32xf32>
    tpu.vector_store %arg8[%c0_6, %c0_7], %7 {strides = array<i32>} : memref<16x32xf32, #tpu.memory_space<vmem>>, vector<16x32xf32>,
    %c0_i32_8 = arith.constant 0 : i32
    %9 = arith.cmpi eq, %arg2, %c0_i32_8 : i32
    %10 = arith.extui %9 : i1 to i32
    %c0_i32_9 = arith.constant 0 : i32
    %11 = arith.cmpi ne, %10, %c0_i32_9 : i32
    scf.if %11 {
      %c0_10 = arith.constant 0 : index
      %c0_11 = arith.constant 0 : index
      %12 = vector.load %arg8[%c0_10, %c0_11] : memref<16x32xf32, #tpu.memory_space<vmem>>, vector<16x32xf32>
      %c0_12 = arith.constant 0 : index
      %c0_13 = arith.constant 0 : index
      %13 = vector.load %arg5[%c0_12, %c0_13] : memref<1x32xf32, #tpu.memory_space<vmem>>, vector<1x32xf32>
      %14 = vector.broadcast %13 : vector<1x32xf32> to vector<16x32xf32>
      %15 = arith.addf %12, %14 : vector<16x32xf32>
      %c0_14 = arith.constant 0 : index
      %c0_15 = arith.constant 0 : index
      %16 = vector.load %arg6[%c0_14, %c0_15] : memref<16x32xbf16, #tpu.memory_space<vmem>>, vector<16x32xbf16>
      %17 = arith.extf %16 : vector<16x32xbf16> to vector<16x32xf32>
      %18 = arith.addf %15, %17 : vector<16x32xf32>
      %19 = arith.truncf %18 : vector<16x32xf32> to vector<16x32xbf16>
      %c0_16 = arith.constant 0 : index
      %c0_17 = arith.constant 0 : index
      %20 = vector.load %arg7[%c0_16, %c0_17] : memref<16x32xbf16, #tpu.memory_space<vmem>>, vector<16x32xbf16>
      tpu.vector_store %arg7[%c0_16, %c0_17], %19 {strides = array<i32>} : memref<16x32xbf16, #tpu.memory_space<vmem>>, vector<16x32xbf16>,
    } else {
    }
    return
  }
  func.func @transform_0(%arg0: i32, %arg1: i32, %arg2: i32) -> (i32, i32) {
    %c0_i32 = arith.constant 0 : i32
    return %arg0, %arg2 : i32, i32
  }
  func.func @transform_1(%arg0: i32, %arg1: i32, %arg2: i32) -> (i32, i32) {
    %c0_i32 = arith.constant 0 : i32
    return %arg2, %arg1 : i32, i32
  }
  func.func @transform_2(%arg0: i32, %arg1: i32, %arg2: i32) -> (i32, i32) {
    %c0_i32 = arith.constant 0 : i32
    %c0_i32_0 = arith.constant 0 : i32
    return %c0_i32, %arg1 : i32, i32
  }
  func.func @transform_3(%arg0: i32, %arg1: i32, %arg2: i32) -> (i32, i32) {
    %c0_i32 = arith.constant 0 : i32
    return %arg0, %arg1 : i32, i32
  }
  func.func @transform_4(%arg0: i32, %arg1: i32, %arg2: i32) -> (i32, i32) {
    %c0_i32 = arith.constant 0 : i32
    return %arg0, %arg1 : i32, i32
  }
}

module attributes {stable_mosaic.version = 11 : i64} {
  func.func @_layernorm_kernel(%arg0: i32, %arg1: memref<16x32xbf16, #tpu.memory_space<vmem>>, %arg2: memref<1x32xf32, #tpu.memory_space<vmem>>, %arg3: memref<1x32xf32, #tpu.memory_space<vmem>>, %arg4: memref<16x32xf32, #tpu.memory_space<vmem>>) attributes {dimension_semantics = [#tpu.dimension_semantics<parallel>], iteration_bounds = array<i64: 1>, scalar_prefetch = 0 : i64, scratch_operands = 0 : i64, tpu.core_type = #tpu.core_type<tc>, window_params = [{transform_indices = @transform_0, window_bounds = array<i64: 16, 32>}, {pipeline_mode = #tpu.pipeline_mode<synchronous>, transform_indices = @transform_1, window_bounds = array<i64: 1, 32>}, {pipeline_mode = #tpu.pipeline_mode<synchronous>, transform_indices = @transform_2, window_bounds = array<i64: 1, 32>}, {transform_indices = @transform_3, window_bounds = array<i64: 16, 32>}]} {
    %c0 = arith.constant 0 : index
    %c0_0 = arith.constant 0 : index
    %0 = vector.load %arg1[%c0, %c0_0] : memref<16x32xbf16, #tpu.memory_space<vmem>>, vector<16x32xbf16>
    %1 = arith.extf %0 : vector<16x32xbf16> to vector<16x32xf32>
    %cst = arith.constant dense<0.000000e+00> : vector<16xf32>
    %2 = vector.multi_reduction <add>, %1, %cst [1] : vector<16x32xf32> to vector<16xf32>
    %3 = vector.shape_cast %2 : vector<16xf32> to vector<16x1xf32>
    %cst_1 = arith.constant 3.200000e+01 : f32
    %4 = vector.broadcast %cst_1 : f32 to vector<16x1xf32>
    %5 = arith.divf %3, %4 : vector<16x1xf32>
    %6 = vector.broadcast %5 : vector<16x1xf32> to vector<16x32xf32>
    %7 = arith.subf %1, %6 : vector<16x32xf32>
    %8 = arith.mulf %7, %7 : vector<16x32xf32>
    %cst_2 = arith.constant dense<0.000000e+00> : vector<16xf32>
    %9 = vector.multi_reduction <add>, %8, %cst_2 [1] : vector<16x32xf32> to vector<16xf32>
    %10 = vector.shape_cast %9 : vector<16xf32> to vector<16x1xf32>
    %cst_3 = arith.constant 3.200000e+01 : f32
    %11 = vector.broadcast %cst_3 : f32 to vector<16x1xf32>
    %12 = arith.divf %10, %11 : vector<16x1xf32>
    %cst_4 = arith.constant 9.99999974E-6 : f32
    %13 = vector.broadcast %cst_4 : f32 to vector<16x1xf32>
    %14 = arith.addf %12, %13 : vector<16x1xf32>
    %15 = math.rsqrt %14 : vector<16x1xf32>
    %16 = vector.broadcast %15 : vector<16x1xf32> to vector<16x32xf32>
    %17 = arith.mulf %7, %16 : vector<16x32xf32>
    %c0_5 = arith.constant 0 : index
    %c0_6 = arith.constant 0 : index
    %18 = vector.load %arg2[%c0_5, %c0_6] : memref<1x32xf32, #tpu.memory_space<vmem>>, vector<1x32xf32>
    %19 = vector.broadcast %18 : vector<1x32xf32> to vector<16x32xf32>
    %20 = arith.mulf %17, %19 : vector<16x32xf32>
    %c0_7 = arith.constant 0 : index
    %c0_8 = arith.constant 0 : index
    %21 = vector.load %arg3[%c0_7, %c0_8] : memref<1x32xf32, #tpu.memory_space<vmem>>, vector<1x32xf32>
    %22 = vector.broadcast %21 : vector<1x32xf32> to vector<16x32xf32>
    %23 = arith.addf %20, %22 : vector<16x32xf32>
    %c0_9 = arith.constant 0 : index
    %c0_10 = arith.constant 0 : index
    %24 = vector.load %arg4[%c0_9, %c0_10] : memref<16x32xf32, #tpu.memory_space<vmem>>, vector<16x32xf32>
    tpu.vector_store %arg4[%c0_9, %c0_10], %23 {strides = array<i32>} : memref<16x32xf32, #tpu.memory_space<vmem>>, vector<16x32xf32>,
    return
  }
  func.func @transform_0(%arg0: i32) -> (i32, i32) {
    %c0_i32 = arith.constant 0 : i32
    %c0_i32_0 = arith.constant 0 : i32
    return %arg0, %c0_i32 : i32, i32
  }
  func.func @transform_1(%arg0: i32) -> (i32, i32) {
    %c0_i32 = arith.constant 0 : i32
    %c0_i32_0 = arith.constant 0 : i32
    %c0_i32_1 = arith.constant 0 : i32
    return %c0_i32, %c0_i32_0 : i32, i32
  }
  func.func @transform_2(%arg0: i32) -> (i32, i32) {
    %c0_i32 = arith.constant 0 : i32
    %c0_i32_0 = arith.constant 0 : i32
    %c0_i32_1 = arith.constant 0 : i32
    return %c0_i32, %c0_i32_0 : i32, i32
  }
  func.func @transform_3(%arg0: i32) -> (i32, i32) {
    %c0_i32 = arith.constant 0 : i32
    %c0_i32_0 = arith.constant 0 : i32
    return %arg0, %c0_i32 : i32, i32
  }
}

</mosaic_0001>

<llo_original>
// kernel: audio_encoder_forward.19
$region0: #{audio_encoder_forward.19}
  #allocation0 [shape = 'u32[]', space=smem, size = 0x4, offset = 0x4, fixed_abs, tag = 'smem constant byte address 0x4 - core index']
  #allocation1 [shape = 'u32[144,128]{1,0:T(1,128)}', space=vmem, size = 0x12000, scoped, tag = 'internal scratch']
  %s0 = inlined_call_operand.vmem [shape: bf16[16,32], index: 0, kind: input, shape index: {}]
  %s1 = inlined_call_operand.vmem [shape: f32[1,32], index: 1, kind: input, shape index: {}]
  %s2 = inlined_call_operand.vmem [shape: f32[1,32], index: 2, kind: input, shape index: {}]
  %s3 = inlined_call_operand.vmem [shape: bf16[16,32], index: 3, kind: output, shape index: {}]
  %s4 = sld [smem:[#allocation0]]
  $region22: #{audio_encoder_forward.19} parent=0
    _
  %s6 = ssub.s32 1, %s4
  %s7 = scalar_select 0, %s6, %s4
  // Predicated region
  $region2: #{audio_encoder_forward.19} parent=0 // pred_check
    _
  $region3: #{audio_encoder_forward.19} parent=0 // pred_check_branch
    %9 = sbr.rel (0) target = $region5
  $region4: #{audio_encoder_forward.19} parent=0 // pred_region
    _
  $region5: #{audio_encoder_forward.19} parent=0 // pred_fallthru
    _
  // Predicated region
  $region6: #{audio_encoder_forward.19} parent=0 // pred_check
    _
  $region7: #{audio_encoder_forward.19} parent=0 // pred_check_branch
    %11 = sbr.rel (0) target = $region9
  $region8: #{audio_encoder_forward.19} parent=0 // pred_region
    _
  $region9: #{audio_encoder_forward.19} parent=0 // pred_fallthru
    _
  // Predicated region
  $region10: #{audio_encoder_forward.19} parent=0 // pred_check
    _
  $region11: #{audio_encoder_forward.19} parent=0 // pred_check_branch
    %13 = sbr.rel (0) target = $region13
  $region12: #{audio_encoder_forward.19} parent=0 // pred_region
    _
  $region13: #{audio_encoder_forward.19} parent=0 // pred_fallthru
    _
  %v14 = vld [vmem:[%s0] sm:$0xf]
  %v15 = vld [vmem:[%s0 + $0x4] sm:$0xf]
  %v16 = vunpack.c.l.bf16 %v14
  %v17 = vunpack.c.l.bf16 %v15
  %vm18 = vcmask 261120
  %v19 = vsel %vm18, %v16, 0.0
  %20 = vadd.xlane.f32.xlu0 %v19
  %v21 = vpop.xlane.xlu0 %20
  %v22 = vsel %vm18, %v17, 0.0
  %23 = vadd.xlane.f32.xlu0 %v22
  %v24 = vpop.xlane.xlu0 %23
  %v25 = vrcp.pop 32.0
  %v26 = vmul.f32 %v21, %v25
  %v27 = vmul.f32 %v24, %v25
  %v28 = vsub.f32 %v16, %v26
  %v29 = vsub.f32 %v17, %v27
  %v30 = vmul.f32 %v28, %v28
  %v31 = vmul.f32 %v29, %v29
  %v32 = vsel %vm18, %v30, 0.0
  %33 = vadd.xlane.f32.xlu0 %v32
  %v34 = vpop.xlane.xlu0 %33
  %v35 = vsel %vm18, %v31, 0.0
  %36 = vadd.xlane.f32.xlu0 %v35
  %v37 = vpop.xlane.xlu0 %36
  %v38 = vmul.f32 %v34, %v25
  %v39 = vmul.f32 %v37, %v25
  %v40 = vadd.f32 %v38, 1e-05
  %v41 = vadd.f32 %v39, 1e-05
  %v42 = vrsqrt.pop %v40
  %v43 = vrsqrt.pop %v41
  %v44 = vmul.f32 %v28, %v42
  %v45 = vmul.f32 %v29, %v43
  %v46 = vld [vmem:[%s1] sm:$0x1]
  %v48 = vlaneseq
  %v49 = vshrl.u32 %v48, 7
  %v50 = vsub.s32 0, %v49
  %v51 = vrot.slane %v46, %v50
  %v53 = vmul.f32 %v44, %v51
  %v54 = vmul.f32 %v45, %v51
  %v55 = vld [vmem:[%s2] sm:$0x1]
  %v57 = vlaneseq
  %v58 = vshrl.u32 %v57, 7
  %v59 = vsub.s32 0, %v58
  %v60 = vrot.slane %v55, %v59
  %v62 = vadd.f32 %v53, %v60
  %v63 = vadd.f32 %v54, %v60
  %v64 = vpack.c.bf16 %v63, %v62
  %v66 = vunpack.c.l.b16 %v64
  %v67 = vunpack.c.h.b16 %v64
  %v68 = vpack.c.b16 %v66, %v66
  %v69 = vpack.c.b16 %v67, %v67
  %vm72 = vcmask 257024
  %73 = vst.msk [vmem:[%s3] sm:$0xf] %vm72, %v68
  %74 = vst.msk [vmem:[%s3 + $0x4] sm:$0xf] %vm72, %v69
  // Predicated region
  $region14: #{audio_encoder_forward.19} parent=0 // pred_check
    _
  $region15: #{audio_encoder_forward.19} parent=0 // pred_check_branch
    %76 = sbr.rel (0) target = $region17
  $region16: #{audio_encoder_forward.19} parent=0 // pred_region
    _
  $region17: #{audio_encoder_forward.19} parent=0 // pred_fallthru
    _
  // Predicated region
  $region18: #{audio_encoder_forward.19} parent=0 // pred_check
    _
  $region19: #{audio_encoder_forward.19} parent=0 // pred_check_branch
    %78 = sbr.rel (0) target = $region21
  $region20: #{audio_encoder_forward.19} parent=0 // pred_region
    _
  $region21: #{audio_encoder_forward.19} parent=0 // pred_fallthru
    _

// kernel: audio_encoder_forward.17
$region0: #{audio_encoder_forward.17}
  #allocation0 [shape = 'u32[]', space=smem, size = 0x4, offset = 0x4, fixed_abs, tag = 'smem constant byte address 0x4 - core index']
  #allocation1 [shape = 'u32[144,128]{1,0:T(1,128)}', space=vmem, size = 0x12000, scoped, tag = 'internal scratch']
  #allocation2 [shape = 'f32[32,32]{1,0:T(8,128)}', space=vmem, size = 0x4000, scoped, tag = 'scratch operand']
  %s0 = inlined_call_operand.vmem [shape: bf16[32,12], index: 0, kind: input, shape index: {}]
  %s1 = inlined_call_operand.vmem [shape: bf16[12,32], index: 1, kind: input, shape index: {}]
  %s2 = inlined_call_operand.vmem [shape: f32[1,32], index: 2, kind: input, shape index: {}]
  %s3 = inlined_call_operand.vmem [shape: bf16[32,32], index: 3, kind: output, shape index: {}]
  %s4 = sld [smem:[#allocation0]]
  $region30: #{audio_encoder_forward.17} parent=0
    _
  %s6 = ssub.s32 1, %s4
  %s7 = scalar_select 0, %s6, %s4
  // Predicated region
  $region2: #{audio_encoder_forward.17} parent=0 // pred_check
    _
  $region3: #{audio_encoder_forward.17} parent=0 // pred_check_branch
    %9 = sbr.rel (0) target = $region5
  $region4: #{audio_encoder_forward.17} parent=0 // pred_region
    _
  $region5: #{audio_encoder_forward.17} parent=0 // pred_fallthru
    _
  // Predicated region
  $region6: #{audio_encoder_forward.17} parent=0 // pred_check
    _
  $region7: #{audio_encoder_forward.17} parent=0 // pred_check_branch
    %11 = sbr.rel (0) target = $region9
  $region8: #{audio_encoder_forward.17} parent=0 // pred_region
    _
  $region9: #{audio_encoder_forward.17} parent=0 // pred_fallthru
    _
  // Predicated region
  $region10: #{audio_encoder_forward.17} parent=0 // pred_check
    _
  $region11: #{audio_encoder_forward.17} parent=0 // pred_check_branch
    %13 = sbr.rel (0) target = $region13
  $region12: #{audio_encoder_forward.17} parent=0 // pred_region
    _
  $region13: #{audio_encoder_forward.17} parent=0 // pred_fallthru
    _
  %p15 = scmp.eq.s32.totalorder 0, 0
  // Predicated region
  $region14: #{audio_encoder_forward.17} parent=0 // pred_check
    %p16 = pneg %p15
  $region15: #{audio_encoder_forward.17} parent=0 // pred_check_branch
    %18 = sbr.rel (%p16) target = $region17
  $region16: #{audio_encoder_forward.17} parent=0 // pred_region
    %vm19 = vcmask 261120
    %20 = vst.msk [vmem:[#allocation2] sm:$0xff] %vm19, 0.0
    %21 = vst.msk [vmem:[#allocation2 + $0x8] sm:$0xff] %vm19, 0.0
    %22 = vst.msk [vmem:[#allocation2 + $0x10] sm:$0xff] %vm19, 0.0
    %23 = vst.msk [vmem:[#allocation2 + $0x18] sm:$0xff] %vm19, 0.0
  $region17: #{audio_encoder_forward.17} parent=0 // pred_fallthru
    _
  %v24 = vld [vmem:[#allocation2] sm:$0xff]
  %v25 = vld [vmem:[#allocation2 + $0x8] sm:$0xff]
  %v26 = vld [vmem:[#allocation2 + $0x10] sm:$0xff]
  %v27 = vld [vmem:[#allocation2 + $0x18] sm:$0xff]
  %v28 = vld [vmem:[%s0] sm:$0xf]
  %v29 = vld [vmem:[%s0 + $0x4] sm:$0xf]
  %v30 = vld [vmem:[%s0 + $0x8] sm:$0xf]
  %v31 = vld [vmem:[%s0 + $0xc] sm:$0xf]
  %v32 = vld [vmem:[%s1] sm:$0xf]
  %v33 = vld [vmem:[%s1 + $0x4] sm:$0x3]
  %v38 = vunpack.c.l.b16 %v28
  %v39 = vunpack.c.l.b16 %v29
  %v40 = vunpack.c.l.b16 %v30
  %v41 = vunpack.c.l.b16 %v31
  %v42 = vpack.c.b16 %v39, %v38
  %v43 = vpack.c.b16 %v41, %v40
  %v46 = vunpack.c.l.b16 %v32
  %v47 = vunpack.c.l.b16 %v33
  %v48 = vpack.c.b16 %v47, %v46
  %vm49 = vcmask 97280
  %v51 = vsel %vm49, %v42, 0
  %v54 = vsel %vm49, %v43, 0
  %vm56 = vcmask 1045504
  %v58 = vsel %vm56, %v48, 0
  %60 = vmatprep.subr.bf16.mxu0 0
  %61 = vmatpush1.bf16.msra.mxu0 %v58
  %62 = vmatprep.subr.bf16.mxu0 0
  %63 = vmatpush1.bf16.msra.mxu0 0
  %64 = vmatprep.subr.bf16.mxu0 0
  %65 = vmatpush1.bf16.msra.mxu0 0
  %66 = vmatprep.subr.bf16.mxu0 0
  %67 = vmatpush1.bf16.msra.mxu0 0
  %68 = vmatprep.subr.bf16.mxu0 0
  %69 = vmatpush1.bf16.msra.mxu0 0
  %70 = vmatprep.subr.bf16.mxu0 0
  %71 = vmatpush1.bf16.msra.mxu0 0
  %72 = vmatprep.subr.bf16.mxu0 0
  %73 = vmatpush1.bf16.msra.mxu0 0
  %74 = vmatprep.subr.bf16.mxu0 0
  %75 = vmatpush1.bf16.msra.mxu0 0
  %76 = vmatprep.subr.bf16.mxu0 0
  %77 = vmatpush1.bf16.msra.mxu0 0
  %78 = vmatprep.subr.bf16.mxu0 0
  %79 = vmatpush1.bf16.msra.mxu0 0
  %80 = vmatprep.subr.bf16.mxu0 0
  %81 = vmatpush1.bf16.msra.mxu0 0
  %82 = vmatprep.subr.bf16.mxu0 0
  %83 = vmatpush1.bf16.msra.mxu0 0
  %84 = vmatprep.subr.bf16.mxu0 0
  %85 = vmatpush1.bf16.msra.mxu0 0
  %86 = vmatprep.subr.bf16.mxu0 0
  %87 = vmatpush1.bf16.msra.mxu0 0
  %88 = vmatprep.subr.bf16.mxu0 0
  %89 = vmatpush1.bf16.msra.mxu0 0
  %90 = vmatprep.subr.bf16.mxu0 0
  %91 = vmatpush1.bf16.msra.mxu0 0
  %92 = vmatprep.mubr.bf16.mxu0 0
  %93 = vmatmul.mubr.bf16.gmra.mrb[0].mxu0 %v51
  %v94 = vpop.f32.mrb[0].mxu0
  %v95 = vadd.f32 0.0, %v94
  %v96 = vpop.f32.mrb[0].mxu0
  %v97 = vpop.f32.mrb[0].mxu0
  %v98 = vadd.f32 0.0, %v97
  %v99 = vpop.f32.mrb[0].mxu0
  %100 = vmatprep.mubr.bf16.mxu0 0
  %101 = vmatmul.mubr.bf16.gmra.mrb[0].mxu0 %v54
  %v102 = vpop.f32.mrb[0].mxu0
  %v103 = vadd.f32 0.0, %v102
  %v104 = vpop.f32.mrb[0].mxu0
  %v105 = vpop.f32.mrb[0].mxu0
  %v106 = vadd.f32 0.0, %v105
  %v107 = vpop.f32.mrb[0].mxu0
  %108 = vdwg.mxu0
  %v109 = vadd.f32 %v24, %v95
  %v110 = vadd.f32 %v25, %v98
  %v111 = vadd.f32 %v26, %v103
  %v112 = vadd.f32 %v27, %v106
  %vm113 = vcmask 261120
  %114 = vst.msk [vmem:[#allocation2] sm:$0xff] %vm113, %v109
  %115 = vst.msk [vmem:[#allocation2 + $0x8] sm:$0xff] %vm113, %v110
  %116 = vst.msk [vmem:[#allocation2 + $0x10] sm:$0xff] %vm113, %v111
  %117 = vst.msk [vmem:[#allocation2 + $0x18] sm:$0xff] %vm113, %v112
  // Predicated region
  $region18: #{audio_encoder_forward.17} parent=0 // pred_check
    %p118 = pneg %p15
  $region19: #{audio_encoder_forward.17} parent=0 // pred_check_branch
    %120 = sbr.rel (%p118) target = $region21
  $region20: #{audio_encoder_forward.17} parent=0 // pred_region
    %v121 = vld [vmem:[#allocation2] sm:$0xff]
    %v122 = vld [vmem:[#allocation2 + $0x8] sm:$0xff]
    %v123 = vld [vmem:[#allocation2 + $0x10] sm:$0xff]
    %v124 = vld [vmem:[#allocation2 + $0x18] sm:$0xff]
    %v125 = vld [vmem:[%s2] sm:$0x1]
    %v127 = vlaneseq
    %v128 = vshrl.u32 %v127, 7
    %v129 = vsub.s32 0, %v128
    %v130 = vrot.slane %v125, %v129
    %v132 = vadd.f32 %v121, %v130
    %v133 = vadd.f32 %v122, %v130
    %v134 = vadd.f32 %v123, %v130
    %v135 = vadd.f32 %v124, %v130
    %v136 = vmul.f32 %v132, 0.5
    %v137 = vmul.f32 %v133, 0.5
    %v138 = vmul.f32 %v134, 0.5
    %v139 = vmul.f32 %v135, 0.5
    %v140 = vmul.f32 %v132, 0.70710677
    %v141 = vmul.f32 %v133, 0.70710677
    %v142 = vmul.f32 %v134, 0.70710677
    %v143 = vmul.f32 %v135, 0.70710677
    %v144 = verf.f32.pop %v140
    %v145 = verf.f32.pop %v141
    %v146 = verf.f32.pop %v142
    %v147 = verf.f32.pop %v143
    %v148 = vadd.f32 %v144, 1.0
    %v149 = vadd.f32 %v145, 1.0
    %v150 = vadd.f32 %v146, 1.0
    %v151 = vadd.f32 %v147, 1.0
    %v152 = vmul.f32 %v136, %v148
    %v153 = vmul.f32 %v137, %v149
    %v154 = vmul.f32 %v138, %v150
    %v155 = vmul.f32 %v139, %v151
    %v156 = vpack.c.bf16 %v153, %v152
    %v157 = vpack.c.bf16 %v155, %v154
    %v160 = vunpack.c.l.b16 %v156
    %v161 = vunpack.c.h.b16 %v156
    %v162 = vunpack.c.l.b16 %v157
    %v163 = vunpack.c.h.b16 %v157
    %v164 = vpack.c.b16 %v160, %v160
    %v165 = vpack.c.b16 %v161, %v161
    %v166 = vpack.c.b16 %v162, %v162
    %v167 = vpack.c.b16 %v163, %v163
    %vm172 = vcmask 257024
    %173 = vst.msk [vmem:[%s3] sm:$0xf] %vm172, %v164
    %174 = vst.msk [vmem:[%s3 + $0x4] sm:$0xf] %vm172, %v165
    %175 = vst.msk [vmem:[%s3 + $0x8] sm:$0xf] %vm172, %v166
    %176 = vst.msk [vmem:[%s3 + $0xc] sm:$0xf] %vm172, %v167
  $region21: #{audio_encoder_forward.17} parent=0 // pred_fallthru
    _
  // Predicated region
  $region22: #{audio_encoder_forward.17} parent=0 // pred_check
    _
  $region23: #{audio_encoder_forward.17} parent=0 // pred_check_branch
    %178 = sbr.rel (0) target = $region25
  $region24: #{audio_encoder_forward.17} parent=0 // pred_region
    _
  $region25: #{audio_encoder_forward.17} parent=0 // pred_fallthru
    _
  // Predicated region
  $region26: #{audio_encoder_forward.17} parent=0 // pred_check
    _
  $region27: #{audio_encoder_forward.17} parent=0 // pred_check_branch
    %180 = sbr.rel (0) target = $region29
  $region28: #{audio_encoder_forward.17} parent=0 // pred_region
    _
  $region29: #{audio_encoder_forward.17} parent=0 // pred_fallthru
    _

// kernel: audio_encoder_forward.18
$region0: #{audio_encoder_forward.18}
  #allocation0 [shape = 'u32[]', space=smem, size = 0x4, offset = 0x4, fixed_abs, tag = 'smem constant byte address 0x4 - core index']
  #allocation1 [shape = 'u32[144,128]{1,0:T(1,128)}', space=vmem, size = 0x12000, scoped, tag = 'internal scratch']
  #allocation2 [shape = 'f32[8,32]{1,0:T(8,128)}', space=vmem, size = 0x1000, scoped, tag = 'scratch operand']
  %s0 = inlined_call_operand.vmem [shape: bf16[16,96], index: 0, kind: input, shape index: {}]
  %s1 = inlined_call_operand.vmem [shape: bf16[96,32], index: 1, kind: input, shape index: {}]
  %s2 = inlined_call_operand.vmem [shape: f32[1,32], index: 2, kind: input, shape index: {}]
  %s3 = inlined_call_operand.vmem [shape: f32[8,32], index: 3, kind: input, shape index: {}]
  %s4 = inlined_call_operand.vmem [shape: bf16[16,32], index: 4, kind: output, shape index: {}]
  %s5 = sld [smem:[#allocation0]]
  $region57: #{audio_encoder_forward.18} parent=0
    _
  %s7 = ssub.s32 1, %s5
  %s8 = scalar_select 0, %s7, %s5
  loop: start=0, step=1, limit=4
  $region2: #{audio_encoder_forward.18} parent=0 // loop_pre_header
    _
  $region3: #{audio_encoder_forward.18} parent=0 // loop_header
    %s10 = sphi 0, %s14
    %p11 = scmp.ge.s32.totalorder %s10, 4
    %s17 = sphi 0, %s36
    %s18 = sphi 0, %s32
    %s19 = sphi 0, %s28
    %s20 = sphi 0, %s17
    %s21 = sphi 0, %s18
    %s22 = sphi 0, %s19
    %s23 = sphi 0, %s20
    %s24 = sphi 0, %s21
    %s25 = sphi 0, %s22
    %s41 = sphi 0, %s43
    %s44 = sphi 0, %s41
    %s45 = sphi 0, %s44
    %s61 = sphi 0, %s45
    %s69 = sphi 0, %s71
    %s72 = sphi 0, %s69
    %s73 = sphi 0, %s72
    %s89 = sphi 0, %s73
    %s95 = sphi 0, %s97
    %s98 = sphi 0, %s95
    %s99 = sphi 0, %s98
    %s115 = sphi 0, %s99
    %s121 = sphi 0, %s123
    %s124 = sphi 0, %s121
    %s125 = sphi 0, %s124
    %s141 = sphi 0, %s125
    %s149 = sphi 0, %s151
    %s152 = sphi 0, %s149
    %s153 = sphi 0, %s152
    %s169 = sphi 0, %s153
  $region4: #{audio_encoder_forward.18} parent=0 // loop_header_branch
    %13 = sbr.rel (%p11) target = $region8
  $region5: #{audio_encoder_forward.18} parent=0 // loop_body
    %s15 = ssub.s32 %s10, 1
    %s16 = ssub.s32 %s10, 2
    %s26 = sadd.s32 1, %s19
    %p27 = scmp.ge.s32.totalorder %s26, 1
    %s28 = scalar_select %p27, 0, %s26
    %s29 = sadd.s32 1, %s18
    %s30 = scalar_select %p27, %s29, %s18
    %p31 = scmp.ge.s32.totalorder %s30, 1
    %s32 = scalar_select %p31, 0, %s30
    %s33 = sadd.s32 1, %s17
    %s34 = scalar_select %p31, %s33, %s17
    %p35 = scmp.ge.s32.totalorder %s34, 2
    %s36 = scalar_select %p35, 0, %s34
    %s37 = ssub.s32 %s17, %s36
    %s38 = ssub.s32 %s19, %s28
    %s39 = sor.u32 %s37, %s38
    %p40 = scmp.eq.s32.totalorder %s39, 0
    %s42 = sadd.s32 %s41, 1
    %s43 = scalar_select %p40, %s41, %s42
    %p46 = pneg %p40
    %p47 = scmp.eq.s32.totalorder %s10, 1
    %p48 = por %p46, %p47
    %p49 = scmp.ne.s32.totalorder %s41, %s44
    %p50 = scmp.eq.s32.totalorder %s10, 0
    %p51 = por %p49, %p50
    %p52 = scmp.ne.s32.totalorder %s41, %s44
    %p53 = scmp.eq.s32.totalorder %s15, 1
    %p54 = por %p52, %p53
    %p55 = scmp.ne.s32.totalorder %s44, %s45
    %p56 = scmp.eq.s32.totalorder %s15, 0
    %p57 = por %p55, %p56
    %p58 = scmp.ne.s32.totalorder %s44, %s45
    %p59 = scmp.eq.s32.totalorder %s16, 1
    %p60 = por %p58, %p59
    %p62 = scmp.ne.s32.totalorder %s45, %s61
    %p63 = scmp.eq.s32.totalorder %s16, 0
    %p64 = por %p62, %p63
    %s65 = ssub.s32 %s19, %s28
    %s66 = ssub.s32 %s18, %s32
    %s67 = sor.u32 %s65, %s66
    %p68 = scmp.eq.s32.totalorder %s67, 0
    %s70 = sadd.s32 %s69, 1
    %s71 = scalar_select %p68, %s69, %s70
    %p74 = pneg %p68
    %p75 = scmp.eq.s32.totalorder %s10, 1
    %p76 = por %p74, %p75
    %p77 = scmp.ne.s32.totalorder %s69, %s72
    %p78 = scmp.eq.s32.totalorder %s10, 0
    %p79 = por %p77, %p78
    %p80 = scmp.ne.s32.totalorder %s69, %s72
    %p81 = scmp.eq.s32.totalorder %s15, 1
    %p82 = por %p80, %p81
    %p83 = scmp.ne.s32.totalorder %s72, %s73
    %p84 = scmp.eq.s32.totalorder %s15, 0
    %p85 = por %p83, %p84
    %p86 = scmp.ne.s32.totalorder %s72, %s73
    %p87 = scmp.eq.s32.totalorder %s16, 1
    %p88 = por %p86, %p87
    %p90 = scmp.ne.s32.totalorder %s73, %s89
    %p91 = scmp.eq.s32.totalorder %s16, 0
    %p92 = por %p90, %p91
    %s93 = ssub.s32 %s18, %s32
    %p94 = scmp.eq.s32.totalorder %s93, 0
    %s96 = sadd.s32 %s95, 1
    %s97 = scalar_select %p94, %s95, %s96
    %p100 = pneg %p94
    %p101 = scmp.eq.s32.totalorder %s10, 1
    %p102 = por %p100, %p101
    %p103 = scmp.ne.s32.totalorder %s95, %s98
    %p104 = scmp.eq.s32.totalorder %s10, 0
    %p105 = por %p103, %p104
    %p106 = scmp.ne.s32.totalorder %s95, %s98
    %p107 = scmp.eq.s32.totalorder %s15, 1
    %p108 = por %p106, %p107
    %p109 = scmp.ne.s32.totalorder %s98, %s99
    %p110 = scmp.eq.s32.totalorder %s15, 0
    %p111 = por %p109, %p110
    %p112 = scmp.ne.s32.totalorder %s98, %s99
    %p113 = scmp.eq.s32.totalorder %s16, 1
    %p114 = por %p112, %p113
    %p116 = scmp.ne.s32.totalorder %s99, %s115
    %p117 = scmp.eq.s32.totalorder %s16, 0
    %p118 = por %p116, %p117
    %s119 = ssub.s32 %s18, %s32
    %p120 = scmp.eq.s32.totalorder %s119, 0
    %s122 = sadd.s32 %s121, 1
    %s123 = scalar_select %p120, %s121, %s122
    %p126 = pneg %p120
    %p127 = scmp.eq.s32.totalorder %s10, 1
    %p128 = por %p126, %p127
    %p129 = scmp.ne.s32.totalorder %s121, %s124
    %p130 = scmp.eq.s32.totalorder %s10, 0
    %p131 = por %p129, %p130
    %p132 = scmp.ne.s32.totalorder %s121, %s124
    %p133 = scmp.eq.s32.totalorder %s15, 1
    %p134 = por %p132, %p133
    %p135 = scmp.ne.s32.totalorder %s124, %s125
    %p136 = scmp.eq.s32.totalorder %s15, 0
    %p137 = por %p135, %p136
    %p138 = scmp.ne.s32.totalorder %s124, %s125
    %p139 = scmp.eq.s32.totalorder %s16, 1
    %p140 = por %p138, %p139
    %p142 = scmp.ne.s32.totalorder %s125, %s141
    %p143 = scmp.eq.s32.totalorder %s16, 0
    %p144 = por %p142, %p143
    %s145 = ssub.s32 %s17, %s36
    %s146 = ssub.s32 %s18, %s32
    %s147 = sor.u32 %s145, %s146
    %p148 = scmp.eq.s32.totalorder %s147, 0
    %s150 = sadd.s32 %s149, 1
    %s151 = scalar_select %p148, %s149, %s150
    %p154 = pneg %p148
    %p155 = scmp.eq.s32.totalorder %s10, 1
    %p156 = por %p154, %p155
    %p157 = scmp.ne.s32.totalorder %s149, %s152
    %p158 = scmp.eq.s32.totalorder %s10, 0
    %p159 = por %p157, %p158
    %p160 = scmp.ne.s32.totalorder %s149, %s152
    %p161 = scmp.eq.s32.totalorder %s15, 1
    %p162 = por %p160, %p161
    %p163 = scmp.ne.s32.totalorder %s152, %s153
    %p164 = scmp.eq.s32.totalorder %s15, 0
    %p165 = por %p163, %p164
    %p166 = scmp.ne.s32.totalorder %s152, %s153
    %p167 = scmp.eq.s32.totalorder %s16, 1
    %p168 = por %p166, %p167
    %p170 = scmp.ne.s32.totalorder %s153, %s169
    %p171 = scmp.eq.s32.totalorder %s16, 0
    %p172 = por %p170, %p171
    %p173 = scmp.le.s32.totalorder 1, %s10
    %p174 = scmp.lt.s32.totalorder %s10, 3
    %p175 = pnand %p173, %p174
    %p176 = pneg %p175
    // Predicated region
    $region9: #{audio_encoder_forward.18} parent=5 // pred_check
      _
    $region10: #{audio_encoder_forward.18} parent=5 // pred_check_branch
      %178 = sbr.rel (%p175) target = $region12
    $region11: #{audio_encoder_forward.18} parent=5 // pred_region
      %s179 = ssub.s32 %s10, 1
      // Predicated region
      $region13: #{audio_encoder_forward.18} parent=11 // pred_check
        %p180 = pneg %p85
      $region14: #{audio_encoder_forward.18} parent=11 // pred_check_branch
        %182 = sbr.rel (%p180) target = $region16
      $region15: #{audio_encoder_forward.18} parent=11 // pred_region
        %s183 = smul.u32 12, %s22
        %p184 = scmp.lt.s32.totalorder %s183, 11
        %s185 = scalar_select %p184, %s183, 11
        %p186 = scmp.lt.s32.totalorder %s21, 0
        %s187 = scalar_select %p186, %s21, 0
        %s188 = sadd.s32 %s187, %s185
        %s189 = smul.addr %s188, 4
        %s190 = scalar_lea.vmem %s1, %s189
        %s191 = smul.u32 12, %s22
      $region16: #{audio_encoder_forward.18} parent=11 // pred_fallthru
        _
      // Predicated region
      $region17: #{audio_encoder_forward.18} parent=11 // pred_check
        %p192 = pneg %p111
      $region18: #{audio_encoder_forward.18} parent=11 // pred_check_branch
        %194 = sbr.rel (%p192) target = $region20
      $region19: #{audio_encoder_forward.18} parent=11 // pred_region
        %p195 = scmp.lt.s32.totalorder %s21, 0
        %s196 = scalar_select %p195, %s21, 0
        %s197 = scalar_lea.vmem %s2, %s196
      $region20: #{audio_encoder_forward.18} parent=11 // pred_fallthru
        _
      // Predicated region
      $region21: #{audio_encoder_forward.18} parent=11 // pred_check
        %p198 = pneg %p137
      $region22: #{audio_encoder_forward.18} parent=11 // pred_check_branch
        %200 = sbr.rel (%p198) target = $region24
      $region23: #{audio_encoder_forward.18} parent=11 // pred_region
        %p201 = scmp.lt.s32.totalorder %s21, 0
        %s202 = scalar_select %p201, %s21, 0
        %s203 = smul.addr %s202, 8
        %s204 = scalar_lea.vmem %s3, %s203
      $region24: #{audio_encoder_forward.18} parent=11 // pred_fallthru
        _
    $region12: #{audio_encoder_forward.18} parent=5 // pred_fallthru
      _
    %p205 = scmp.lt.s32.totalorder %s10, 2
    // Predicated region
    $region25: #{audio_encoder_forward.18} parent=5 // pred_check
      %p206 = pneg %p205
    $region26: #{audio_encoder_forward.18} parent=5 // pred_check_branch
      %208 = sbr.rel (%p206) target = $region28
    $region27: #{audio_encoder_forward.18} parent=5 // pred_region
      // Predicated region
      $region29: #{audio_encoder_forward.18} parent=27 // pred_check
        %p209 = pneg %p51
      $region30: #{audio_encoder_forward.18} parent=27 // pred_check_branch
        %211 = sbr.rel (%p209) target = $region32
      $region31: #{audio_encoder_forward.18} parent=27 // pred_region
        %p212 = scmp.lt.s32.totalorder %s17, 1
        %s213 = scalar_select %p212, %s17, 1
        %p214 = scmp.lt.s32.totalorder %s19, 0
        %s215 = scalar_select %p214, %s19, 0
        %s216 = sadd.s32 %s215, %s213
        %s217 = smul.addr %s216, 4
        %s218 = scalar_lea.vmem %s0, %s217
      $region32: #{audio_encoder_forward.18} parent=27 // pred_fallthru
        _
    $region28: #{audio_encoder_forward.18} parent=5 // pred_fallthru
      _
    %p219 = scmp.le.s32.totalorder 1, %s10
    %p220 = scmp.lt.s32.totalorder %s10, 3
    %p221 = pnand %p219, %p220
    %p222 = pneg %p221
    // Predicated region
    $region33: #{audio_encoder_forward.18} parent=5 // pred_check
      _
    $region34: #{audio_encoder_forward.18} parent=5 // pred_check_branch
      %224 = sbr.rel (%p221) target = $region36
    $region35: #{audio_encoder_forward.18} parent=5 // pred_region
      %s225 = ssub.s32 %s10, 1
      %p226 = scmp.lt.s32.totalorder %s20, 1
      %s227 = scalar_select %p226, %s20, 1
      %p228 = scmp.lt.s32.totalorder %s22, 0
      %s229 = scalar_select %p228, %s22, 0
      %s230 = sadd.s32 %s229, %s227
      %s231 = smul.addr %s230, 4
      %s232 = scalar_lea.vmem %s0, %s231
      %p233 = pneg %p57
      %p234 = pneg %p54
      %s235 = smul.u32 12, %s22
      %p236 = scmp.lt.s32.totalorder %s235, 11
      %s237 = scalar_select %p236, %s235, 11
      %p238 = scmp.lt.s32.totalorder %s21, 0
      %s239 = scalar_select %p238, %s21, 0
      %s240 = sadd.s32 %s239, %s237
      %s241 = smul.addr %s240, 4
      %s242 = scalar_lea.vmem %s1, %s241
      %p243 = pneg %p85
      %p244 = pneg %p82
      %p245 = scmp.lt.s32.totalorder %s21, 0
      %s246 = scalar_select %p245, %s21, 0
      %s247 = scalar_lea.vmem %s2, %s246
      %p248 = pneg %p111
      %p249 = pneg %p108
      %p250 = scmp.lt.s32.totalorder %s21, 0
      %s251 = scalar_select %p250, %s21, 0
      %s252 = smul.addr %s251, 8
      %s253 = scalar_lea.vmem %s3, %s252
      %p254 = pneg %p137
      %p255 = pneg %p134
      %p256 = pneg %p165
      %p257 = pneg %p162
      %p258 = scmp.lt.s32.totalorder %s20, 1
      %s259 = scalar_select %p258, %s20, 1
      %p260 = scmp.lt.s32.totalorder %s21, 0
      %s261 = scalar_select %p260, %s21, 0
      %s262 = sadd.s32 %s261, %s259
      %s263 = smul.addr %s262, 4
      %s264 = scalar_lea.vmem %s4, %s263
      %p265 = scmp.lt.s32.totalorder %s20, 1
      %s266 = scalar_select %p265, %s20, 1
      %p267 = scmp.lt.s32.totalorder %s22, 0
      %s268 = scalar_select %p267, %s22, 0
      %s269 = sadd.s32 %s268, %s266
      %s270 = smul.addr %s269, 4
      %s271 = scalar_lea.vmem %s0, %s270
      %s272 = smul.u32 12, %s22
      %p273 = scmp.lt.s32.totalorder %s272, 11
      %s274 = scalar_select %p273, %s272, 11
      %p275 = scmp.lt.s32.totalorder %s21, 0
      %s276 = scalar_select %p275, %s21, 0
      %s277 = sadd.s32 %s276, %s274
      %s278 = smul.addr %s277, 4
      %s279 = scalar_lea.vmem %s1, %s278
      %s280 = smul.u32 12, %s22
      %p281 = scmp.lt.s32.totalorder %s21, 0
      %s282 = scalar_select %p281, %s21, 0
      %s283 = scalar_lea.vmem %s2, %s282
      %p284 = scmp.lt.s32.totalorder %s21, 0
      %s285 = scalar_select %p284, %s21, 0
      %s286 = smul.addr %s285, 8
      %s287 = scalar_lea.vmem %s3, %s286
      %p288 = scmp.lt.s32.totalorder %s20, 1
      %s289 = scalar_select %p288, %s20, 1
      %p290 = scmp.lt.s32.totalorder %s21, 0
      %s291 = scalar_select %p290, %s21, 0
      %s292 = sadd.s32 %s291, %s289
      %s293 = smul.addr %s292, 4
      %s294 = scalar_lea.vmem %s4, %s293
      %p296 = scmp.eq.s32.totalorder %s22, 0
      // Predicated region
      $region37: #{audio_encoder_forward.18} parent=35 // pred_check
        %p297 = pneg %p296
      $region38: #{audio_encoder_forward.18} parent=35 // pred_check_branch
        %299 = sbr.rel (%p297) target = $region40
      $region39: #{audio_encoder_forward.18} parent=35 // pred_region
        %vm300 = vcmask 261120
        %301 = vst.msk [vmem:[#allocation2] sm:$0xff] %vm300, 0.0
      $region40: #{audio_encoder_forward.18} parent=35 // pred_fallthru
        _
      %v302 = vld [vmem:[#allocation2] sm:$0xff]
      %v303 = vld [vmem:[%s271] sm:$0xf]
      %v304 = vld [vmem:[%s279] sm:$0xf]
      %v305 = vld [vmem:[%s279 + $0x4] sm:$0xf]
      %v306 = vld [vmem:[%s279 + $0x8] sm:$0xf]
      %v307 = vld [vmem:[%s279 + $0xc] sm:$0xf]
      %v308 = vld [vmem:[%s279 + $0x10] sm:$0xf]
      %v309 = vld [vmem:[%s279 + $0x14] sm:$0xf]
      %v310 = vld [vmem:[%s279 + $0x18] sm:$0xf]
      %v311 = vld [vmem:[%s279 + $0x1c] sm:$0xf]
      %v312 = vld [vmem:[%s279 + $0x20] sm:$0xf]
      %v313 = vld [vmem:[%s279 + $0x24] sm:$0xf]
      %v314 = vld [vmem:[%s279 + $0x28] sm:$0xf]
      %v315 = vld [vmem:[%s279 + $0x2c] sm:$0xf]
      %v328 = vunpack.c.l.b16 %v304
      %v329 = vunpack.c.l.b16 %v305
      %v330 = vunpack.c.l.b16 %v306
      %v331 = vunpack.c.l.b16 %v307
      %v332 = vunpack.c.l.b16 %v308
      %v333 = vunpack.c.l.b16 %v309
      %v334 = vunpack.c.l.b16 %v310
      %v335 = vunpack.c.l.b16 %v311
      %v336 = vunpack.c.l.b16 %v312
      %v337 = vunpack.c.l.b16 %v313
      %v338 = vunpack.c.l.b16 %v314
      %v339 = vunpack.c.l.b16 %v315
      %v340 = vpack.c.b16 %v329, %v328
      %v341 = vpack.c.b16 %v331, %v330
      %v342 = vpack.c.b16 %v333, %v332
      %v343 = vpack.c.b16 %v335, %v334
      %v344 = vpack.c.b16 %v337, %v336
      %v345 = vpack.c.b16 %v339, %v338
      %vm352 = vcmask 785408
      %v354 = vsel %vm352, %v303, 0
      %356 = vmatprep.subr.bf16.mxu0 0
      %357 = vmatpush1.bf16.msra.mxu0 %v340
      %358 = vmatprep.subr.bf16.mxu0 0
      %359 = vmatpush1.bf16.msra.mxu0 %v341
      %360 = vmatprep.subr.bf16.mxu0 0
      %361 = vmatpush1.bf16.msra.mxu0 %v342
      %362 = vmatprep.subr.bf16.mxu0 0
      %363 = vmatpush1.bf16.msra.mxu0 %v343
      %364 = vmatprep.subr.bf16.mxu0 0
      %365 = vmatpush1.bf16.msra.mxu0 %v344
      %366 = vmatprep.subr.bf16.mxu0 0
      %367 = vmatpush1.bf16.msra.mxu0 %v345
      %368 = vmatprep.subr.bf16.mxu0 0
      %369 = vmatpush1.bf16.msra.mxu0 0
      %370 = vmatprep.subr.bf16.mxu0 0
      %371 = vmatpush1.bf16.msra.mxu0 0
      %372 = vmatprep.subr.bf16.mxu0 0
      %373 = vmatpush1.bf16.msra.mxu0 0
      %374 = vmatprep.subr.bf16.mxu0 0
      %375 = vmatpush1.bf16.msra.mxu0 0
      %376 = vmatprep.subr.bf16.mxu0 0
      %377 = vmatpush1.bf16.msra.mxu0 0
      %378 = vmatprep.subr.bf16.mxu0 0
      %379 = vmatpush1.bf16.msra.mxu0 0
      %380 = vmatprep.subr.bf16.mxu0 0
      %381 = vmatpush1.bf16.msra.mxu0 0
      %382 = vmatprep.subr.bf16.mxu0 0
      %383 = vmatpush1.bf16.msra.mxu0 0
      %384 = vmatprep.subr.bf16.mxu0 0
      %385 = vmatpush1.bf16.msra.mxu0 0
      %386 = vmatprep.subr.bf16.mxu0 0
      %387 = vmatpush1.bf16.msra.mxu0 0
      %388 = vmatprep.mubr.bf16.mxu0 0
      %389 = vmatmul.mubr.bf16.gmra.mrb[0].mxu0 %v354
      %v390 = vpop.f32.mrb[0].mxu0
      %v391 = vadd.f32 0.0, %v390
      %v392 = vpop.f32.mrb[0].mxu0
      %v393 = vpop.f32.mrb[0].mxu0
      %v394 = vpop.f32.mrb[0].mxu0
      %395 = vdwg.mxu0
      %v396 = vadd.f32 %v302, %v391
      %vm397 = vcmask 261120
      %398 = vst.msk [vmem:[#allocation2] sm:$0xff] %vm397, %v396
      // Predicated region
      $region41: #{audio_encoder_forward.18} parent=35 // pred_check
        %p399 = pneg %p296
      $region42: #{audio_encoder_forward.18} parent=35 // pred_check_branch
        %401 = sbr.rel (%p399) target = $region44
      $region43: #{audio_encoder_forward.18} parent=35 // pred_region
        %v402 = vld [vmem:[#allocation2] sm:$0xff]
        %v403 = vld [vmem:[%s283] sm:$0x1]
        %v405 = vlaneseq
        %v406 = vshrl.u32 %v405, 7
        %v407 = vsub.s32 0, %v406
        %v408 = vrot.slane %v403, %v407
        %v410 = vadd.f32 %v402, %v408
        %v411 = vmul.f32 %v410, 0.5
        %v412 = vmul.f32 %v410, 0.70710677
        %v413 = verf.f32.pop %v412
        %v414 = vadd.f32 %v413, 1.0
        %v415 = vmul.f32 %v411, %v414
        %v416 = vld [vmem:[%s287] sm:$0xff]
        %v417 = vadd.f32 %v415, %v416
        %v418 = vpack.c.bf16 %v417, %v417
        %vm419 = vcmask 257024
        %420 = vst.msk [vmem:[%s294] sm:$0xf] %vm419, %v418
      $region44: #{audio_encoder_forward.18} parent=35 // pred_fallthru
        _
      %p421 = scmp.lt.s32.totalorder %s20, 1
      %s422 = scalar_select %p421, %s20, 1
      %p423 = scmp.lt.s32.totalorder %s21, 0
      %s424 = scalar_select %p423, %s21, 0
      %s425 = sadd.s32 %s424, %s422
      %s426 = smul.addr %s425, 4
      %s427 = scalar_lea.vmem %s4, %s426
      // Predicated region
      $region45: #{audio_encoder_forward.18} parent=35 // pred_check
        %p428 = pneg %p162
      $region46: #{audio_encoder_forward.18} parent=35 // pred_check_branch
        %430 = sbr.rel (%p428) target = $region48
      $region47: #{audio_encoder_forward.18} parent=35 // pred_region
        _
      $region48: #{audio_encoder_forward.18} parent=35 // pred_fallthru
        _
    $region36: #{audio_encoder_forward.18} parent=5 // pred_fallthru
      _
    %p431 = scmp.le.s32.totalorder 2, %s10
    // Predicated region
    $region49: #{audio_encoder_forward.18} parent=5 // pred_check
      %p432 = pneg %p431
    $region50: #{audio_encoder_forward.18} parent=5 // pred_check_branch
      %434 = sbr.rel (%p432) target = $region52
    $region51: #{audio_encoder_forward.18} parent=5 // pred_region
      %s435 = ssub.s32 %s10, 2
      // Predicated region
      $region53: #{audio_encoder_forward.18} parent=51 // pred_check
        %p436 = pneg %p168
      $region54: #{audio_encoder_forward.18} parent=51 // pred_check_branch
        %438 = sbr.rel (%p436) target = $region56
      $region55: #{audio_encoder_forward.18} parent=51 // pred_region
        %p439 = scmp.lt.s32.totalorder %s23, 1
        %s440 = scalar_select %p439, %s23, 1
        %p441 = scmp.lt.s32.totalorder %s24, 0
        %s442 = scalar_select %p441, %s24, 0
        %s443 = sadd.s32 %s442, %s440
        %s444 = smul.addr %s443, 4
        %s445 = scalar_lea.vmem %s4, %s444
      $region56: #{audio_encoder_forward.18} parent=51 // pred_fallthru
        _
    $region52: #{audio_encoder_forward.18} parent=5 // pred_fallthru
      _
  $region6: #{audio_encoder_forward.18} parent=0 // loop_footer
    %s14 = sadd.s32 1, %s10
  $region7: #{audio_encoder_forward.18} parent=0 // loop_footer_branch
    %9 = sbr.rel target = $region3
  $region8: #{audio_encoder_forward.18} parent=0 // loop_exit
    _

// kernel: audio_encoder_forward.20
$region0: #{audio_encoder_forward.20}
  #allocation0 [shape = 'u32[]', space=smem, size = 0x4, offset = 0x4, fixed_abs, tag = 'smem constant byte address 0x4 - core index']
  #allocation1 [shape = 'u32[144,128]{1,0:T(1,128)}', space=vmem, size = 0x12000, scoped, tag = 'internal scratch']
  #allocation2 [shape = 'f32[16,96]{1,0:T(8,128)}', space=vmem, size = 0x2000, scoped, tag = 'scratch operand']
  %s0 = inlined_call_operand.vmem [shape: bf16[16,32], index: 0, kind: input, shape index: {}]
  %s1 = inlined_call_operand.vmem [shape: bf16[32,96], index: 1, kind: input, shape index: {}]
  %s2 = inlined_call_operand.vmem [shape: f32[1,96], index: 2, kind: input, shape index: {}]
  %s3 = inlined_call_operand.vmem [shape: bf16[16,96], index: 3, kind: output, shape index: {}]
  %s4 = sld [smem:[#allocation0]]
  $region30: #{audio_encoder_forward.20} parent=0
    _
  %s6 = ssub.s32 1, %s4
  %s7 = scalar_select 0, %s6, %s4
  // Predicated region
  $region2: #{audio_encoder_forward.20} parent=0 // pred_check
    _
  $region3: #{audio_encoder_forward.20} parent=0 // pred_check_branch
    %9 = sbr.rel (0) target = $region5
  $region4: #{audio_encoder_forward.20} parent=0 // pred_region
    _
  $region5: #{audio_encoder_forward.20} parent=0 // pred_fallthru
    _
  // Predicated region
  $region6: #{audio_encoder_forward.20} parent=0 // pred_check
    _
  $region7: #{audio_encoder_forward.20} parent=0 // pred_check_branch
    %11 = sbr.rel (0) target = $region9
  $region8: #{audio_encoder_forward.20} parent=0 // pred_region
    _
  $region9: #{audio_encoder_forward.20} parent=0 // pred_fallthru
    _
  // Predicated region
  $region10: #{audio_encoder_forward.20} parent=0 // pred_check
    _
  $region11: #{audio_encoder_forward.20} parent=0 // pred_check_branch
    %13 = sbr.rel (0) target = $region13
  $region12: #{audio_encoder_forward.20} parent=0 // pred_region
    _
  $region13: #{audio_encoder_forward.20} parent=0 // pred_fallthru
    _
  %p15 = scmp.eq.s32.totalorder 0, 0
  // Predicated region
  $region14: #{audio_encoder_forward.20} parent=0 // pred_check
    %p16 = pneg %p15
  $region15: #{audio_encoder_forward.20} parent=0 // pred_check_branch
    %18 = sbr.rel (%p16) target = $region17
  $region16: #{audio_encoder_forward.20} parent=0 // pred_region
    %vm19 = vcmask 785408
    %20 = vst.msk [vmem:[#allocation2] sm:$0xff] %vm19, 0.0
    %21 = vst.msk [vmem:[#allocation2 + $0x8] sm:$0xff] %vm19, 0.0
  $region17: #{audio_encoder_forward.20} parent=0 // pred_fallthru
    _
  %v22 = vld [vmem:[#allocation2] sm:$0xff]
  %v23 = vld [vmem:[#allocation2 + $0x8] sm:$0xff]
  %v24 = vld [vmem:[%s0] sm:$0xf]
  %v25 = vld [vmem:[%s0 + $0x4] sm:$0xf]
  %v26 = vld [vmem:[%s1] sm:$0xf]
  %v27 = vld [vmem:[%s1 + $0x4] sm:$0xf]
  %v28 = vld [vmem:[%s1 + $0x8] sm:$0xf]
  %v29 = vld [vmem:[%s1 + $0xc] sm:$0xf]
  %v32 = vunpack.c.l.b16 %v24
  %v33 = vunpack.c.l.b16 %v25
  %v34 = vpack.c.b16 %v33, %v32
  %v39 = vunpack.c.l.b16 %v26
  %v40 = vunpack.c.l.b16 %v27
  %v41 = vunpack.c.l.b16 %v28
  %v42 = vunpack.c.l.b16 %v29
  %v43 = vpack.c.b16 %v40, %v39
  %v44 = vpack.c.b16 %v42, %v41
  %vm47 = vcmask 261120
  %v49 = vsel %vm47, %v34, 0
  %51 = vmatprep.subr.bf16.mxu0 0
  %52 = vmatpush1.bf16.msra.mxu0 %v43
  %53 = vmatprep.subr.bf16.mxu0 0
  %54 = vmatpush1.bf16.msra.mxu0 %v44
  %55 = vmatprep.subr.bf16.mxu0 0
  %56 = vmatpush1.bf16.msra.mxu0 0
  %57 = vmatprep.subr.bf16.mxu0 0
  %58 = vmatpush1.bf16.msra.mxu0 0
  %59 = vmatprep.subr.bf16.mxu0 0
  %60 = vmatpush1.bf16.msra.mxu0 0
  %61 = vmatprep.subr.bf16.mxu0 0
  %62 = vmatpush1.bf16.msra.mxu0 0
  %63 = vmatprep.subr.bf16.mxu0 0
  %64 = vmatpush1.bf16.msra.mxu0 0
  %65 = vmatprep.subr.bf16.mxu0 0
  %66 = vmatpush1.bf16.msra.mxu0 0
  %67 = vmatprep.subr.bf16.mxu0 0
  %68 = vmatpush1.bf16.msra.mxu0 0
  %69 = vmatprep.subr.bf16.mxu0 0
  %70 = vmatpush1.bf16.msra.mxu0 0
  %71 = vmatprep.subr.bf16.mxu0 0
  %72 = vmatpush1.bf16.msra.mxu0 0
  %73 = vmatprep.subr.bf16.mxu0 0
  %74 = vmatpush1.bf16.msra.mxu0 0
  %75 = vmatprep.subr.bf16.mxu0 0
  %76 = vmatpush1.bf16.msra.mxu0 0
  %77 = vmatprep.subr.bf16.mxu0 0
  %78 = vmatpush1.bf16.msra.mxu0 0
  %79 = vmatprep.subr.bf16.mxu0 0
  %80 = vmatpush1.bf16.msra.mxu0 0
  %81 = vmatprep.subr.bf16.mxu0 0
  %82 = vmatpush1.bf16.msra.mxu0 0
  %83 = vmatprep.mubr.bf16.mxu0 0
  %84 = vmatmul.mubr.bf16.gmra.mrb[0].mxu0 %v49
  %v85 = vpop.f32.mrb[0].mxu0
  %v86 = vadd.f32 0.0, %v85
  %v87 = vpop.f32.mrb[0].mxu0
  %v88 = vpop.f32.mrb[0].mxu0
  %v89 = vadd.f32 0.0, %v88
  %v90 = vpop.f32.mrb[0].mxu0
  %91 = vdwg.mxu0
  %v92 = vadd.f32 %v22, %v86
  %v93 = vadd.f32 %v23, %v89
  %vm94 = vcmask 785408
  %95 = vst.msk [vmem:[#allocation2] sm:$0xff] %vm94, %v92
  %96 = vst.msk [vmem:[#allocation2 + $0x8] sm:$0xff] %vm94, %v93
  // Predicated region
  $region18: #{audio_encoder_forward.20} parent=0 // pred_check
    %p97 = pneg %p15
  $region19: #{audio_encoder_forward.20} parent=0 // pred_check_branch
    %99 = sbr.rel (%p97) target = $region21
  $region20: #{audio_encoder_forward.20} parent=0 // pred_region
    %v100 = vld [vmem:[#allocation2] sm:$0xff]
    %v101 = vld [vmem:[#allocation2 + $0x8] sm:$0xff]
    %v102 = vld [vmem:[%s2] sm:$0x1]
    %v104 = vlaneseq
    %v105 = vshrl.u32 %v104, 7
    %v106 = vsub.s32 0, %v105
    %v107 = vrot.slane %v102, %v106
    %v109 = vadd.f32 %v100, %v107
    %v110 = vadd.f32 %v101, %v107
    %v111 = vpack.c.bf16 %v110, %v109
    %v113 = vunpack.c.l.b16 %v111
    %v114 = vunpack.c.h.b16 %v111
    %v115 = vpack.c.b16 %v113, %v113
    %v116 = vpack.c.b16 %v114, %v114
    %vm119 = vcmask 781312
    %120 = vst.msk [vmem:[%s3] sm:$0xf] %vm119, %v115
    %121 = vst.msk [vmem:[%s3 + $0x4] sm:$0xf] %vm119, %v116
  $region21: #{audio_encoder_forward.20} parent=0 // pred_fallthru
    _
  // Predicated region
  $region22: #{audio_encoder_forward.20} parent=0 // pred_check
    _
  $region23: #{audio_encoder_forward.20} parent=0 // pred_check_branch
    %123 = sbr.rel (0) target = $region25
  $region24: #{audio_encoder_forward.20} parent=0 // pred_region
    _
  $region25: #{audio_encoder_forward.20} parent=0 // pred_fallthru
    _
  // Predicated region
  $region26: #{audio_encoder_forward.20} parent=0 // pred_check
    _
  $region27: #{audio_encoder_forward.20} parent=0 // pred_check_branch
    %125 = sbr.rel (0) target = $region29
  $region28: #{audio_encoder_forward.20} parent=0 // pred_region
    _
  $region29: #{audio_encoder_forward.20} parent=0 // pred_fallthru
    _

// kernel: audio_encoder_forward.24
$region0: #{audio_encoder_forward.24}
  #allocation0 [shape = 'u32[]', space=smem, size = 0x4, offset = 0x4, fixed_abs, tag = 'smem constant byte address 0x4 - core index']
  #allocation1 [shape = 'u32[144,128]{1,0:T(1,128)}', space=vmem, size = 0x12000, scoped, tag = 'internal scratch']
  #allocation2 [shape = 'f32[16,128]{1,0:T(8,128)}', space=vmem, size = 0x2000, scoped, tag = 'scratch operand']
  %s0 = inlined_call_operand.vmem [shape: bf16[16,32], index: 0, kind: input, shape index: {}]
  %s1 = inlined_call_operand.vmem [shape: bf16[32,128], index: 1, kind: input, shape index: {}]
  %s2 = inlined_call_operand.vmem [shape: f32[1,128], index: 2, kind: input, shape index: {}]
  %s3 = inlined_call_operand.vmem [shape: bf16[16,128], index: 3, kind: output, shape index: {}]
  %s4 = sld [smem:[#allocation0]]
  $region30: #{audio_encoder_forward.24} parent=0
    _
  %s6 = ssub.s32 1, %s4
  %s7 = scalar_select 0, %s6, %s4
  // Predicated region
  $region2: #{audio_encoder_forward.24} parent=0 // pred_check
    _
  $region3: #{audio_encoder_forward.24} parent=0 // pred_check_branch
    %9 = sbr.rel (0) target = $region5
  $region4: #{audio_encoder_forward.24} parent=0 // pred_region
    _
  $region5: #{audio_encoder_forward.24} parent=0 // pred_fallthru
    _
  // Predicated region
  $region6: #{audio_encoder_forward.24} parent=0 // pred_check
    _
  $region7: #{audio_encoder_forward.24} parent=0 // pred_check_branch
    %11 = sbr.rel (0) target = $region9
  $region8: #{audio_encoder_forward.24} parent=0 // pred_region
    _
  $region9: #{audio_encoder_forward.24} parent=0 // pred_fallthru
    _
  // Predicated region
  $region10: #{audio_encoder_forward.24} parent=0 // pred_check
    _
  $region11: #{audio_encoder_forward.24} parent=0 // pred_check_branch
    %13 = sbr.rel (0) target = $region13
  $region12: #{audio_encoder_forward.24} parent=0 // pred_region
    _
  $region13: #{audio_encoder_forward.24} parent=0 // pred_fallthru
    _
  %p15 = scmp.eq.s32.totalorder 0, 0
  // Predicated region
  $region14: #{audio_encoder_forward.24} parent=0 // pred_check
    %p16 = pneg %p15
  $region15: #{audio_encoder_forward.24} parent=0 // pred_check_branch
    %18 = sbr.rel (%p16) target = $region17
  $region16: #{audio_encoder_forward.24} parent=0 // pred_region
    %19 = vst [vmem:[#allocation2] sm:$0xff] 0.0
    %20 = vst [vmem:[#allocation2 + $0x8] sm:$0xff] 0.0
  $region17: #{audio_encoder_forward.24} parent=0 // pred_fallthru
    _
  %v21 = vld [vmem:[#allocation2] sm:$0xff]
  %v22 = vld [vmem:[#allocation2 + $0x8] sm:$0xff]
  %v23 = vld [vmem:[%s0] sm:$0xf]
  %v24 = vld [vmem:[%s0 + $0x4] sm:$0xf]
  %v25 = vld [vmem:[%s1] sm:$0xf]
  %v26 = vld [vmem:[%s1 + $0x4] sm:$0xf]
  %v27 = vld [vmem:[%s1 + $0x8] sm:$0xf]
  %v28 = vld [vmem:[%s1 + $0xc] sm:$0xf]
  %v31 = vunpack.c.l.b16 %v23
  %v32 = vunpack.c.l.b16 %v24
  %v33 = vpack.c.b16 %v32, %v31
  %v38 = vunpack.c.l.b16 %v25
  %v39 = vunpack.c.l.b16 %v26
  %v40 = vunpack.c.l.b16 %v27
  %v41 = vunpack.c.l.b16 %v28
  %v42 = vpack.c.b16 %v39, %v38
  %v43 = vpack.c.b16 %v41, %v40
  %vm46 = vcmask 261120
  %v48 = vsel %vm46, %v33, 0
  %50 = vmatprep.subr.bf16.mxu0 0
  %51 = vmatpush1.bf16.msra.mxu0 %v42
  %52 = vmatprep.subr.bf16.mxu0 0
  %53 = vmatpush1.bf16.msra.mxu0 %v43
  %54 = vmatprep.subr.bf16.mxu0 0
  %55 = vmatpush1.bf16.msra.mxu0 0
  %56 = vmatprep.subr.bf16.mxu0 0
  %57 = vmatpush1.bf16.msra.mxu0 0
  %58 = vmatprep.subr.bf16.mxu0 0
  %59 = vmatpush1.bf16.msra.mxu0 0
  %60 = vmatprep.subr.bf16.mxu0 0
  %61 = vmatpush1.bf16.msra.mxu0 0
  %62 = vmatprep.subr.bf16.mxu0 0
  %63 = vmatpush1.bf16.msra.mxu0 0
  %64 = vmatprep.subr.bf16.mxu0 0
  %65 = vmatpush1.bf16.msra.mxu0 0
  %66 = vmatprep.subr.bf16.mxu0 0
  %67 = vmatpush1.bf16.msra.mxu0 0
  %68 = vmatprep.subr.bf16.mxu0 0
  %69 = vmatpush1.bf16.msra.mxu0 0
  %70 = vmatprep.subr.bf16.mxu0 0
  %71 = vmatpush1.bf16.msra.mxu0 0
  %72 = vmatprep.subr.bf16.mxu0 0
  %73 = vmatpush1.bf16.msra.mxu0 0
  %74 = vmatprep.subr.bf16.mxu0 0
  %75 = vmatpush1.bf16.msra.mxu0 0
  %76 = vmatprep.subr.bf16.mxu0 0
  %77 = vmatpush1.bf16.msra.mxu0 0
  %78 = vmatprep.subr.bf16.mxu0 0
  %79 = vmatpush1.bf16.msra.mxu0 0
  %80 = vmatprep.subr.bf16.mxu0 0
  %81 = vmatpush1.bf16.msra.mxu0 0
  %82 = vmatprep.mubr.bf16.mxu0 0
  %83 = vmatmul.mubr.bf16.gmra.mrb[0].mxu0 %v48
  %v84 = vpop.f32.mrb[0].mxu0
  %v85 = vadd.f32 0.0, %v84
  %v86 = vpop.f32.mrb[0].mxu0
  %v87 = vpop.f32.mrb[0].mxu0
  %v88 = vadd.f32 0.0, %v87
  %v89 = vpop.f32.mrb[0].mxu0
  %90 = vdwg.mxu0
  %v91 = vadd.f32 %v21, %v85
  %v92 = vadd.f32 %v22, %v88
  %93 = vst [vmem:[#allocation2] sm:$0xff] %v91
  %94 = vst [vmem:[#allocation2 + $0x8] sm:$0xff] %v92
  // Predicated region
  $region18: #{audio_encoder_forward.24} parent=0 // pred_check
    %p95 = pneg %p15
  $region19: #{audio_encoder_forward.24} parent=0 // pred_check_branch
    %97 = sbr.rel (%p95) target = $region21
  $region20: #{audio_encoder_forward.24} parent=0 // pred_region
    %v98 = vld [vmem:[#allocation2] sm:$0xff]
    %v99 = vld [vmem:[#allocation2 + $0x8] sm:$0xff]
    %v100 = vld [vmem:[%s2] sm:$0x1]
    %v102 = vlaneseq
    %v103 = vshrl.u32 %v102, 7
    %v104 = vsub.s32 0, %v103
    %v105 = vrot.slane %v100, %v104
    %v107 = vadd.f32 %v98, %v105
    %v108 = vadd.f32 %v99, %v105
    %v109 = vmul.f32 %v107, 0.5
    %v110 = vmul.f32 %v108, 0.5
    %v111 = vmul.f32 %v107, 0.70710677
    %v112 = vmul.f32 %v108, 0.70710677
    %v113 = verf.f32.pop %v111
    %v114 = verf.f32.pop %v112
    %v115 = vadd.f32 %v113, 1.0
    %v116 = vadd.f32 %v114, 1.0
    %v117 = vmul.f32 %v109, %v115
    %v118 = vmul.f32 %v110, %v116
    %v119 = vpack.c.bf16 %v118, %v117
    %v121 = vunpack.c.l.b16 %v119
    %v122 = vunpack.c.h.b16 %v119
    %v123 = vpack.c.b16 %v121, %v121
    %v124 = vpack.c.b16 %v122, %v122
    %127 = vst [vmem:[%s3] sm:$0xf] %v123
    %128 = vst [vmem:[%s3 + $0x4] sm:$0xf] %v124
  $region21: #{audio_encoder_forward.24} parent=0 // pred_fallthru
    _
  // Predicated region
  $region22: #{audio_encoder_forward.24} parent=0 // pred_check
    _
  $region23: #{audio_encoder_forward.24} parent=0 // pred_check_branch
    %130 = sbr.rel (0) target = $region25
  $region24: #{audio_encoder_forward.24} parent=0 // pred_region
    _
  $region25: #{audio_encoder_forward.24} parent=0 // pred_fallthru
    _
  // Predicated region
  $region26: #{audio_encoder_forward.24} parent=0 // pred_check
    _
  $region27: #{audio_encoder_forward.24} parent=0 // pred_check_branch
    %132 = sbr.rel (0) target = $region29
  $region28: #{audio_encoder_forward.24} parent=0 // pred_region
    _
  $region29: #{audio_encoder_forward.24} parent=0 // pred_fallthru
    _

// kernel: audio_encoder_forward.22
$region0: #{audio_encoder_forward.22}
  #allocation0 [shape = 'u32[]', space=smem, size = 0x4, offset = 0x4, fixed_abs, tag = 'smem constant byte address 0x4 - core index']
  #allocation1 [shape = 'u32[144,128]{1,0:T(1,128)}', space=vmem, size = 0x12000, scoped, tag = 'internal scratch']
  #allocation2 [shape = 'f32[16,32]{1,0:T(8,128)}', space=vmem, size = 0x2000, scoped, tag = 'scratch operand']
  %s0 = inlined_call_operand.vmem [shape: bf16[16,32], index: 0, kind: input, shape index: {}]
  %s1 = inlined_call_operand.vmem [shape: bf16[32,32], index: 1, kind: input, shape index: {}]
  %s2 = inlined_call_operand.vmem [shape: f32[1,32], index: 2, kind: input, shape index: {}]
  %s3 = inlined_call_operand.vmem [shape: bf16[16,32], index: 3, kind: input, shape index: {}]
  %s4 = inlined_call_operand.vmem [shape: bf16[16,32], index: 4, kind: output, shape index: {}]
  %s5 = sld [smem:[#allocation0]]
  $region34: #{audio_encoder_forward.22} parent=0
    _
  %s7 = ssub.s32 1, %s5
  %s8 = scalar_select 0, %s7, %s5
  // Predicated region
  $region2: #{audio_encoder_forward.22} parent=0 // pred_check
    _
  $region3: #{audio_encoder_forward.22} parent=0 // pred_check_branch
    %10 = sbr.rel (0) target = $region5
  $region4: #{audio_encoder_forward.22} parent=0 // pred_region
    _
  $region5: #{audio_encoder_forward.22} parent=0 // pred_fallthru
    _
  // Predicated region
  $region6: #{audio_encoder_forward.22} parent=0 // pred_check
    _
  $region7: #{audio_encoder_forward.22} parent=0 // pred_check_branch
    %12 = sbr.rel (0) target = $region9
  $region8: #{audio_encoder_forward.22} parent=0 // pred_region
    _
  $region9: #{audio_encoder_forward.22} parent=0 // pred_fallthru
    _
  // Predicated region
  $region10: #{audio_encoder_forward.22} parent=0 // pred_check
    _
  $region11: #{audio_encoder_forward.22} parent=0 // pred_check_branch
    %14 = sbr.rel (0) target = $region13
  $region12: #{audio_encoder_forward.22} parent=0 // pred_region
    _
  $region13: #{audio_encoder_forward.22} parent=0 // pred_fallthru
    _
  // Predicated region
  $region14: #{audio_encoder_forward.22} parent=0 // pred_check
    _
  $region15: #{audio_encoder_forward.22} parent=0 // pred_check_branch
    %16 = sbr.rel (0) target = $region17
  $region16: #{audio_encoder_forward.22} parent=0 // pred_region
    _
  $region17: #{audio_encoder_forward.22} parent=0 // pred_fallthru
    _
  %p18 = scmp.eq.s32.totalorder 0, 0
  // Predicated region
  $region18: #{audio_encoder_forward.22} parent=0 // pred_check
    %p19 = pneg %p18
  $region19: #{audio_encoder_forward.22} parent=0 // pred_check_branch
    %21 = sbr.rel (%p19) target = $region21
  $region20: #{audio_encoder_forward.22} parent=0 // pred_region
    %vm22 = vcmask 261120
    %23 = vst.msk [vmem:[#allocation2] sm:$0xff] %vm22, 0.0
    %24 = vst.msk [vmem:[#allocation2 + $0x8] sm:$0xff] %vm22, 0.0
  $region21: #{audio_encoder_forward.22} parent=0 // pred_fallthru
    _
  %v25 = vld [vmem:[#allocation2] sm:$0xff]
  %v26 = vld [vmem:[#allocation2 + $0x8] sm:$0xff]
  %v27 = vld [vmem:[%s0] sm:$0xf]
  %v28 = vld [vmem:[%s0 + $0x4] sm:$0xf]
  %v29 = vld [vmem:[%s1] sm:$0xf]
  %v30 = vld [vmem:[%s1 + $0x4] sm:$0xf]
  %v31 = vld [vmem:[%s1 + $0x8] sm:$0xf]
  %v32 = vld [vmem:[%s1 + $0xc] sm:$0xf]
  %v35 = vunpack.c.l.b16 %v27
  %v36 = vunpack.c.l.b16 %v28
  %v37 = vpack.c.b16 %v36, %v35
  %v42 = vunpack.c.l.b16 %v29
  %v43 = vunpack.c.l.b16 %v30
  %v44 = vunpack.c.l.b16 %v31
  %v45 = vunpack.c.l.b16 %v32
  %v46 = vpack.c.b16 %v43, %v42
  %v47 = vpack.c.b16 %v45, %v44
  %vm50 = vcmask 261120
  %v52 = vsel %vm50, %v37, 0
  %54 = vmatprep.subr.bf16.mxu0 0
  %55 = vmatpush1.bf16.msra.mxu0 %v46
  %56 = vmatprep.subr.bf16.mxu0 0
  %57 = vmatpush1.bf16.msra.mxu0 %v47
  %58 = vmatprep.subr.bf16.mxu0 0
  %59 = vmatpush1.bf16.msra.mxu0 0
  %60 = vmatprep.subr.bf16.mxu0 0
  %61 = vmatpush1.bf16.msra.mxu0 0
  %62 = vmatprep.subr.bf16.mxu0 0
  %63 = vmatpush1.bf16.msra.mxu0 0
  %64 = vmatprep.subr.bf16.mxu0 0
  %65 = vmatpush1.bf16.msra.mxu0 0
  %66 = vmatprep.subr.bf16.mxu0 0
  %67 = vmatpush1.bf16.msra.mxu0 0
  %68 = vmatprep.subr.bf16.mxu0 0
  %69 = vmatpush1.bf16.msra.mxu0 0
  %70 = vmatprep.subr.bf16.mxu0 0
  %71 = vmatpush1.bf16.msra.mxu0 0
  %72 = vmatprep.subr.bf16.mxu0 0
  %73 = vmatpush1.bf16.msra.mxu0 0
  %74 = vmatprep.subr.bf16.mxu0 0
  %75 = vmatpush1.bf16.msra.mxu0 0
  %76 = vmatprep.subr.bf16.mxu0 0
  %77 = vmatpush1.bf16.msra.mxu0 0
  %78 = vmatprep.subr.bf16.mxu0 0
  %79 = vmatpush1.bf16.msra.mxu0 0
  %80 = vmatprep.subr.bf16.mxu0 0
  %81 = vmatpush1.bf16.msra.mxu0 0
  %82 = vmatprep.subr.bf16.mxu0 0
  %83 = vmatpush1.bf16.msra.mxu0 0
  %84 = vmatprep.subr.bf16.mxu0 0
  %85 = vmatpush1.bf16.msra.mxu0 0
  %86 = vmatprep.mubr.bf16.mxu0 0
  %87 = vmatmul.mubr.bf16.gmra.mrb[0].mxu0 %v52
  %v88 = vpop.f32.mrb[0].mxu0
  %v89 = vadd.f32 0.0, %v88
  %v90 = vpop.f32.mrb[0].mxu0
  %v91 = vpop.f32.mrb[0].mxu0
  %v92 = vadd.f32 0.0, %v91
  %v93 = vpop.f32.mrb[0].mxu0
  %94 = vdwg.mxu0
  %v95 = vadd.f32 %v25, %v89
  %v96 = vadd.f32 %v26, %v92
  %97 = vst.msk [vmem:[#allocation2] sm:$0xff] %vm50, %v95
  %98 = vst.msk [vmem:[#allocation2 + $0x8] sm:$0xff] %vm50, %v96
  // Predicated region
  $region22: #{audio_encoder_forward.22} parent=0 // pred_check
    %p99 = pneg %p18
  $region23: #{audio_encoder_forward.22} parent=0 // pred_check_branch
    %101 = sbr.rel (%p99) target = $region25
  $region24: #{audio_encoder_forward.22} parent=0 // pred_region
    %v102 = vld [vmem:[#allocation2] sm:$0xff]
    %v103 = vld [vmem:[#allocation2 + $0x8] sm:$0xff]
    %v104 = vld [vmem:[%s2] sm:$0x1]
    %v106 = vlaneseq
    %v107 = vshrl.u32 %v106, 7
    %v108 = vsub.s32 0, %v107
    %v109 = vrot.slane %v104, %v108
    %v111 = vadd.f32 %v102, %v109
    %v112 = vadd.f32 %v103, %v109
    %v113 = vld [vmem:[%s3] sm:$0xf]
    %v114 = vld [vmem:[%s3 + $0x4] sm:$0xf]
    %v115 = vunpack.c.l.bf16 %v113
    %v116 = vunpack.c.l.bf16 %v114
    %v117 = vadd.f32 %v111, %v115
    %v118 = vadd.f32 %v112, %v116
    %v119 = vpack.c.bf16 %v118, %v117
    %v121 = vunpack.c.l.b16 %v119
    %v122 = vunpack.c.h.b16 %v119
    %v123 = vpack.c.b16 %v121, %v121
    %v124 = vpack.c.b16 %v122, %v122
    %vm127 = vcmask 257024
    %128 = vst.msk [vmem:[%s4] sm:$0xf] %vm127, %v123
    %129 = vst.msk [vmem:[%s4 + $0x4] sm:$0xf] %vm127, %v124
  $region25: #{audio_encoder_forward.22} parent=0 // pred_fallthru
    _
  // Predicated region
  $region26: #{audio_encoder_forward.22} parent=0 // pred_check
    _
  $region27: #{audio_encoder_forward.22} parent=0 // pred_check_branch
    %131 = sbr.rel (0) target = $region29
  $region28: #{audio_encoder_forward.22} parent=0 // pred_region
    _
  $region29: #{audio_encoder_forward.22} parent=0 // pred_fallthru
    _
  // Predicated region
  $region30: #{audio_encoder_forward.22} parent=0 // pred_check
    _
  $region31: #{audio_encoder_forward.22} parent=0 // pred_check_branch
    %133 = sbr.rel (0) target = $region33
  $region32: #{audio_encoder_forward.22} parent=0 // pred_region
    _
  $region33: #{audio_encoder_forward.22} parent=0 // pred_fallthru
    _

// kernel: audio_encoder_forward.25
$region0: #{audio_encoder_forward.25}
  #allocation0 [shape = 'u32[]', space=smem, size = 0x4, offset = 0x4, fixed_abs, tag = 'smem constant byte address 0x4 - core index']
  #allocation1 [shape = 'u32[144,128]{1,0:T(1,128)}', space=vmem, size = 0x12000, scoped, tag = 'internal scratch']
  #allocation2 [shape = 'f32[16,32]{1,0:T(8,128)}', space=vmem, size = 0x2000, scoped, tag = 'scratch operand']
  %s0 = inlined_call_operand.vmem [shape: bf16[16,128], index: 0, kind: input, shape index: {}]
  %s1 = inlined_call_operand.vmem [shape: bf16[128,32], index: 1, kind: input, shape index: {}]
  %s2 = inlined_call_operand.vmem [shape: f32[1,32], index: 2, kind: input, shape index: {}]
  %s3 = inlined_call_operand.vmem [shape: bf16[16,32], index: 3, kind: input, shape index: {}]
  %s4 = inlined_call_operand.vmem [shape: bf16[16,32], index: 4, kind: output, shape index: {}]
  %s5 = sld [smem:[#allocation0]]
  $region34: #{audio_encoder_forward.25} parent=0
    _
  %s7 = ssub.s32 1, %s5
  %s8 = scalar_select 0, %s7, %s5
  // Predicated region
  $region2: #{audio_encoder_forward.25} parent=0 // pred_check
    _
  $region3: #{audio_encoder_forward.25} parent=0 // pred_check_branch
    %10 = sbr.rel (0) target = $region5
  $region4: #{audio_encoder_forward.25} parent=0 // pred_region
    _
  $region5: #{audio_encoder_forward.25} parent=0 // pred_fallthru
    _
  // Predicated region
  $region6: #{audio_encoder_forward.25} parent=0 // pred_check
    _
  $region7: #{audio_encoder_forward.25} parent=0 // pred_check_branch
    %12 = sbr.rel (0) target = $region9
  $region8: #{audio_encoder_forward.25} parent=0 // pred_region
    _
  $region9: #{audio_encoder_forward.25} parent=0 // pred_fallthru
    _
  // Predicated region
  $region10: #{audio_encoder_forward.25} parent=0 // pred_check
    _
  $region11: #{audio_encoder_forward.25} parent=0 // pred_check_branch
    %14 = sbr.rel (0) target = $region13
  $region12: #{audio_encoder_forward.25} parent=0 // pred_region
    _
  $region13: #{audio_encoder_forward.25} parent=0 // pred_fallthru
    _
  // Predicated region
  $region14: #{audio_encoder_forward.25} parent=0 // pred_check
    _
  $region15: #{audio_encoder_forward.25} parent=0 // pred_check_branch
    %16 = sbr.rel (0) target = $region17
  $region16: #{audio_encoder_forward.25} parent=0 // pred_region
    _
  $region17: #{audio_encoder_forward.25} parent=0 // pred_fallthru
    _
  %p18 = scmp.eq.s32.totalorder 0, 0
  // Predicated region
  $region18: #{audio_encoder_forward.25} parent=0 // pred_check
    %p19 = pneg %p18
  $region19: #{audio_encoder_forward.25} parent=0 // pred_check_branch
    %21 = sbr.rel (%p19) target = $region21
  $region20: #{audio_encoder_forward.25} parent=0 // pred_region
    %vm22 = vcmask 261120
    %23 = vst.msk [vmem:[#allocation2] sm:$0xff] %vm22, 0.0
    %24 = vst.msk [vmem:[#allocation2 + $0x8] sm:$0xff] %vm22, 0.0
  $region21: #{audio_encoder_forward.25} parent=0 // pred_fallthru
    _
  %v25 = vld [vmem:[#allocation2] sm:$0xff]
  %v26 = vld [vmem:[#allocation2 + $0x8] sm:$0xff]
  %v27 = vld [vmem:[%s0] sm:$0xf]
  %v28 = vld [vmem:[%s0 + $0x4] sm:$0xf]
  %v29 = vld [vmem:[%s1] sm:$0xf]
  %v30 = vld [vmem:[%s1 + $0x4] sm:$0xf]
  %v31 = vld [vmem:[%s1 + $0x8] sm:$0xf]
  %v32 = vld [vmem:[%s1 + $0xc] sm:$0xf]
  %v33 = vld [vmem:[%s1 + $0x10] sm:$0xf]
  %v34 = vld [vmem:[%s1 + $0x14] sm:$0xf]
  %v35 = vld [vmem:[%s1 + $0x18] sm:$0xf]
  %v36 = vld [vmem:[%s1 + $0x1c] sm:$0xf]
  %v37 = vld [vmem:[%s1 + $0x20] sm:$0xf]
  %v38 = vld [vmem:[%s1 + $0x24] sm:$0xf]
  %v39 = vld [vmem:[%s1 + $0x28] sm:$0xf]
  %v40 = vld [vmem:[%s1 + $0x2c] sm:$0xf]
  %v41 = vld [vmem:[%s1 + $0x30] sm:$0xf]
  %v42 = vld [vmem:[%s1 + $0x34] sm:$0xf]
  %v43 = vld [vmem:[%s1 + $0x38] sm:$0xf]
  %v44 = vld [vmem:[%s1 + $0x3c] sm:$0xf]
  %v47 = vunpack.c.l.b16 %v27
  %v48 = vunpack.c.l.b16 %v28
  %v49 = vpack.c.b16 %v48, %v47
  %v67 = vunpack.c.l.b16 %v29
  %v68 = vunpack.c.l.b16 %v30
  %v69 = vunpack.c.l.b16 %v31
  %v70 = vunpack.c.l.b16 %v32
  %v71 = vunpack.c.l.b16 %v33
  %v72 = vunpack.c.l.b16 %v34
  %v73 = vunpack.c.l.b16 %v35
  %v74 = vunpack.c.l.b16 %v36
  %v75 = vunpack.c.l.b16 %v37
  %v76 = vunpack.c.l.b16 %v38
  %v77 = vunpack.c.l.b16 %v39
  %v78 = vunpack.c.l.b16 %v40
  %v79 = vunpack.c.l.b16 %v41
  %v80 = vunpack.c.l.b16 %v42
  %v81 = vunpack.c.l.b16 %v43
  %v82 = vunpack.c.l.b16 %v44
  %v83 = vpack.c.b16 %v68, %v67
  %v84 = vpack.c.b16 %v70, %v69
  %v85 = vpack.c.b16 %v72, %v71
  %v86 = vpack.c.b16 %v74, %v73
  %v87 = vpack.c.b16 %v76, %v75
  %v88 = vpack.c.b16 %v78, %v77
  %v89 = vpack.c.b16 %v80, %v79
  %v90 = vpack.c.b16 %v82, %v81
  %99 = vmatprep.subr.bf16.mxu0 0
  %100 = vmatpush1.bf16.msra.mxu0 %v83
  %101 = vmatprep.subr.bf16.mxu0 0
  %102 = vmatpush1.bf16.msra.mxu0 %v84
  %103 = vmatprep.subr.bf16.mxu0 0
  %104 = vmatpush1.bf16.msra.mxu0 %v85
  %105 = vmatprep.subr.bf16.mxu0 0
  %106 = vmatpush1.bf16.msra.mxu0 %v86
  %107 = vmatprep.subr.bf16.mxu0 0
  %108 = vmatpush1.bf16.msra.mxu0 %v87
  %109 = vmatprep.subr.bf16.mxu0 0
  %110 = vmatpush1.bf16.msra.mxu0 %v88
  %111 = vmatprep.subr.bf16.mxu0 0
  %112 = vmatpush1.bf16.msra.mxu0 %v89
  %113 = vmatprep.subr.bf16.mxu0 0
  %114 = vmatpush1.bf16.msra.mxu0 %v90
  %115 = vmatprep.subr.bf16.mxu0 0
  %116 = vmatpush1.bf16.msra.mxu0 0
  %117 = vmatprep.subr.bf16.mxu0 0
  %118 = vmatpush1.bf16.msra.mxu0 0
  %119 = vmatprep.subr.bf16.mxu0 0
  %120 = vmatpush1.bf16.msra.mxu0 0
  %121 = vmatprep.subr.bf16.mxu0 0
  %122 = vmatpush1.bf16.msra.mxu0 0
  %123 = vmatprep.subr.bf16.mxu0 0
  %124 = vmatpush1.bf16.msra.mxu0 0
  %125 = vmatprep.subr.bf16.mxu0 0
  %126 = vmatpush1.bf16.msra.mxu0 0
  %127 = vmatprep.subr.bf16.mxu0 0
  %128 = vmatpush1.bf16.msra.mxu0 0
  %129 = vmatprep.subr.bf16.mxu0 0
  %130 = vmatpush1.bf16.msra.mxu0 0
  %131 = vmatprep.mubr.bf16.mxu0 0
  %132 = vmatmul.mubr.bf16.gmra.mrb[0].mxu0 %v49
  %v133 = vpop.f32.mrb[0].mxu0
  %v134 = vadd.f32 0.0, %v133
  %v135 = vpop.f32.mrb[0].mxu0
  %v136 = vpop.f32.mrb[0].mxu0
  %v137 = vadd.f32 0.0, %v136
  %v138 = vpop.f32.mrb[0].mxu0
  %139 = vdwg.mxu0
  %v140 = vadd.f32 %v25, %v134
  %v141 = vadd.f32 %v26, %v137
  %vm142 = vcmask 261120
  %143 = vst.msk [vmem:[#allocation2] sm:$0xff] %vm142, %v140
  %144 = vst.msk [vmem:[#allocation2 + $0x8] sm:$0xff] %vm142, %v141
  // Predicated region
  $region22: #{audio_encoder_forward.25} parent=0 // pred_check
    %p145 = pneg %p18
  $region23: #{audio_encoder_forward.25} parent=0 // pred_check_branch
    %147 = sbr.rel (%p145) target = $region25
  $region24: #{audio_encoder_forward.25} parent=0 // pred_region
    %v148 = vld [vmem:[#allocation2] sm:$0xff]
    %v149 = vld [vmem:[#allocation2 + $0x8] sm:$0xff]
    %v150 = vld [vmem:[%s2] sm:$0x1]
    %v152 = vlaneseq
    %v153 = vshrl.u32 %v152, 7
    %v154 = vsub.s32 0, %v153
    %v155 = vrot.slane %v150, %v154
    %v157 = vadd.f32 %v148, %v155
    %v158 = vadd.f32 %v149, %v155
    %v159 = vld [vmem:[%s3] sm:$0xf]
    %v160 = vld [vmem:[%s3 + $0x4] sm:$0xf]
    %v161 = vunpack.c.l.bf16 %v159
    %v162 = vunpack.c.l.bf16 %v160
    %v163 = vadd.f32 %v157, %v161
    %v164 = vadd.f32 %v158, %v162
    %v165 = vpack.c.bf16 %v164, %v163
    %v167 = vunpack.c.l.b16 %v165
    %v168 = vunpack.c.h.b16 %v165
    %v169 = vpack.c.b16 %v167, %v167
    %v170 = vpack.c.b16 %v168, %v168
    %vm173 = vcmask 257024
    %174 = vst.msk [vmem:[%s4] sm:$0xf] %vm173, %v169
    %175 = vst.msk [vmem:[%s4 + $0x4] sm:$0xf] %vm173, %v170
  $region25: #{audio_encoder_forward.25} parent=0 // pred_fallthru
    _
  // Predicated region
  $region26: #{audio_encoder_forward.25} parent=0 // pred_check
    _
  $region27: #{audio_encoder_forward.25} parent=0 // pred_check_branch
    %177 = sbr.rel (0) target = $region29
  $region28: #{audio_encoder_forward.25} parent=0 // pred_region
    _
  $region29: #{audio_encoder_forward.25} parent=0 // pred_fallthru
    _
  // Predicated region
  $region30: #{audio_encoder_forward.25} parent=0 // pred_check
    _
  $region31: #{audio_encoder_forward.25} parent=0 // pred_check_branch
    %179 = sbr.rel (0) target = $region33
  $region32: #{audio_encoder_forward.25} parent=0 // pred_region
    _
  $region33: #{audio_encoder_forward.25} parent=0 // pred_fallthru
    _

// kernel: audio_encoder_forward.21
$region0: #{audio_encoder_forward.21}
  #allocation0 [shape = 'u32[]', space=smem, size = 0x4, offset = 0x4, fixed_abs, tag = 'smem constant byte address 0x4 - core index']
  #allocation1 [shape = 'u32[144,128]{1,0:T(1,128)}', space=vmem, size = 0x12000, scoped, tag = 'internal scratch']
  #allocation2 [shape = 'f32[8,8,1]{2,1,0:T(8,128)}', space=vmem, size = 0x8000, scoped, tag = 'scratch operand']
  #allocation3 [shape = 'f32[8,8,1]{2,1,0:T(8,128)}', space=vmem, size = 0x8000, scoped, tag = 'scratch operand']
  #allocation4 [shape = 'f32[8,8,8]{2,1,0:T(8,128)}', space=vmem, size = 0x8000, scoped, tag = 'scratch operand']
  %s0 = inlined_call_operand.vmem [shape: bf16[8,8,8], index: 0, kind: input, shape index: {}]
  %s1 = inlined_call_operand.vmem [shape: bf16[8,8,8], index: 1, kind: input, shape index: {}]
  %s2 = inlined_call_operand.vmem [shape: bf16[8,8,8], index: 2, kind: input, shape index: {}]
  %s3 = inlined_call_operand.vmem [shape: bf16[8,8,8], index: 3, kind: output, shape index: {}]
  %s4 = sld [smem:[#allocation0]]
  $region30: #{audio_encoder_forward.21} parent=0
    _
  %s6 = ssub.s32 1, %s4
  %s7 = scalar_select 0, %s6, %s4
  // Predicated region
  $region2: #{audio_encoder_forward.21} parent=0 // pred_check
    _
  $region3: #{audio_encoder_forward.21} parent=0 // pred_check_branch
    %9 = sbr.rel (0) target = $region5
  $region4: #{audio_encoder_forward.21} parent=0 // pred_region
    _
  $region5: #{audio_encoder_forward.21} parent=0 // pred_fallthru
    _
  // Predicated region
  $region6: #{audio_encoder_forward.21} parent=0 // pred_check
    _
  $region7: #{audio_encoder_forward.21} parent=0 // pred_check_branch
    %11 = sbr.rel (0) target = $region9
  $region8: #{audio_encoder_forward.21} parent=0 // pred_region
    _
  $region9: #{audio_encoder_forward.21} parent=0 // pred_fallthru
    _
  // Predicated region
  $region10: #{audio_encoder_forward.21} parent=0 // pred_check
    _
  $region11: #{audio_encoder_forward.21} parent=0 // pred_check_branch
    %13 = sbr.rel (0) target = $region13
  $region12: #{audio_encoder_forward.21} parent=0 // pred_region
    _
  $region13: #{audio_encoder_forward.21} parent=0 // pred_fallthru
    _
  %p15 = scmp.eq.s32.totalorder 0, 0
  // Predicated region
  $region14: #{audio_encoder_forward.21} parent=0 // pred_check
    %p16 = pneg %p15
  $region15: #{audio_encoder_forward.21} parent=0 // pred_check_branch
    %18 = sbr.rel (%p16) target = $region17
  $region16: #{audio_encoder_forward.21} parent=0 // pred_region
    %vm19 = vcmask 7168
    %20 = vst.msk [vmem:[#allocation2] sm:$0xff] %vm19, -inf
    %21 = vst.msk [vmem:[#allocation2 + $0x8] sm:$0xff] %vm19, -inf
    %22 = vst.msk [vmem:[#allocation2 + $0x10] sm:$0xff] %vm19, -inf
    %23 = vst.msk [vmem:[#allocation2 + $0x18] sm:$0xff] %vm19, -inf
    %24 = vst.msk [vmem:[#allocation2 + $0x20] sm:$0xff] %vm19, -inf
    %25 = vst.msk [vmem:[#allocation2 + $0x28] sm:$0xff] %vm19, -inf
    %26 = vst.msk [vmem:[#allocation2 + $0x30] sm:$0xff] %vm19, -inf
    %27 = vst.msk [vmem:[#allocation2 + $0x38] sm:$0xff] %vm19, -inf
    %28 = vst.msk [vmem:[#allocation3] sm:$0xff] %vm19, 0.0
    %29 = vst.msk [vmem:[#allocation3 + $0x8] sm:$0xff] %vm19, 0.0
    %30 = vst.msk [vmem:[#allocation3 + $0x10] sm:$0xff] %vm19, 0.0
    %31 = vst.msk [vmem:[#allocation3 + $0x18] sm:$0xff] %vm19, 0.0
    %32 = vst.msk [vmem:[#allocation3 + $0x20] sm:$0xff] %vm19, 0.0
    %33 = vst.msk [vmem:[#allocation3 + $0x28] sm:$0xff] %vm19, 0.0
    %34 = vst.msk [vmem:[#allocation3 + $0x30] sm:$0xff] %vm19, 0.0
    %35 = vst.msk [vmem:[#allocation3 + $0x38] sm:$0xff] %vm19, 0.0
    %vm36 = vcmask 64512
    %37 = vst.msk [vmem:[#allocation4] sm:$0xff] %vm36, 0.0
    %38 = vst.msk [vmem:[#allocation4 + $0x8] sm:$0xff] %vm36, 0.0
    %39 = vst.msk [vmem:[#allocation4 + $0x10] sm:$0xff] %vm36, 0.0
    %40 = vst.msk [vmem:[#allocation4 + $0x18] sm:$0xff] %vm36, 0.0
    %41 = vst.msk [vmem:[#allocation4 + $0x20] sm:$0xff] %vm36, 0.0
    %42 = vst.msk [vmem:[#allocation4 + $0x28] sm:$0xff] %vm36, 0.0
    %43 = vst.msk [vmem:[#allocation4 + $0x30] sm:$0xff] %vm36, 0.0
    %44 = vst.msk [vmem:[#allocation4 + $0x38] sm:$0xff] %vm36, 0.0
  $region17: #{audio_encoder_forward.21} parent=0 // pred_fallthru
    _
  %v45 = vld [vmem:[%s0] sm:$0xf]
  %v46 = vld [vmem:[%s0 + $0x4] sm:$0xf]
  %v47 = vld [vmem:[%s0 + $0x8] sm:$0xf]
  %v48 = vld [vmem:[%s0 + $0xc] sm:$0xf]
  %v49 = vld [vmem:[%s0 + $0x10] sm:$0xf]
  %v50 = vld [vmem:[%s0 + $0x14] sm:$0xf]
  %v51 = vld [vmem:[%s0 + $0x18] sm:$0xf]
  %v52 = vld [vmem:[%s0 + $0x1c] sm:$0xf]
  %v53 = vld [vmem:[%s1] sm:$0xf]
  %v54 = vld [vmem:[%s1 + $0x4] sm:$0xf]
  %v55 = vld [vmem:[%s1 + $0x8] sm:$0xf]
  %v56 = vld [vmem:[%s1 + $0xc] sm:$0xf]
  %v57 = vld [vmem:[%s1 + $0x10] sm:$0xf]
  %v58 = vld [vmem:[%s1 + $0x14] sm:$0xf]
  %v59 = vld [vmem:[%s1 + $0x18] sm:$0xf]
  %v60 = vld [vmem:[%s1 + $0x1c] sm:$0xf]
  %vm61 = vcmask 64512
  %v63 = vsel %vm61, %v45, 0
  %v66 = vsel %vm61, %v53, 0
  %68 = vmatprep.subr.bf16.mxu0 0
  %69 = vmatpush1.bf16.xpose.msra.mxu0 %v66
  %70 = vmatprep.subr.bf16.mxu0 0
  %71 = vmatpush1.bf16.xpose.msra.mxu0 0
  %72 = vmatprep.subr.bf16.mxu0 0
  %73 = vmatpush1.bf16.xpose.msra.mxu0 0
  %74 = vmatprep.subr.bf16.mxu0 0
  %75 = vmatpush1.bf16.xpose.msra.mxu0 0
  %76 = vmatprep.subr.bf16.mxu0 0
  %77 = vmatpush1.bf16.xpose.msra.mxu0 0
  %78 = vmatprep.subr.bf16.mxu0 0
  %79 = vmatpush1.bf16.xpose.msra.mxu0 0
  %80 = vmatprep.subr.bf16.mxu0 0
  %81 = vmatpush1.bf16.xpose.msra.mxu0 0
  %82 = vmatprep.subr.bf16.mxu0 0
  %83 = vmatpush1.bf16.xpose.msra.mxu0 0
  %84 = vmatprep.subr.bf16.mxu0 0
  %85 = vmatpush1.bf16.xpose.msra.mxu0 0
  %86 = vmatprep.subr.bf16.mxu0 0
  %87 = vmatpush1.bf16.xpose.msra.mxu0 0
  %88 = vmatprep.subr.bf16.mxu0 0
  %89 = vmatpush1.bf16.xpose.msra.mxu0 0
  %90 = vmatprep.subr.bf16.mxu0 0
  %91 = vmatpush1.bf16.xpose.msra.mxu0 0
  %92 = vmatprep.subr.bf16.mxu0 0
  %93 = vmatpush1.bf16.xpose.msra.mxu0 0
  %94 = vmatprep.subr.bf16.mxu0 0
  %95 = vmatpush1.bf16.xpose.msra.mxu0 0
  %96 = vmatprep.subr.bf16.mxu0 0
  %97 = vmatpush1.bf16.xpose.msra.mxu0 0
  %98 = vmatprep.subr.bf16.mxu0 0
  %99 = vmatpush1.bf16.xpose.msra.mxu0 0
  %100 = vmatprep.mubr.bf16.mxu0 0
  %101 = vmatmul.mubr.bf16.gmra.mrb[0].mxu0 %v63
  %v102 = vpop.f32.mrb[0].mxu0
  %v103 = vadd.f32 0.0, %v102
  %v104 = vpop.f32.mrb[0].mxu0
  %v105 = vpop.f32.mrb[0].mxu0
  %v106 = vpop.f32.mrb[0].mxu0
  %107 = vdwg.mxu0
  %v109 = vsel %vm61, %v46, 0
  %v112 = vsel %vm61, %v54, 0
  %114 = vmatprep.subr.bf16.mxu0 0
  %115 = vmatpush1.bf16.xpose.msra.mxu0 %v112
  %116 = vmatprep.subr.bf16.mxu0 0
  %117 = vmatpush1.bf16.xpose.msra.mxu0 0
  %118 = vmatprep.subr.bf16.mxu0 0
  %119 = vmatpush1.bf16.xpose.msra.mxu0 0
  %120 = vmatprep.subr.bf16.mxu0 0
  %121 = vmatpush1.bf16.xpose.msra.mxu0 0
  %122 = vmatprep.subr.bf16.mxu0 0
  %123 = vmatpush1.bf16.xpose.msra.mxu0 0
  %124 = vmatprep.subr.bf16.mxu0 0
  %125 = vmatpush1.bf16.xpose.msra.mxu0 0
  %126 = vmatprep.subr.bf16.mxu0 0
  %127 = vmatpush1.bf16.xpose.msra.mxu0 0
  %128 = vmatprep.subr.bf16.mxu0 0
  %129 = vmatpush1.bf16.xpose.msra.mxu0 0
  %130 = vmatprep.subr.bf16.mxu0 0
  %131 = vmatpush1.bf16.xpose.msra.mxu0 0
  %132 = vmatprep.subr.bf16.mxu0 0
  %133 = vmatpush1.bf16.xpose.msra.mxu0 0
  %134 = vmatprep.subr.bf16.mxu0 0
  %135 = vmatpush1.bf16.xpose.msra.mxu0 0
  %136 = vmatprep.subr.bf16.mxu0 0
  %137 = vmatpush1.bf16.xpose.msra.mxu0 0
  %138 = vmatprep.subr.bf16.mxu0 0
  %139 = vmatpush1.bf16.xpose.msra.mxu0 0
  %140 = vmatprep.subr.bf16.mxu0 0
  %141 = vmatpush1.bf16.xpose.msra.mxu0 0
  %142 = vmatprep.subr.bf16.mxu0 0
  %143 = vmatpush1.bf16.xpose.msra.mxu0 0
  %144 = vmatprep.subr.bf16.mxu0 0
  %145 = vmatpush1.bf16.xpose.msra.mxu0 0
  %146 = vmatprep.mubr.bf16.mxu0 0
  %147 = vmatmul.mubr.bf16.gmra.mrb[0].mxu0 %v109
  %v148 = vpop.f32.mrb[0].mxu0
  %v149 = vadd.f32 0.0, %v148
  %v150 = vpop.f32.mrb[0].mxu0
  %v151 = vpop.f32.mrb[0].mxu0
  %v152 = vpop.f32.mrb[0].mxu0
  %153 = vdwg.mxu0
  %v155 = vsel %vm61, %v47, 0
  %v158 = vsel %vm61, %v55, 0
  %160 = vmatprep.subr.bf16.mxu0 0
  %161 = vmatpush1.bf16.xpose.msra.mxu0 %v158
  %162 = vmatprep.subr.bf16.mxu0 0
  %163 = vmatpush1.bf16.xpose.msra.mxu0 0
  %164 = vmatprep.subr.bf16.mxu0 0
  %165 = vmatpush1.bf16.xpose.msra.mxu0 0
  %166 = vmatprep.subr.bf16.mxu0 0
  %167 = vmatpush1.bf16.xpose.msra.mxu0 0
  %168 = vmatprep.subr.bf16.mxu0 0
  %169 = vmatpush1.bf16.xpose.msra.mxu0 0
  %170 = vmatprep.subr.bf16.mxu0 0
  %171 = vmatpush1.bf16.xpose.msra.mxu0 0
  %172 = vmatprep.subr.bf16.mxu0 0
  %173 = vmatpush1.bf16.xpose.msra.mxu0 0
  %174 = vmatprep.subr.bf16.mxu0 0
  %175 = vmatpush1.bf16.xpose.msra.mxu0 0
  %176 = vmatprep.subr.bf16.mxu0 0
  %177 = vmatpush1.bf16.xpose.msra.mxu0 0
  %178 = vmatprep.subr.bf16.mxu0 0
  %179 = vmatpush1.bf16.xpose.msra.mxu0 0
  %180 = vmatprep.subr.bf16.mxu0 0
  %181 = vmatpush1.bf16.xpose.msra.mxu0 0
  %182 = vmatprep.subr.bf16.mxu0 0
  %183 = vmatpush1.bf16.xpose.msra.mxu0 0
  %184 = vmatprep.subr.bf16.mxu0 0
  %185 = vmatpush1.bf16.xpose.msra.mxu0 0
  %186 = vmatprep.subr.bf16.mxu0 0
  %187 = vmatpush1.bf16.xpose.msra.mxu0 0
  %188 = vmatprep.subr.bf16.mxu0 0
  %189 = vmatpush1.bf16.xpose.msra.mxu0 0
  %190 = vmatprep.subr.bf16.mxu0 0
  %191 = vmatpush1.bf16.xpose.msra.mxu0 0
  %192 = vmatprep.mubr.bf16.mxu0 0
  %193 = vmatmul.mubr.bf16.gmra.mrb[0].mxu0 %v155
  %v194 = vpop.f32.mrb[0].mxu0
  %v195 = vadd.f32 0.0, %v194
  %v196 = vpop.f32.mrb[0].mxu0
  %v197 = vpop.f32.mrb[0].mxu0
  %v198 = vpop.f32.mrb[0].mxu0
  %199 = vdwg.mxu0
  %v201 = vsel %vm61, %v48, 0
  %v204 = vsel %vm61, %v56, 0
  %206 = vmatprep.subr.bf16.mxu0 0
  %207 = vmatpush1.bf16.xpose.msra.mxu0 %v204
  %208 = vmatprep.subr.bf16.mxu0 0
  %209 = vmatpush1.bf16.xpose.msra.mxu0 0
  %210 = vmatprep.subr.bf16.mxu0 0
  %211 = vmatpush1.bf16.xpose.msra.mxu0 0
  %212 = vmatprep.subr.bf16.mxu0 0
  %213 = vmatpush1.bf16.xpose.msra.mxu0 0
  %214 = vmatprep.subr.bf16.mxu0 0
  %215 = vmatpush1.bf16.xpose.msra.mxu0 0
  %216 = vmatprep.subr.bf16.mxu0 0
  %217 = vmatpush1.bf16.xpose.msra.mxu0 0
  %218 = vmatprep.subr.bf16.mxu0 0
  %219 = vmatpush1.bf16.xpose.msra.mxu0 0
  %220 = vmatprep.subr.bf16.mxu0 0
  %221 = vmatpush1.bf16.xpose.msra.mxu0 0
  %222 = vmatprep.subr.bf16.mxu0 0
  %223 = vmatpush1.bf16.xpose.msra.mxu0 0
  %224 = vmatprep.subr.bf16.mxu0 0
  %225 = vmatpush1.bf16.xpose.msra.mxu0 0
  %226 = vmatprep.subr.bf16.mxu0 0
  %227 = vmatpush1.bf16.xpose.msra.mxu0 0
  %228 = vmatprep.subr.bf16.mxu0 0
  %229 = vmatpush1.bf16.xpose.msra.mxu0 0
  %230 = vmatprep.subr.bf16.mxu0 0
  %231 = vmatpush1.bf16.xpose.msra.mxu0 0
  %232 = vmatprep.subr.bf16.mxu0 0
  %233 = vmatpush1.bf16.xpose.msra.mxu0 0
  %234 = vmatprep.subr.bf16.mxu0 0
  %235 = vmatpush1.bf16.xpose.msra.mxu0 0
  %236 = vmatprep.subr.bf16.mxu0 0
  %237 = vmatpush1.bf16.xpose.msra.mxu0 0
  %238 = vmatprep.mubr.bf16.mxu0 0
  %239 = vmatmul.mubr.bf16.gmra.mrb[0].mxu0 %v201
  %v240 = vpop.f32.mrb[0].mxu0
  %v241 = vadd.f32 0.0, %v240
  %v242 = vpop.f32.mrb[0].mxu0
  %v243 = vpop.f32.mrb[0].mxu0
  %v244 = vpop.f32.mrb[0].mxu0
  %245 = vdwg.mxu0
  %v247 = vsel %vm61, %v49, 0
  %v250 = vsel %vm61, %v57, 0
  %252 = vmatprep.subr.bf16.mxu0 0
  %253 = vmatpush1.bf16.xpose.msra.mxu0 %v250
  %254 = vmatprep.subr.bf16.mxu0 0
  %255 = vmatpush1.bf16.xpose.msra.mxu0 0
  %256 = vmatprep.subr.bf16.mxu0 0
  %257 = vmatpush1.bf16.xpose.msra.mxu0 0
  %258 = vmatprep.subr.bf16.mxu0 0
  %259 = vmatpush1.bf16.xpose.msra.mxu0 0
  %260 = vmatprep.subr.bf16.mxu0 0
  %261 = vmatpush1.bf16.xpose.msra.mxu0 0
  %262 = vmatprep.subr.bf16.mxu0 0
  %263 = vmatpush1.bf16.xpose.msra.mxu0 0
  %264 = vmatprep.subr.bf16.mxu0 0
  %265 = vmatpush1.bf16.xpose.msra.mxu0 0
  %266 = vmatprep.subr.bf16.mxu0 0
  %267 = vmatpush1.bf16.xpose.msra.mxu0 0
  %268 = vmatprep.subr.bf16.mxu0 0
  %269 = vmatpush1.bf16.xpose.msra.mxu0 0
  %270 = vmatprep.subr.bf16.mxu0 0
  %271 = vmatpush1.bf16.xpose.msra.mxu0 0
  %272 = vmatprep.subr.bf16.mxu0 0
  %273 = vmatpush1.bf16.xpose.msra.mxu0 0
  %274 = vmatprep.subr.bf16.mxu0 0
  %275 = vmatpush1.bf16.xpose.msra.mxu0 0
  %276 = vmatprep.subr.bf16.mxu0 0
  %277 = vmatpush1.bf16.xpose.msra.mxu0 0
  %278 = vmatprep.subr.bf16.mxu0 0
  %279 = vmatpush1.bf16.xpose.msra.mxu0 0
  %280 = vmatprep.subr.bf16.mxu0 0
  %281 = vmatpush1.bf16.xpose.msra.mxu0 0
  %282 = vmatprep.subr.bf16.mxu0 0
  %283 = vmatpush1.bf16.xpose.msra.mxu0 0
  %284 = vmatprep.mubr.bf16.mxu0 0
  %285 = vmatmul.mubr.bf16.gmra.mrb[0].mxu0 %v247
  %v286 = vpop.f32.mrb[0].mxu0
  %v287 = vadd.f32 0.0, %v286
  %v288 = vpop.f32.mrb[0].mxu0
  %v289 = vpop.f32.mrb[0].mxu0
  %v290 = vpop.f32.mrb[0].mxu0
  %291 = vdwg.mxu0
  %v293 = vsel %vm61, %v50, 0
  %v296 = vsel %vm61, %v58, 0
  %298 = vmatprep.subr.bf16.mxu0 0
  %299 = vmatpush1.bf16.xpose.msra.mxu0 %v296
  %300 = vmatprep.subr.bf16.mxu0 0
  %301 = vmatpush1.bf16.xpose.msra.mxu0 0
  %302 = vmatprep.subr.bf16.mxu0 0
  %303 = vmatpush1.bf16.xpose.msra.mxu0 0
  %304 = vmatprep.subr.bf16.mxu0 0
  %305 = vmatpush1.bf16.xpose.msra.mxu0 0
  %306 = vmatprep.subr.bf16.mxu0 0
  %307 = vmatpush1.bf16.xpose.msra.mxu0 0
  %308 = vmatprep.subr.bf16.mxu0 0
  %309 = vmatpush1.bf16.xpose.msra.mxu0 0
  %310 = vmatprep.subr.bf16.mxu0 0
  %311 = vmatpush1.bf16.xpose.msra.mxu0 0
  %312 = vmatprep.subr.bf16.mxu0 0
  %313 = vmatpush1.bf16.xpose.msra.mxu0 0
  %314 = vmatprep.subr.bf16.mxu0 0
  %315 = vmatpush1.bf16.xpose.msra.mxu0 0
  %316 = vmatprep.subr.bf16.mxu0 0
  %317 = vmatpush1.bf16.xpose.msra.mxu0 0
  %318 = vmatprep.subr.bf16.mxu0 0
  %319 = vmatpush1.bf16.xpose.msra.mxu0 0
  %320 = vmatprep.subr.bf16.mxu0 0
  %321 = vmatpush1.bf16.xpose.msra.mxu0 0
  %322 = vmatprep.subr.bf16.mxu0 0
  %323 = vmatpush1.bf16.xpose.msra.mxu0 0
  %324 = vmatprep.subr.bf16.mxu0 0
  %325 = vmatpush1.bf16.xpose.msra.mxu0 0
  %326 = vmatprep.subr.bf16.mxu0 0
  %327 = vmatpush1.bf16.xpose.msra.mxu0 0
  %328 = vmatprep.subr.bf16.mxu0 0
  %329 = vmatpush1.bf16.xpose.msra.mxu0 0
  %330 = vmatprep.mubr.bf16.mxu0 0
  %331 = vmatmul.mubr.bf16.gmra.mrb[0].mxu0 %v293
  %v332 = vpop.f32.mrb[0].mxu0
  %v333 = vadd.f32 0.0, %v332
  %v334 = vpop.f32.mrb[0].mxu0
  %v335 = vpop.f32.mrb[0].mxu0
  %v336 = vpop.f32.mrb[0].mxu0
  %337 = vdwg.mxu0
  %v339 = vsel %vm61, %v51, 0
  %v342 = vsel %vm61, %v59, 0
  %344 = vmatprep.subr.bf16.mxu0 0
  %345 = vmatpush1.bf16.xpose.msra.mxu0 %v342
  %346 = vmatprep.subr.bf16.mxu0 0
  %347 = vmatpush1.bf16.xpose.msra.mxu0 0
  %348 = vmatprep.subr.bf16.mxu0 0
  %349 = vmatpush1.bf16.xpose.msra.mxu0 0
  %350 = vmatprep.subr.bf16.mxu0 0
  %351 = vmatpush1.bf16.xpose.msra.mxu0 0
  %352 = vmatprep.subr.bf16.mxu0 0
  %353 = vmatpush1.bf16.xpose.msra.mxu0 0
  %354 = vmatprep.subr.bf16.mxu0 0
  %355 = vmatpush1.bf16.xpose.msra.mxu0 0
  %356 = vmatprep.subr.bf16.mxu0 0
  %357 = vmatpush1.bf16.xpose.msra.mxu0 0
  %358 = vmatprep.subr.bf16.mxu0 0
  %359 = vmatpush1.bf16.xpose.msra.mxu0 0
  %360 = vmatprep.subr.bf16.mxu0 0
  %361 = vmatpush1.bf16.xpose.msra.mxu0 0
  %362 = vmatprep.subr.bf16.mxu0 0
  %363 = vmatpush1.bf16.xpose.msra.mxu0 0
  %364 = vmatprep.subr.bf16.mxu0 0
  %365 = vmatpush1.bf16.xpose.msra.mxu0 0
  %366 = vmatprep.subr.bf16.mxu0 0
  %367 = vmatpush1.bf16.xpose.msra.mxu0 0
  %368 = vmatprep.subr.bf16.mxu0 0
  %369 = vmatpush1.bf16.xpose.msra.mxu0 0
  %370 = vmatprep.subr.bf16.mxu0 0
  %371 = vmatpush1.bf16.xpose.msra.mxu0 0
  %372 = vmatprep.subr.bf16.mxu0 0
  %373 = vmatpush1.bf16.xpose.msra.mxu0 0
  %374 = vmatprep.subr.bf16.mxu0 0
  %375 = vmatpush1.bf16.xpose.msra.mxu0 0
  %376 = vmatprep.mubr.bf16.mxu0 0
  %377 = vmatmul.mubr.bf16.gmra.mrb[0].mxu0 %v339
  %v378 = vpop.f32.mrb[0].mxu0
  %v379 = vadd.f32 0.0, %v378
  %v380 = vpop.f32.mrb[0].mxu0
  %v381 = vpop.f32.mrb[0].mxu0
  %v382 = vpop.f32.mrb[0].mxu0
  %383 = vdwg.mxu0
  %v385 = vsel %vm61, %v52, 0
  %v388 = vsel %vm61, %v60, 0
  %390 = vmatprep.subr.bf16.mxu0 0
  %391 = vmatpush1.bf16.xpose.msra.mxu0 %v388
  %392 = vmatprep.subr.bf16.mxu0 0
  %393 = vmatpush1.bf16.xpose.msra.mxu0 0
  %394 = vmatprep.subr.bf16.mxu0 0
  %395 = vmatpush1.bf16.xpose.msra.mxu0 0
  %396 = vmatprep.subr.bf16.mxu0 0
  %397 = vmatpush1.bf16.xpose.msra.mxu0 0
  %398 = vmatprep.subr.bf16.mxu0 0
  %399 = vmatpush1.bf16.xpose.msra.mxu0 0
  %400 = vmatprep.subr.bf16.mxu0 0
  %401 = vmatpush1.bf16.xpose.msra.mxu0 0
  %402 = vmatprep.subr.bf16.mxu0 0
  %403 = vmatpush1.bf16.xpose.msra.mxu0 0
  %404 = vmatprep.subr.bf16.mxu0 0
  %405 = vmatpush1.bf16.xpose.msra.mxu0 0
  %406 = vmatprep.subr.bf16.mxu0 0
  %407 = vmatpush1.bf16.xpose.msra.mxu0 0
  %408 = vmatprep.subr.bf16.mxu0 0
  %409 = vmatpush1.bf16.xpose.msra.mxu0 0
  %410 = vmatprep.subr.bf16.mxu0 0
  %411 = vmatpush1.bf16.xpose.msra.mxu0 0
  %412 = vmatprep.subr.bf16.mxu0 0
  %413 = vmatpush1.bf16.xpose.msra.mxu0 0
  %414 = vmatprep.subr.bf16.mxu0 0
  %415 = vmatpush1.bf16.xpose.msra.mxu0 0
  %416 = vmatprep.subr.bf16.mxu0 0
  %417 = vmatpush1.bf16.xpose.msra.mxu0 0
  %418 = vmatprep.subr.bf16.mxu0 0
  %419 = vmatpush1.bf16.xpose.msra.mxu0 0
  %420 = vmatprep.subr.bf16.mxu0 0
  %421 = vmatpush1.bf16.xpose.msra.mxu0 0
  %422 = vmatprep.mubr.bf16.mxu0 0
  %423 = vmatmul.mubr.bf16.gmra.mrb[0].mxu0 %v385
  %v424 = vpop.f32.mrb[0].mxu0
  %v425 = vadd.f32 0.0, %v424
  %v426 = vpop.f32.mrb[0].mxu0
  %v427 = vpop.f32.mrb[0].mxu0
  %v428 = vpop.f32.mrb[0].mxu0
  %429 = vdwg.mxu0
  %v430 = vld [vmem:[#allocation2] sm:$0xff]
  %v431 = vld [vmem:[#allocation2 + $0x8] sm:$0xff]
  %v432 = vld [vmem:[#allocation2 + $0x10] sm:$0xff]
  %v433 = vld [vmem:[#allocation2 + $0x18] sm:$0xff]
  %v434 = vld [vmem:[#allocation2 + $0x20] sm:$0xff]
  %v435 = vld [vmem:[#allocation2 + $0x28] sm:$0xff]
  %v436 = vld [vmem:[#allocation2 + $0x30] sm:$0xff]
  %v437 = vld [vmem:[#allocation2 + $0x38] sm:$0xff]
  %v438 = vsel %vm61, %v103, -inf
  %439 = vmax.xlane.f32.xlu0 %v438
  %v440 = vpop.xlane.xlu0 %439
  %v441 = vsel %vm61, %v149, -inf
  %442 = vmax.xlane.f32.xlu0 %v441
  %v443 = vpop.xlane.xlu0 %442
  %v444 = vsel %vm61, %v195, -inf
  %445 = vmax.xlane.f32.xlu0 %v444
  %v446 = vpop.xlane.xlu0 %445
  %v447 = vsel %vm61, %v241, -inf
  %448 = vmax.xlane.f32.xlu0 %v447
  %v449 = vpop.xlane.xlu0 %448
  %v450 = vsel %vm61, %v287, -inf
  %451 = vmax.xlane.f32.xlu0 %v450
  %v452 = vpop.xlane.xlu0 %451
  %v453 = vsel %vm61, %v333, -inf
  %454 = vmax.xlane.f32.xlu0 %v453
  %v455 = vpop.xlane.xlu0 %454
  %v456 = vsel %vm61, %v379, -inf
  %457 = vmax.xlane.f32.xlu0 %v456
  %v458 = vpop.xlane.xlu0 %457
  %v459 = vsel %vm61, %v425, -inf
  %460 = vmax.xlane.f32.xlu0 %v459
  %v461 = vpop.xlane.xlu0 %460
  %v462 = vmax.f32 %v430, %v440
  %v463 = vmax.f32 %v431, %v443
  %v464 = vmax.f32 %v432, %v446
  %v465 = vmax.f32 %v433, %v449
  %v466 = vmax.f32 %v434, %v452
  %v467 = vmax.f32 %v435, %v455
  %v468 = vmax.f32 %v436, %v458
  %v469 = vmax.f32 %v437, %v461
  %v470 = vsub.f32 %v430, %v462
  %v471 = vsub.f32 %v431, %v463
  %v472 = vsub.f32 %v432, %v464
  %v473 = vsub.f32 %v433, %v465
  %v474 = vsub.f32 %v434, %v466
  %v475 = vsub.f32 %v435, %v467
  %v476 = vsub.f32 %v436, %v468
  %v477 = vsub.f32 %v437, %v469
  %v478 = vmul.f32 %v470, 1.442695
  %v479 = vpow.pop %v478
  %v480 = vmul.f32 %v471, 1.442695
  %v481 = vpow.pop %v480
  %v482 = vmul.f32 %v472, 1.442695
  %v483 = vpow.pop %v482
  %v484 = vmul.f32 %v473, 1.442695
  %v485 = vpow.pop %v484
  %v486 = vmul.f32 %v474, 1.442695
  %v487 = vpow.pop %v486
  %v488 = vmul.f32 %v475, 1.442695
  %v489 = vpow.pop %v488
  %v490 = vmul.f32 %v476, 1.442695
  %v491 = vpow.pop %v490
  %v492 = vmul.f32 %v477, 1.442695
  %v493 = vpow.pop %v492
  %495 = vset.pattern.permute.xlu0 0
  %496 = vperm.xlu0 %495, %v462
  %v497 = vpop.permute.xlu0 %496
  %500 = vset.pattern.permute.xlu0 0
  %501 = vperm.xlu0 %500, %v463
  %v502 = vpop.permute.xlu0 %501
  %505 = vset.pattern.permute.xlu0 0
  %506 = vperm.xlu0 %505, %v464
  %v507 = vpop.permute.xlu0 %506
  %510 = vset.pattern.permute.xlu0 0
  %511 = vperm.xlu0 %510, %v465
  %v512 = vpop.permute.xlu0 %511
  %515 = vset.pattern.permute.xlu0 0
  %516 = vperm.xlu0 %515, %v466
  %v517 = vpop.permute.xlu0 %516
  %520 = vset.pattern.permute.xlu0 0
  %521 = vperm.xlu0 %520, %v467
  %v522 = vpop.permute.xlu0 %521
  %525 = vset.pattern.permute.xlu0 0
  %526 = vperm.xlu0 %525, %v468
  %v527 = vpop.permute.xlu0 %526
  %530 = vset.pattern.permute.xlu0 0
  %531 = vperm.xlu0 %530, %v469
  %v532 = vpop.permute.xlu0 %531
  %v534 = vsub.f32 %v103, %v497
  %v535 = vsub.f32 %v149, %v502
  %v536 = vsub.f32 %v195, %v507
  %v537 = vsub.f32 %v241, %v512
  %v538 = vsub.f32 %v287, %v517
  %v539 = vsub.f32 %v333, %v522
  %v540 = vsub.f32 %v379, %v527
  %v541 = vsub.f32 %v425, %v532
  %v542 = vmul.f32 %v534, 1.442695
  %v543 = vpow.pop %v542
  %v544 = vmul.f32 %v535, 1.442695
  %v545 = vpow.pop %v544
  %v546 = vmul.f32 %v536, 1.442695
  %v547 = vpow.pop %v546
  %v548 = vmul.f32 %v537, 1.442695
  %v549 = vpow.pop %v548
  %v550 = vmul.f32 %v538, 1.442695
  %v551 = vpow.pop %v550
  %v552 = vmul.f32 %v539, 1.442695
  %v553 = vpow.pop %v552
  %v554 = vmul.f32 %v540, 1.442695
  %v555 = vpow.pop %v554
  %v556 = vmul.f32 %v541, 1.442695
  %v557 = vpow.pop %v556
  %v558 = vld [vmem:[#allocation3] sm:$0xff]
  %v559 = vld [vmem:[#allocation3 + $0x8] sm:$0xff]
  %v560 = vld [vmem:[#allocation3 + $0x10] sm:$0xff]
  %v561 = vld [vmem:[#allocation3 + $0x18] sm:$0xff]
  %v562 = vld [vmem:[#allocation3 + $0x20] sm:$0xff]
  %v563 = vld [vmem:[#allocation3 + $0x28] sm:$0xff]
  %v564 = vld [vmem:[#allocation3 + $0x30] sm:$0xff]
  %v565 = vld [vmem:[#allocation3 + $0x38] sm:$0xff]
  %v566 = vmul.f32 %v479, %v558
  %v567 = vmul.f32 %v481, %v559
  %v568 = vmul.f32 %v483, %v560
  %v569 = vmul.f32 %v485, %v561
  %v570 = vmul.f32 %v487, %v562
  %v571 = vmul.f32 %v489, %v563
  %v572 = vmul.f32 %v491, %v564
  %v573 = vmul.f32 %v493, %v565
  %v574 = vsel %vm61, %v543, 0.0
  %575 = vadd.xlane.f32.xlu0 %v574
  %v576 = vpop.xlane.xlu0 %575
  %v577 = vsel %vm61, %v545, 0.0
  %578 = vadd.xlane.f32.xlu0 %v577
  %v579 = vpop.xlane.xlu0 %578
  %v580 = vsel %vm61, %v547, 0.0
  %581 = vadd.xlane.f32.xlu0 %v580
  %v582 = vpop.xlane.xlu0 %581
  %v583 = vsel %vm61, %v549, 0.0
  %584 = vadd.xlane.f32.xlu0 %v583
  %v585 = vpop.xlane.xlu0 %584
  %v586 = vsel %vm61, %v551, 0.0
  %587 = vadd.xlane.f32.xlu0 %v586
  %v588 = vpop.xlane.xlu0 %587
  %v589 = vsel %vm61, %v553, 0.0
  %590 = vadd.xlane.f32.xlu0 %v589
  %v591 = vpop.xlane.xlu0 %590
  %v592 = vsel %vm61, %v555, 0.0
  %593 = vadd.xlane.f32.xlu0 %v592
  %v594 = vpop.xlane.xlu0 %593
  %v595 = vsel %vm61, %v557, 0.0
  %596 = vadd.xlane.f32.xlu0 %v595
  %v597 = vpop.xlane.xlu0 %596
  %v598 = vadd.f32 %v566, %v576
  %v599 = vadd.f32 %v567, %v579
  %v600 = vadd.f32 %v568, %v582
  %v601 = vadd.f32 %v569, %v585
  %v602 = vadd.f32 %v570, %v588
  %v603 = vadd.f32 %v571, %v591
  %v604 = vadd.f32 %v572, %v594
  %v605 = vadd.f32 %v573, %v597
  %vm606 = vcmask 7168
  %607 = vst.msk [vmem:[#allocation3] sm:$0xff] %vm606, %v598
  %608 = vst.msk [vmem:[#allocation3 + $0x8] sm:$0xff] %vm606, %v599
  %609 = vst.msk [vmem:[#allocation3 + $0x10] sm:$0xff] %vm606, %v600
  %610 = vst.msk [vmem:[#allocation3 + $0x18] sm:$0xff] %vm606, %v601
  %611 = vst.msk [vmem:[#allocation3 + $0x20] sm:$0xff] %vm606, %v602
  %612 = vst.msk [vmem:[#allocation3 + $0x28] sm:$0xff] %vm606, %v603
  %613 = vst.msk [vmem:[#allocation3 + $0x30] sm:$0xff] %vm606, %v604
  %614 = vst.msk [vmem:[#allocation3 + $0x38] sm:$0xff] %vm606, %v605
  %v615 = vld [vmem:[#allocation4] sm:$0xff]
  %v616 = vld [vmem:[#allocation4 + $0x8] sm:$0xff]
  %v617 = vld [vmem:[#allocation4 + $0x10] sm:$0xff]
  %v618 = vld [vmem:[#allocation4 + $0x18] sm:$0xff]
  %v619 = vld [vmem:[#allocation4 + $0x20] sm:$0xff]
  %v620 = vld [vmem:[#allocation4 + $0x28] sm:$0xff]
  %v621 = vld [vmem:[#allocation4 + $0x30] sm:$0xff]
  %v622 = vld [vmem:[#allocation4 + $0x38] sm:$0xff]
  %624 = vset.pattern.permute.xlu0 0
  %625 = vperm.xlu0 %624, %v479
  %v626 = vpop.permute.xlu0 %625
  %629 = vset.pattern.permute.xlu0 0
  %630 = vperm.xlu0 %629, %v481
  %v631 = vpop.permute.xlu0 %630
  %634 = vset.pattern.permute.xlu0 0
  %635 = vperm.xlu0 %634, %v483
  %v636 = vpop.permute.xlu0 %635
  %639 = vset.pattern.permute.xlu0 0
  %640 = vperm.xlu0 %639, %v485
  %v641 = vpop.permute.xlu0 %640
  %644 = vset.pattern.permute.xlu0 0
  %645 = vperm.xlu0 %644, %v487
  %v646 = vpop.permute.xlu0 %645
  %649 = vset.pattern.permute.xlu0 0
  %650 = vperm.xlu0 %649, %v489
  %v651 = vpop.permute.xlu0 %650
  %654 = vset.pattern.permute.xlu0 0
  %655 = vperm.xlu0 %654, %v491
  %v656 = vpop.permute.xlu0 %655
  %659 = vset.pattern.permute.xlu0 0
  %660 = vperm.xlu0 %659, %v493
  %v661 = vpop.permute.xlu0 %660
  %v663 = vmul.f32 %v626, %v615
  %v664 = vmul.f32 %v631, %v616
  %v665 = vmul.f32 %v636, %v617
  %v666 = vmul.f32 %v641, %v618
  %v667 = vmul.f32 %v646, %v619
  %v668 = vmul.f32 %v651, %v620
  %v669 = vmul.f32 %v656, %v621
  %v670 = vmul.f32 %v661, %v622
  %v671 = vpack.c.bf16 %v543, %v543
  %v672 = vpack.c.bf16 %v545, %v545
  %v673 = vpack.c.bf16 %v547, %v547
  %v674 = vpack.c.bf16 %v549, %v549
  %v675 = vpack.c.bf16 %v551, %v551
  %v676 = vpack.c.bf16 %v553, %v553
  %v677 = vpack.c.bf16 %v555, %v555
  %v678 = vpack.c.bf16 %v557, %v557
  %v679 = vld [vmem:[%s2] sm:$0xf]
  %v680 = vld [vmem:[%s2 + $0x4] sm:$0xf]
  %v681 = vld [vmem:[%s2 + $0x8] sm:$0xf]
  %v682 = vld [vmem:[%s2 + $0xc] sm:$0xf]
  %v683 = vld [vmem:[%s2 + $0x10] sm:$0xf]
  %v684 = vld [vmem:[%s2 + $0x14] sm:$0xf]
  %v685 = vld [vmem:[%s2 + $0x18] sm:$0xf]
  %v686 = vld [vmem:[%s2 + $0x1c] sm:$0xf]
  %v688 = vsel %vm61, %v671, 0
  %vm690 = vcmask 1043456
  %v692 = vsel %vm690, %v679, 0
  %694 = vmatprep.subr.bf16.mxu0 0
  %695 = vmatpush1.bf16.msra.mxu0 %v692
  %696 = vmatprep.subr.bf16.mxu0 0
  %697 = vmatpush1.bf16.msra.mxu0 0
  %698 = vmatprep.subr.bf16.mxu0 0
  %699 = vmatpush1.bf16.msra.mxu0 0
  %700 = vmatprep.subr.bf16.mxu0 0
  %701 = vmatpush1.bf16.msra.mxu0 0
  %702 = vmatprep.subr.bf16.mxu0 0
  %703 = vmatpush1.bf16.msra.mxu0 0
  %704 = vmatprep.subr.bf16.mxu0 0
  %705 = vmatpush1.bf16.msra.mxu0 0
  %706 = vmatprep.subr.bf16.mxu0 0
  %707 = vmatpush1.bf16.msra.mxu0 0
  %708 = vmatprep.subr.bf16.mxu0 0
  %709 = vmatpush1.bf16.msra.mxu0 0
  %710 = vmatprep.subr.bf16.mxu0 0
  %711 = vmatpush1.bf16.msra.mxu0 0
  %712 = vmatprep.subr.bf16.mxu0 0
  %713 = vmatpush1.bf16.msra.mxu0 0
  %714 = vmatprep.subr.bf16.mxu0 0
  %715 = vmatpush1.bf16.msra.mxu0 0
  %716 = vmatprep.subr.bf16.mxu0 0
  %717 = vmatpush1.bf16.msra.mxu0 0
  %718 = vmatprep.subr.bf16.mxu0 0
  %719 = vmatpush1.bf16.msra.mxu0 0
  %720 = vmatprep.subr.bf16.mxu0 0
  %721 = vmatpush1.bf16.msra.mxu0 0
  %722 = vmatprep.subr.bf16.mxu0 0
  %723 = vmatpush1.bf16.msra.mxu0 0
  %724 = vmatprep.subr.bf16.mxu0 0
  %725 = vmatpush1.bf16.msra.mxu0 0
  %726 = vmatprep.mubr.bf16.mxu0 0
  %727 = vmatmul.mubr.bf16.gmra.mrb[0].mxu0 %v688
  %v728 = vpop.f32.mrb[0].mxu0
  %v729 = vadd.f32 0.0, %v728
  %v730 = vpop.f32.mrb[0].mxu0
  %v731 = vpop.f32.mrb[0].mxu0
  %v732 = vpop.f32.mrb[0].mxu0
  %733 = vdwg.mxu0
  %v735 = vsel %vm61, %v672, 0
  %v738 = vsel %vm690, %v680, 0
  %740 = vmatprep.subr.bf16.mxu0 0
  %741 = vmatpush1.bf16.msra.mxu0 %v738
  %742 = vmatprep.subr.bf16.mxu0 0
  %743 = vmatpush1.bf16.msra.mxu0 0
  %744 = vmatprep.subr.bf16.mxu0 0
  %745 = vmatpush1.bf16.msra.mxu0 0
  %746 = vmatprep.subr.bf16.mxu0 0
  %747 = vmatpush1.bf16.msra.mxu0 0
  %748 = vmatprep.subr.bf16.mxu0 0
  %749 = vmatpush1.bf16.msra.mxu0 0
  %750 = vmatprep.subr.bf16.mxu0 0
  %751 = vmatpush1.bf16.msra.mxu0 0
  %752 = vmatprep.subr.bf16.mxu0 0
  %753 = vmatpush1.bf16.msra.mxu0 0
  %754 = vmatprep.subr.bf16.mxu0 0
  %755 = vmatpush1.bf16.msra.mxu0 0
  %756 = vmatprep.subr.bf16.mxu0 0
  %757 = vmatpush1.bf16.msra.mxu0 0
  %758 = vmatprep.subr.bf16.mxu0 0
  %759 = vmatpush1.bf16.msra.mxu0 0
  %760 = vmatprep.subr.bf16.mxu0 0
  %761 = vmatpush1.bf16.msra.mxu0 0
  %762 = vmatprep.subr.bf16.mxu0 0
  %763 = vmatpush1.bf16.msra.mxu0 0
  %764 = vmatprep.subr.bf16.mxu0 0
  %765 = vmatpush1.bf16.msra.mxu0 0
  %766 = vmatprep.subr.bf16.mxu0 0
  %767 = vmatpush1.bf16.msra.mxu0 0
  %768 = vmatprep.subr.bf16.mxu0 0
  %769 = vmatpush1.bf16.msra.mxu0 0
  %770 = vmatprep.subr.bf16.mxu0 0
  %771 = vmatpush1.bf16.msra.mxu0 0
  %772 = vmatprep.mubr.bf16.mxu0 0
  %773 = vmatmul.mubr.bf16.gmra.mrb[0].mxu0 %v735
  %v774 = vpop.f32.mrb[0].mxu0
  %v775 = vadd.f32 0.0, %v774
  %v776 = vpop.f32.mrb[0].mxu0
  %v777 = vpop.f32.mrb[0].mxu0
  %v778 = vpop.f32.mrb[0].mxu0
  %779 = vdwg.mxu0
  %v781 = vsel %vm61, %v673, 0
  %v784 = vsel %vm690, %v681, 0
  %786 = vmatprep.subr.bf16.mxu0 0
  %787 = vmatpush1.bf16.msra.mxu0 %v784
  %788 = vmatprep.subr.bf16.mxu0 0
  %789 = vmatpush1.bf16.msra.mxu0 0
  %790 = vmatprep.subr.bf16.mxu0 0
  %791 = vmatpush1.bf16.msra.mxu0 0
  %792 = vmatprep.subr.bf16.mxu0 0
  %793 = vmatpush1.bf16.msra.mxu0 0
  %794 = vmatprep.subr.bf16.mxu0 0
  %795 = vmatpush1.bf16.msra.mxu0 0
  %796 = vmatprep.subr.bf16.mxu0 0
  %797 = vmatpush1.bf16.msra.mxu0 0
  %798 = vmatprep.subr.bf16.mxu0 0
  %799 = vmatpush1.bf16.msra.mxu0 0
  %800 = vmatprep.subr.bf16.mxu0 0
  %801 = vmatpush1.bf16.msra.mxu0 0
  %802 = vmatprep.subr.bf16.mxu0 0
  %803 = vmatpush1.bf16.msra.mxu0 0
  %804 = vmatprep.subr.bf16.mxu0 0
  %805 = vmatpush1.bf16.msra.mxu0 0
  %806 = vmatprep.subr.bf16.mxu0 0
  %807 = vmatpush1.bf16.msra.mxu0 0
  %808 = vmatprep.subr.bf16.mxu0 0
  %809 = vmatpush1.bf16.msra.mxu0 0
  %810 = vmatprep.subr.bf16.mxu0 0
  %811 = vmatpush1.bf16.msra.mxu0 0
  %812 = vmatprep.subr.bf16.mxu0 0
  %813 = vmatpush1.bf16.msra.mxu0 0
  %814 = vmatprep.subr.bf16.mxu0 0
  %815 = vmatpush1.bf16.msra.mxu0 0
  %816 = vmatprep.subr.bf16.mxu0 0
  %817 = vmatpush1.bf16.msra.mxu0 0
  %818 = vmatprep.mubr.bf16.mxu0 0
  %819 = vmatmul.mubr.bf16.gmra.mrb[0].mxu0 %v781
  %v820 = vpop.f32.mrb[0].mxu0
  %v821 = vadd.f32 0.0, %v820
  %v822 = vpop.f32.mrb[0].mxu0
  %v823 = vpop.f32.mrb[0].mxu0
  %v824 = vpop.f32.mrb[0].mxu0
  %825 = vdwg.mxu0
  %v827 = vsel %vm61, %v674, 0
  %v830 = vsel %vm690, %v682, 0
  %832 = vmatprep.subr.bf16.mxu0 0
  %833 = vmatpush1.bf16.msra.mxu0 %v830
  %834 = vmatprep.subr.bf16.mxu0 0
  %835 = vmatpush1.bf16.msra.mxu0 0
  %836 = vmatprep.subr.bf16.mxu0 0
  %837 = vmatpush1.bf16.msra.mxu0 0
  %838 = vmatprep.subr.bf16.mxu0 0
  %839 = vmatpush1.bf16.msra.mxu0 0
  %840 = vmatprep.subr.bf16.mxu0 0
  %841 = vmatpush1.bf16.msra.mxu0 0
  %842 = vmatprep.subr.bf16.mxu0 0
  %843 = vmatpush1.bf16.msra.mxu0 0
  %844 = vmatprep.subr.bf16.mxu0 0
  %845 = vmatpush1.bf16.msra.mxu0 0
  %846 = vmatprep.subr.bf16.mxu0 0
  %847 = vmatpush1.bf16.msra.mxu0 0
  %848 = vmatprep.subr.bf16.mxu0 0
  %849 = vmatpush1.bf16.msra.mxu0 0
  %850 = vmatprep.subr.bf16.mxu0 0
  %851 = vmatpush1.bf16.msra.mxu0 0
  %852 = vmatprep.subr.bf16.mxu0 0
  %853 = vmatpush1.bf16.msra.mxu0 0
  %854 = vmatprep.subr.bf16.mxu0 0
  %855 = vmatpush1.bf16.msra.mxu0 0
  %856 = vmatprep.subr.bf16.mxu0 0
  %857 = vmatpush1.bf16.msra.mxu0 0
  %858 = vmatprep.subr.bf16.mxu0 0
  %859 = vmatpush1.bf16.msra.mxu0 0
  %860 = vmatprep.subr.bf16.mxu0 0
  %861 = vmatpush1.bf16.msra.mxu0 0
  %862 = vmatprep.subr.bf16.mxu0 0
  %863 = vmatpush1.bf16.msra.mxu0 0
  %864 = vmatprep.mubr.bf16.mxu0 0
  %865 = vmatmul.mubr.bf16.gmra.mrb[0].mxu0 %v827
  %v866 = vpop.f32.mrb[0].mxu0
  %v867 = vadd.f32 0.0, %v866
  %v868 = vpop.f32.mrb[0].mxu0
  %v869 = vpop.f32.mrb[0].mxu0
  %v870 = vpop.f32.mrb[0].mxu0
  %871 = vdwg.mxu0
  %v873 = vsel %vm61, %v675, 0
  %v876 = vsel %vm690, %v683, 0
  %878 = vmatprep.subr.bf16.mxu0 0
  %879 = vmatpush1.bf16.msra.mxu0 %v876
  %880 = vmatprep.subr.bf16.mxu0 0
  %881 = vmatpush1.bf16.msra.mxu0 0
  %882 = vmatprep.subr.bf16.mxu0 0
  %883 = vmatpush1.bf16.msra.mxu0 0
  %884 = vmatprep.subr.bf16.mxu0 0
  %885 = vmatpush1.bf16.msra.mxu0 0
  %886 = vmatprep.subr.bf16.mxu0 0
  %887 = vmatpush1.bf16.msra.mxu0 0
  %888 = vmatprep.subr.bf16.mxu0 0
  %889 = vmatpush1.bf16.msra.mxu0 0
  %890 = vmatprep.subr.bf16.mxu0 0
  %891 = vmatpush1.bf16.msra.mxu0 0
  %892 = vmatprep.subr.bf16.mxu0 0
  %893 = vmatpush1.bf16.msra.mxu0 0
  %894 = vmatprep.subr.bf16.mxu0 0
  %895 = vmatpush1.bf16.msra.mxu0 0
  %896 = vmatprep.subr.bf16.mxu0 0
  %897 = vmatpush1.bf16.msra.mxu0 0
  %898 = vmatprep.subr.bf16.mxu0 0
  %899 = vmatpush1.bf16.msra.mxu0 0
  %900 = vmatprep.subr.bf16.mxu0 0
  %901 = vmatpush1.bf16.msra.mxu0 0
  %902 = vmatprep.subr.bf16.mxu0 0
  %903 = vmatpush1.bf16.msra.mxu0 0
  %904 = vmatprep.subr.bf16.mxu0 0
  %905 = vmatpush1.bf16.msra.mxu0 0
  %906 = vmatprep.subr.bf16.mxu0 0
  %907 = vmatpush1.bf16.msra.mxu0 0
  %908 = vmatprep.subr.bf16.mxu0 0
  %909 = vmatpush1.bf16.msra.mxu0 0
  %910 = vmatprep.mubr.bf16.mxu0 0
  %911 = vmatmul.mubr.bf16.gmra.mrb[0].mxu0 %v873
  %v912 = vpop.f32.mrb[0].mxu0
  %v913 = vadd.f32 0.0, %v912
  %v914 = vpop.f32.mrb[0].mxu0
  %v915 = vpop.f32.mrb[0].mxu0
  %v916 = vpop.f32.mrb[0].mxu0
  %917 = vdwg.mxu0
  %v919 = vsel %vm61, %v676, 0
  %v922 = vsel %vm690, %v684, 0
  %924 = vmatprep.subr.bf16.mxu0 0
  %925 = vmatpush1.bf16.msra.mxu0 %v922
  %926 = vmatprep.subr.bf16.mxu0 0
  %927 = vmatpush1.bf16.msra.mxu0 0
  %928 = vmatprep.subr.bf16.mxu0 0
  %929 = vmatpush1.bf16.msra.mxu0 0
  %930 = vmatprep.subr.bf16.mxu0 0
  %931 = vmatpush1.bf16.msra.mxu0 0
  %932 = vmatprep.subr.bf16.mxu0 0
  %933 = vmatpush1.bf16.msra.mxu0 0
  %934 = vmatprep.subr.bf16.mxu0 0
  %935 = vmatpush1.bf16.msra.mxu0 0
  %936 = vmatprep.subr.bf16.mxu0 0
  %937 = vmatpush1.bf16.msra.mxu0 0
  %938 = vmatprep.subr.bf16.mxu0 0
  %939 = vmatpush1.bf16.msra.mxu0 0
  %940 = vmatprep.subr.bf16.mxu0 0
  %941 = vmatpush1.bf16.msra.mxu0 0
  %942 = vmatprep.subr.bf16.mxu0 0
  %943 = vmatpush1.bf16.msra.mxu0 0
  %944 = vmatprep.subr.bf16.mxu0 0
  %945 = vmatpush1.bf16.msra.mxu0 0
  %946 = vmatprep.subr.bf16.mxu0 0
  %947 = vmatpush1.bf16.msra.mxu0 0
  %948 = vmatprep.subr.bf16.mxu0 0
  %949 = vmatpush1.bf16.msra.mxu0 0
  %950 = vmatprep.subr.bf16.mxu0 0
  %951 = vmatpush1.bf16.msra.mxu0 0
  %952 = vmatprep.subr.bf16.mxu0 0
  %953 = vmatpush1.bf16.msra.mxu0 0
  %954 = vmatprep.subr.bf16.mxu0 0
  %955 = vmatpush1.bf16.msra.mxu0 0
  %956 = vmatprep.mubr.bf16.mxu0 0
  %957 = vmatmul.mubr.bf16.gmra.mrb[0].mxu0 %v919
  %v958 = vpop.f32.mrb[0].mxu0
  %v959 = vadd.f32 0.0, %v958
  %v960 = vpop.f32.mrb[0].mxu0
  %v961 = vpop.f32.mrb[0].mxu0
  %v962 = vpop.f32.mrb[0].mxu0
  %963 = vdwg.mxu0
  %v965 = vsel %vm61, %v677, 0
  %v968 = vsel %vm690, %v685, 0
  %970 = vmatprep.subr.bf16.mxu0 0
  %971 = vmatpush1.bf16.msra.mxu0 %v968
  %972 = vmatprep.subr.bf16.mxu0 0
  %973 = vmatpush1.bf16.msra.mxu0 0
  %974 = vmatprep.subr.bf16.mxu0 0
  %975 = vmatpush1.bf16.msra.mxu0 0
  %976 = vmatprep.subr.bf16.mxu0 0
  %977 = vmatpush1.bf16.msra.mxu0 0
  %978 = vmatprep.subr.bf16.mxu0 0
  %979 = vmatpush1.bf16.msra.mxu0 0
  %980 = vmatprep.subr.bf16.mxu0 0
  %981 = vmatpush1.bf16.msra.mxu0 0
  %982 = vmatprep.subr.bf16.mxu0 0
  %983 = vmatpush1.bf16.msra.mxu0 0
  %984 = vmatprep.subr.bf16.mxu0 0
  %985 = vmatpush1.bf16.msra.mxu0 0
  %986 = vmatprep.subr.bf16.mxu0 0
  %987 = vmatpush1.bf16.msra.mxu0 0
  %988 = vmatprep.subr.bf16.mxu0 0
  %989 = vmatpush1.bf16.msra.mxu0 0
  %990 = vmatprep.subr.bf16.mxu0 0
  %991 = vmatpush1.bf16.msra.mxu0 0
  %992 = vmatprep.subr.bf16.mxu0 0
  %993 = vmatpush1.bf16.msra.mxu0 0
  %994 = vmatprep.subr.bf16.mxu0 0
  %995 = vmatpush1.bf16.msra.mxu0 0
  %996 = vmatprep.subr.bf16.mxu0 0
  %997 = vmatpush1.bf16.msra.mxu0 0
  %998 = vmatprep.subr.bf16.mxu0 0
  %999 = vmatpush1.bf16.msra.mxu0 0
  %1000 = vmatprep.subr.bf16.mxu0 0
  %1001 = vmatpush1.bf16.msra.mxu0 0
  %1002 = vmatprep.mubr.bf16.mxu0 0
  %1003 = vmatmul.mubr.bf16.gmra.mrb[0].mxu0 %v965
  %v1004 = vpop.f32.mrb[0].mxu0
  %v1005 = vadd.f32 0.0, %v1004
  %v1006 = vpop.f32.mrb[0].mxu0
  %v1007 = vpop.f32.mrb[0].mxu0
  %v1008 = vpop.f32.mrb[0].mxu0
  %1009 = vdwg.mxu0
  %v1011 = vsel %vm61, %v678, 0
  %v1014 = vsel %vm690, %v686, 0
  %1016 = vmatprep.subr.bf16.mxu0 0
  %1017 = vmatpush1.bf16.msra.mxu0 %v1014
  %1018 = vmatprep.subr.bf16.mxu0 0
  %1019 = vmatpush1.bf16.msra.mxu0 0
  %1020 = vmatprep.subr.bf16.mxu0 0
  %1021 = vmatpush1.bf16.msra.mxu0 0
  %1022 = vmatprep.subr.bf16.mxu0 0
  %1023 = vmatpush1.bf16.msra.mxu0 0
  %1024 = vmatprep.subr.bf16.mxu0 0
  %1025 = vmatpush1.bf16.msra.mxu0 0
  %1026 = vmatprep.subr.bf16.mxu0 0
  %1027 = vmatpush1.bf16.msra.mxu0 0
  %1028 = vmatprep.subr.bf16.mxu0 0
  %1029 = vmatpush1.bf16.msra.mxu0 0
  %1030 = vmatprep.subr.bf16.mxu0 0
  %1031 = vmatpush1.bf16.msra.mxu0 0
  %1032 = vmatprep.subr.bf16.mxu0 0
  %1033 = vmatpush1.bf16.msra.mxu0 0
  %1034 = vmatprep.subr.bf16.mxu0 0
  %1035 = vmatpush1.bf16.msra.mxu0 0
  %1036 = vmatprep.subr.bf16.mxu0 0
  %1037 = vmatpush1.bf16.msra.mxu0 0
  %1038 = vmatprep.subr.bf16.mxu0 0
  %1039 = vmatpush1.bf16.msra.mxu0 0
  %1040 = vmatprep.subr.bf16.mxu0 0
  %1041 = vmatpush1.bf16.msra.mxu0 0
  %1042 = vmatprep.subr.bf16.mxu0 0
  %1043 = vmatpush1.bf16.msra.mxu0 0
  %1044 = vmatprep.subr.bf16.mxu0 0
  %1045 = vmatpush1.bf16.msra.mxu0 0
  %1046 = vmatprep.subr.bf16.mxu0 0
  %1047 = vmatpush1.bf16.msra.mxu0 0
  %1048 = vmatprep.mubr.bf16.mxu0 0
  %1049 = vmatmul.mubr.bf16.gmra.mrb[0].mxu0 %v1011
  %v1050 = vpop.f32.mrb[0].mxu0
  %v1051 = vadd.f32 0.0, %v1050
  %v1052 = vpop.f32.mrb[0].mxu0
  %v1053 = vpop.f32.mrb[0].mxu0
  %v1054 = vpop.f32.mrb[0].mxu0
  %1055 = vdwg.mxu0
  %v1056 = vadd.f32 %v663, %v729
  %v1057 = vadd.f32 %v664, %v775
  %v1058 = vadd.f32 %v665, %v821
  %v1059 = vadd.f32 %v666, %v867
  %v1060 = vadd.f32 %v667, %v913
  %v1061 = vadd.f32 %v668, %v959
  %v1062 = vadd.f32 %v669, %v1005
  %v1063 = vadd.f32 %v670, %v1051
  %1064 = vst.msk [vmem:[#allocation4] sm:$0xff] %vm61, %v1056
  %1065 = vst.msk [vmem:[#allocation4 + $0x8] sm:$0xff] %vm61, %v1057
  %1066 = vst.msk [vmem:[#allocation4 + $0x10] sm:$0xff] %vm61, %v1058
  %1067 = vst.msk [vmem:[#allocation4 + $0x18] sm:$0xff] %vm61, %v1059
  %1068 = vst.msk [vmem:[#allocation4 + $0x20] sm:$0xff] %vm61, %v1060
  %1069 = vst.msk [vmem:[#allocation4 + $0x28] sm:$0xff] %vm61, %v1061
  %1070 = vst.msk [vmem:[#allocation4 + $0x30] sm:$0xff] %vm61, %v1062
  %1071 = vst.msk [vmem:[#allocation4 + $0x38] sm:$0xff] %vm61, %v1063
  %1072 = vst.msk [vmem:[#allocation2] sm:$0xff] %vm606, %v462
  %1073 = vst.msk [vmem:[#allocation2 + $0x8] sm:$0xff] %vm606, %v463
  %1074 = vst.msk [vmem:[#allocation2 + $0x10] sm:$0xff] %vm606, %v464
  %1075 = vst.msk [vmem:[#allocation2 + $0x18] sm:$0xff] %vm606, %v465
  %1076 = vst.msk [vmem:[#allocation2 + $0x20] sm:$0xff] %vm606, %v466
  %1077 = vst.msk [vmem:[#allocation2 + $0x28] sm:$0xff] %vm606, %v467
  %1078 = vst.msk [vmem:[#allocation2 + $0x30] sm:$0xff] %vm606, %v468
  %1079 = vst.msk [vmem:[#allocation2 + $0x38] sm:$0xff] %vm606, %v469
  // Predicated region
  $region18: #{audio_encoder_forward.21} parent=0 // pred_check
    %p1080 = pneg %p15
  $region19: #{audio_encoder_forward.21} parent=0 // pred_check_branch
    %1082 = sbr.rel (%p1080) target = $region21
  $region20: #{audio_encoder_forward.21} parent=0 // pred_region
    %v1083 = vld [vmem:[#allocation3] sm:$0xff]
    %v1084 = vld [vmem:[#allocation3 + $0x8] sm:$0xff]
    %v1085 = vld [vmem:[#allocation3 + $0x10] sm:$0xff]
    %v1086 = vld [vmem:[#allocation3 + $0x18] sm:$0xff]
    %v1087 = vld [vmem:[#allocation3 + $0x20] sm:$0xff]
    %v1088 = vld [vmem:[#allocation3 + $0x28] sm:$0xff]
    %v1089 = vld [vmem:[#allocation3 + $0x30] sm:$0xff]
    %v1090 = vld [vmem:[#allocation3 + $0x38] sm:$0xff]
    %v1091 = vrcp.pop %v1083
    %v1092 = vrcp.pop %v1084
    %v1093 = vrcp.pop %v1085
    %v1094 = vrcp.pop %v1086
    %v1095 = vrcp.pop %v1087
    %v1096 = vrcp.pop %v1088
    %v1097 = vrcp.pop %v1089
    %v1098 = vrcp.pop %v1090
    %v1099 = vld [vmem:[#allocation4] sm:$0xff]
    %v1100 = vld [vmem:[#allocation4 + $0x8] sm:$0xff]
    %v1101 = vld [vmem:[#allocation4 + $0x10] sm:$0xff]
    %v1102 = vld [vmem:[#allocation4 + $0x18] sm:$0xff]
    %v1103 = vld [vmem:[#allocation4 + $0x20] sm:$0xff]
    %v1104 = vld [vmem:[#allocation4 + $0x28] sm:$0xff]
    %v1105 = vld [vmem:[#allocation4 + $0x30] sm:$0xff]
    %v1106 = vld [vmem:[#allocation4 + $0x38] sm:$0xff]
    %1108 = vset.pattern.permute.xlu0 0
    %1109 = vperm.xlu0 %1108, %v1091
    %v1110 = vpop.permute.xlu0 %1109
    %1113 = vset.pattern.permute.xlu0 0
    %1114 = vperm.xlu0 %1113, %v1092
    %v1115 = vpop.permute.xlu0 %1114
    %1118 = vset.pattern.permute.xlu0 0
    %1119 = vperm.xlu0 %1118, %v1093
    %v1120 = vpop.permute.xlu0 %1119
    %1123 = vset.pattern.permute.xlu0 0
    %1124 = vperm.xlu0 %1123, %v1094
    %v1125 = vpop.permute.xlu0 %1124
    %1128 = vset.pattern.permute.xlu0 0
    %1129 = vperm.xlu0 %1128, %v1095
    %v1130 = vpop.permute.xlu0 %1129
    %1133 = vset.pattern.permute.xlu0 0
    %1134 = vperm.xlu0 %1133, %v1096
    %v1135 = vpop.permute.xlu0 %1134
    %1138 = vset.pattern.permute.xlu0 0
    %1139 = vperm.xlu0 %1138, %v1097
    %v1140 = vpop.permute.xlu0 %1139
    %1143 = vset.pattern.permute.xlu0 0
    %1144 = vperm.xlu0 %1143, %v1098
    %v1145 = vpop.permute.xlu0 %1144
    %v1147 = vmul.f32 %v1099, %v1110
    %v1148 = vmul.f32 %v1100, %v1115
    %v1149 = vmul.f32 %v1101, %v1120
    %v1150 = vmul.f32 %v1102, %v1125
    %v1151 = vmul.f32 %v1103, %v1130
    %v1152 = vmul.f32 %v1104, %v1135
    %v1153 = vmul.f32 %v1105, %v1140
    %v1154 = vmul.f32 %v1106, %v1145
    %v1155 = vpack.c.bf16 %v1147, %v1147
    %v1156 = vpack.c.bf16 %v1148, %v1148
    %v1157 = vpack.c.bf16 %v1149, %v1149
    %v1158 = vpack.c.bf16 %v1150, %v1150
    %v1159 = vpack.c.bf16 %v1151, %v1151
    %v1160 = vpack.c.bf16 %v1152, %v1152
    %v1161 = vpack.c.bf16 %v1153, %v1153
    %v1162 = vpack.c.bf16 %v1154, %v1154
    %vm1163 = vcmask 60416
    %1164 = vst.msk [vmem:[%s3] sm:$0xf] %vm1163, %v1155
    %1165 = vst.msk [vmem:[%s3 + $0x4] sm:$0xf] %vm1163, %v1156
    %1166 = vst.msk [vmem:[%s3 + $0x8] sm:$0xf] %vm1163, %v1157
    %1167 = vst.msk [vmem:[%s3 + $0xc] sm:$0xf] %vm1163, %v1158
    %1168 = vst.msk [vmem:[%s3 + $0x10] sm:$0xf] %vm1163, %v1159
    %1169 = vst.msk [vmem:[%s3 + $0x14] sm:$0xf] %vm1163, %v1160
    %1170 = vst.msk [vmem:[%s3 + $0x18] sm:$0xf] %vm1163, %v1161
    %1171 = vst.msk [vmem:[%s3 + $0x1c] sm:$0xf] %vm1163, %v1162
  $region21: #{audio_encoder_forward.21} parent=0 // pred_fallthru
    _
  // Predicated region
  $region22: #{audio_encoder_forward.21} parent=0 // pred_check
    _
  $region23: #{audio_encoder_forward.21} parent=0 // pred_check_branch
    %1173 = sbr.rel (0) target = $region25
  $region24: #{audio_encoder_forward.21} parent=0 // pred_region
    _
  $region25: #{audio_encoder_forward.21} parent=0 // pred_fallthru
    _
  // Predicated region
  $region26: #{audio_encoder_forward.21} parent=0 // pred_check
    _
  $region27: #{audio_encoder_forward.21} parent=0 // pred_check_branch
    %1175 = sbr.rel (0) target = $region29
  $region28: #{audio_encoder_forward.21} parent=0 // pred_region
    _
  $region29: #{audio_encoder_forward.21} parent=0 // pred_fallthru
    _

// kernel: audio_encoder_forward.33
$region0: #{audio_encoder_forward.33}
  #allocation0 [shape = 'u32[]', space=smem, size = 0x4, offset = 0x4, fixed_abs, tag = 'smem constant byte address 0x4 - core index']
  #allocation1 [shape = 'u32[144,128]{1,0:T(1,128)}', space=vmem, size = 0x12000, scoped, tag = 'internal scratch']
  %s0 = inlined_call_operand.vmem [shape: bf16[16,32], index: 0, kind: input, shape index: {}]
  %s1 = inlined_call_operand.vmem [shape: f32[1,32], index: 1, kind: input, shape index: {}]
  %s2 = inlined_call_operand.vmem [shape: f32[1,32], index: 2, kind: input, shape index: {}]
  %s3 = inlined_call_operand.hbm [shape: f32[16,32], index: 3, kind: output, shape index: {}]
  %s4 = sld [smem:[#allocation0]]
  $region22: #{audio_encoder_forward.33} parent=0
    _
  %s6 = ssub.s32 1, %s4
  %s7 = scalar_select 0, %s6, %s4
  $region1: #{audio_encoder_forward.33} parent=0
    #allocation2 [shape = 'u8[8192]{0}', space=vmem, size = 0x2000, scoped, tag = 'output window, operand 0, single buffered']
    #allocation3 [shape = 's32[1]{0}', space=sflag, size = 0x4, scoped, tag = 'scoped memory for audio_encoder_forward.33']
    %8 = vsyncpa [#allocation3], 0
    // Predicated region
    $region2: #{audio_encoder_forward.33} parent=1 // pred_check
      _
    $region3: #{audio_encoder_forward.33} parent=1 // pred_check_branch
      %10 = sbr.rel (0) target = $region5
    $region4: #{audio_encoder_forward.33} parent=1 // pred_region
      _
    $region5: #{audio_encoder_forward.33} parent=1 // pred_fallthru
      _
    // Predicated region
    $region6: #{audio_encoder_forward.33} parent=1 // pred_check
      _
    $region7: #{audio_encoder_forward.33} parent=1 // pred_check_branch
      %12 = sbr.rel (0) target = $region9
    $region8: #{audio_encoder_forward.33} parent=1 // pred_region
      _
    $region9: #{audio_encoder_forward.33} parent=1 // pred_fallthru
      _
    // Predicated region
    $region10: #{audio_encoder_forward.33} parent=1 // pred_check
      _
    $region11: #{audio_encoder_forward.33} parent=1 // pred_check_branch
      %14 = sbr.rel (0) target = $region13
    $region12: #{audio_encoder_forward.33} parent=1 // pred_region
      _
    $region13: #{audio_encoder_forward.33} parent=1 // pred_fallthru
      _
    %v15 = vld [vmem:[%s0] sm:$0xf]
    %v16 = vld [vmem:[%s0 + $0x4] sm:$0xf]
    %v17 = vunpack.c.l.bf16 %v15
    %v18 = vunpack.c.l.bf16 %v16
    %vm19 = vcmask 261120
    %v20 = vsel %vm19, %v17, 0.0
    %21 = vadd.xlane.f32.xlu0 %v20
    %v22 = vpop.xlane.xlu0 %21
    %v23 = vsel %vm19, %v18, 0.0
    %24 = vadd.xlane.f32.xlu0 %v23
    %v25 = vpop.xlane.xlu0 %24
    %v26 = vrcp.pop 32.0
    %v27 = vmul.f32 %v22, %v26
    %v28 = vmul.f32 %v25, %v26
    %v29 = vsub.f32 %v17, %v27
    %v30 = vsub.f32 %v18, %v28
    %v31 = vmul.f32 %v29, %v29
    %v32 = vmul.f32 %v30, %v30
    %v33 = vsel %vm19, %v31, 0.0
    %34 = vadd.xlane.f32.xlu0 %v33
    %v35 = vpop.xlane.xlu0 %34
    %v36 = vsel %vm19, %v32, 0.0
    %37 = vadd.xlane.f32.xlu0 %v36
    %v38 = vpop.xlane.xlu0 %37
    %v39 = vmul.f32 %v35, %v26
    %v40 = vmul.f32 %v38, %v26
    %v41 = vadd.f32 %v39, 1e-05
    %v42 = vadd.f32 %v40, 1e-05
    %v43 = vrsqrt.pop %v41
    %v44 = vrsqrt.pop %v42
    %v45 = vmul.f32 %v29, %v43
    %v46 = vmul.f32 %v30, %v44
    %v47 = vld [vmem:[%s1] sm:$0x1]
    %v49 = vlaneseq
    %v50 = vshrl.u32 %v49, 7
    %v51 = vsub.s32 0, %v50
    %v52 = vrot.slane %v47, %v51
    %v54 = vmul.f32 %v45, %v52
    %v55 = vmul.f32 %v46, %v52
    %v56 = vld [vmem:[%s2] sm:$0x1]
    %v58 = vlaneseq
    %v59 = vshrl.u32 %v58, 7
    %v60 = vsub.s32 0, %v59
    %v61 = vrot.slane %v56, %v60
    %v63 = vadd.f32 %v54, %v61
    %v64 = vadd.f32 %v55, %v61
    %65 = vst.msk [vmem:[#allocation2] sm:$0xff] %vm19, %v63
    %66 = vst.msk [vmem:[#allocation2 + $0x8] sm:$0xff] %vm19, %v64
    // Predicated region
    $region14: #{audio_encoder_forward.33} parent=1 // pred_check
      _
    $region15: #{audio_encoder_forward.33} parent=1 // pred_check_branch
      %68 = sbr.rel (0) target = $region17
    $region16: #{audio_encoder_forward.33} parent=1 // pred_region
      %s70 = ssub.s32 256, 256
      %71 = vsyncadd [#allocation3], %s70
      %s72 = sshll.u32 [#allocation2], 4
      %s73 = int_to_ptr.vmem [resolvable:$true] %s72
      %78 = dma.vmem_to_hbm [thread:$0]  %s73, 256, %s3, [#allocation3], 128, 128, 8
    $region17: #{audio_encoder_forward.33} parent=1 // pred_fallthru
      _
    // Predicated region
    $region18: #{audio_encoder_forward.33} parent=1 // pred_check
      _
    $region19: #{audio_encoder_forward.33} parent=1 // pred_check_branch
      %80 = sbr.rel (0) target = $region21
    $region20: #{audio_encoder_forward.33} parent=1 // pred_region
      %81 = dma.done [#allocation3], 256
    $region21: #{audio_encoder_forward.33} parent=1 // pred_fallthru
      _
    %82 = vsyncpa [#allocation3], 1

</llo_original>
